<compile_context>
chip_gen: v7x
topology: tpu7x:2x2x1
jax: 0.10.0
libtpu: 0.0.40
codegen_flags: <defaults>
</compile_context>

<pallas_src>
import functools

import jax
import jax.numpy as jnp
from jax.experimental import pallas as pl
from jax.experimental.pallas import tpu as pltpu

MXU_DTYPE = jnp.bfloat16        # MXU operand dtype (accumulation stays f32)
ACT_DTYPE = jnp.bfloat16        # inter-kernel HBM activation dtype
LN_EPS = 1e-5

# Default tiles (full extent is used whenever a dim is smaller than the preference).
TM, TN, TK = 256, 256, 512

_VMEM_LIMIT = None


def _vmem_limit_bytes():
    """Explicit scoped-VMEM limit: ~80% of physical, capped at 100 MiB.
    -> ~100 MiB on v5e/v6e (128 MiB phys), ~52 MiB on v7x (64 MiB phys)."""
    global _VMEM_LIMIT
    if _VMEM_LIMIT is None:
        try:
            cap = int(pltpu.get_tpu_info().vmem_capacity_bytes)
        except Exception:
            cap = 64 << 20
        _VMEM_LIMIT = int(min(cap * 4 // 5, 100 << 20))
    return _VMEM_LIMIT


# --------------------------------------------------------------------------- #
# small helpers (host-side tiling / padding)
# --------------------------------------------------------------------------- #
def _ceil_to(x, m):
    return ((x + m - 1) // m) * m


def _pick_dim_tile(dim, pref):
    # Full-extent block if it fits, otherwise the preferred (8,128)-aligned tile.
    return dim if dim <= pref else pref


def _pick_m_tile(m, pref):
    """Row tile that (a) divides m exactly (no padded activation copies) and
    (b) when possible yields >= 2 grid steps so both v7x TensorCores get work."""
    cands = [c for c in (pref, 512, 256, 128, 64, 32, 16, 8) if c <= pref]
    for c in cands:
        if m % c == 0 and m // c >= 2:
            return c
    for c in cands:
        if m % c == 0:
            return c
    return m if m <= pref else pref


def _pad2(a, rows, cols):
    r, c = a.shape
    if r == rows and c == cols:
        return a
    return jnp.pad(a, ((0, rows - r), (0, cols - c)))


def _pad1(a, n):
    return a if a.shape[0] == n else jnp.pad(a, (0, n - a.shape[0]))


# --------------------------------------------------------------------------- #
# Kernel 1: tiled matmul  out = x @ w (+ b)
# --------------------------------------------------------------------------- #
def _matmul_kernel(*refs, has_bias, mxu_dtype):
    if has_bias:
        x_ref, w_ref, b_ref, o_ref, acc_ref = refs
    else:
        x_ref, w_ref, o_ref, acc_ref = refs
        b_ref = None

    k = pl.program_id(2)

    @pl.when(k == 0)
    def _():
        acc_ref[...] = jnp.zeros_like(acc_ref)

    # operands are already bf16 (weights/activations stream bf16); astype is a no-op then
    acc_ref[...] += jnp.dot(x_ref[...].astype(mxu_dtype), w_ref[...].astype(mxu_dtype),
                            preferred_element_type=jnp.float32)

    @pl.when(k == pl.num_programs(2) - 1)
    def _():
        y = acc_ref[...]
        if b_ref is not None:
            y = y + b_ref[...]
        o_ref[...] = y.astype(o_ref.dtype)


def pallas_matmul(x, w, b=None, *, out_dtype=ACT_DTYPE, tm=TM, tn=TN, tk=TK):
    """x: (M, K).  w: (K, N).  b: (N,) f32 or None.  -> (M, N) out_dtype."""
    M, K = x.shape
    Kw, N = w.shape
    assert Kw == K

    tm_e = _pick_m_tile(M, tm)
    tn_e = _pick_dim_tile(N, tn)
    tk_e = _pick_dim_tile(K, tk)
    Mp, Np, Kp = _ceil_to(M, tm_e), _ceil_to(N, tn_e), _ceil_to(K, tk_e)

    xp = _pad2(x, Mp, Kp)
    wp = _pad2(w, Kp, Np)

    in_specs = [
        pl.BlockSpec((tm_e, tk_e), lambda i, j, k: (i, k)),
        pl.BlockSpec((tk_e, tn_e), lambda i, j, k: (k, j)),
    ]
    args = [xp, wp]
    if b is not None:
        in_specs.append(pl.BlockSpec((1, tn_e), lambda i, j, k: (0, j)))
        args.append(_pad1(b, Np).reshape(1, Np).astype(jnp.float32))

    out = pl.pallas_call(
        functools.partial(_matmul_kernel, has_bias=b is not None, mxu_dtype=MXU_DTYPE),
        out_shape=jax.ShapeDtypeStruct((Mp, Np), out_dtype),
        grid=(Mp // tm_e, Np // tn_e, Kp // tk_e),
        in_specs=in_specs,
        out_specs=pl.BlockSpec((tm_e, tn_e), lambda i, j, k: (i, j)),
        scratch_shapes=[pltpu.VMEM((tm_e, tn_e), jnp.float32)],
        compiler_params=pltpu.CompilerParams(
            dimension_semantics=("parallel", "parallel", "arbitrary"),
            vmem_limit_bytes=_vmem_limit_bytes()),
    )(*args)
    if (Mp, Np) != (M, N):
        out = out[:M, :N]
    return out


# --------------------------------------------------------------------------- #
# Kernel 2: fused  out = LayerNorm(resid + x @ W + b) * g + beta
# (attention out-projection epilogue; H is never tiled)
# --------------------------------------------------------------------------- #
def _matmul_res_ln_kernel(x_ref, w_ref, b_ref, r_ref, g_ref, be_ref, o_ref, acc_ref,
                          *, eps, mxu_dtype):
    k = pl.program_id(1)

    @pl.when(k == 0)
    def _():
        acc_ref[...] = jnp.zeros_like(acc_ref)

    acc_ref[...] += jnp.dot(x_ref[...].astype(mxu_dtype), w_ref[...].astype(mxu_dtype),
                            preferred_element_type=jnp.float32)

    @pl.when(k == pl.num_programs(1) - 1)
    def _():
        # LayerNorm math stays in f32 (bf16 inputs are upcast here only)
        z = acc_ref[...] + b_ref[...] + r_ref[...].astype(jnp.float32)
        mu = jnp.mean(z, axis=-1, keepdims=True)
        zc = z - mu
        var = jnp.mean(zc * zc, axis=-1, keepdims=True)
        o_ref[...] = ((zc * jax.lax.rsqrt(var + eps)) * g_ref[...]
                      + be_ref[...]).astype(o_ref.dtype)


def pallas_matmul_res_ln(x, w, b, resid, gamma, beta, *, eps=LN_EPS, tm=TM, tk=TK):
    """x: (M, K), w: (K, H), resid: (M, H) -> LayerNorm(resid + x@w + b) in ACT_DTYPE."""
    M, K = x.shape
    H = w.shape[1]
    tm_e, tk_e = _pick_m_tile(M, tm), _pick_dim_tile(K, tk)
    Mp, Kp = _ceil_to(M, tm_e), _ceil_to(K, tk_e)

    xp, wp, rp = _pad2(x, Mp, Kp), _pad2(w, Kp, H), _pad2(resid, Mp, H)

    out = pl.pallas_call(
        functools.partial(_matmul_res_ln_kernel, eps=eps, mxu_dtype=MXU_DTYPE),
        out_shape=jax.ShapeDtypeStruct((Mp, H), ACT_DTYPE),
        grid=(Mp // tm_e, Kp // tk_e),
        in_specs=[
            pl.BlockSpec((tm_e, tk_e), lambda i, k: (i, k)),
            pl.BlockSpec((tk_e, H), lambda i, k: (k, 0)),
            pl.BlockSpec((1, H), lambda i, k: (0, 0)),
            pl.BlockSpec((tm_e, H), lambda i, k: (i, 0)),
            pl.BlockSpec((1, H), lambda i, k: (0, 0)),
            pl.BlockSpec((1, H), lambda i, k: (0, 0)),
        ],
        out_specs=pl.BlockSpec((tm_e, H), lambda i, k: (i, 0)),
        scratch_shapes=[pltpu.VMEM((tm_e, H), jnp.float32)],
        compiler_params=pltpu.CompilerParams(
            dimension_semantics=("parallel", "arbitrary"),
            vmem_limit_bytes=_vmem_limit_bytes()),
    )(xp, wp, b.reshape(1, H).astype(jnp.float32), rp,
      gamma.reshape(1, H).astype(jnp.float32), beta.reshape(1, H).astype(jnp.float32))
    return out[:M] if Mp != M else out


# --------------------------------------------------------------------------- #
# Kernel 3: fused FFN block  out = LayerNorm(x + relu(x@W1+b1)@W2 + b2) * g + beta
# ff_dim is the reduction grid axis -> the (M, ff_dim) intermediate never hits HBM.
# --------------------------------------------------------------------------- #
def _ffn_res_ln_kernel(x_ref, w1_ref, b1_ref, w2_ref, b2_ref, g_ref, be_ref, o_ref,
                       acc_ref, *, eps, mxu_dtype):
    f = pl.program_id(1)

    @pl.when(f == 0)
    def _():
        acc_ref[...] = jnp.zeros_like(acc_ref)

    x = x_ref[...].astype(mxu_dtype)
    h = jnp.dot(x, w1_ref[...].astype(mxu_dtype),
                preferred_element_type=jnp.float32) + b1_ref[...]
    h = jnp.maximum(h, 0.0)
    acc_ref[...] += jnp.dot(h.astype(mxu_dtype), w2_ref[...].astype(mxu_dtype),
                            preferred_element_type=jnp.float32)

    @pl.when(f == pl.num_programs(1) - 1)
    def _():
        z = acc_ref[...] + b2_ref[...] + x_ref[...].astype(jnp.float32)  # resid = post-LN1 x
        mu = jnp.mean(z, axis=-1, keepdims=True)
        zc = z - mu
        var = jnp.mean(zc * zc, axis=-1, keepdims=True)
        o_ref[...] = ((zc * jax.lax.rsqrt(var + eps)) * g_ref[...]
                      + be_ref[...]).astype(o_ref.dtype)


def pallas_ffn_res_ln(x, w1, b1, w2, b2, gamma, beta, *, eps=LN_EPS, tm=TM, tf=TK):
    M, H = x.shape
    F = w1.shape[1]
    # TODO(synk): on v7x with H ~ 4k, drop tf to 256 / tm to 128 so the bf16 weight blocks
    # plus the f32 accumulator stay under the 64 MiB VMEM budget.
    tm_e, tf_e = _pick_m_tile(M, tm), _pick_dim_tile(F, tf)
    Mp, Fp = _ceil_to(M, tm_e), _ceil_to(F, tf_e)

    xp = _pad2(x, Mp, H)
    w1p = _pad2(w1, H, Fp)
    b1p = _pad1(b1, Fp)
    w2p = _pad2(w2, Fp, H)

    out = pl.pallas_call(
        functools.partial(_ffn_res_ln_kernel, eps=eps, mxu_dtype=MXU_DTYPE),
        out_shape=jax.ShapeDtypeStruct((Mp, H), ACT_DTYPE),
        grid=(Mp // tm_e, Fp // tf_e),
        in_specs=[
            pl.BlockSpec((tm_e, H), lambda i, f: (i, 0)),
            pl.BlockSpec((H, tf_e), lambda i, f: (0, f)),
            pl.BlockSpec((1, tf_e), lambda i, f: (0, f)),
            pl.BlockSpec((tf_e, H), lambda i, f: (f, 0)),
            pl.BlockSpec((1, H), lambda i, f: (0, 0)),
            pl.BlockSpec((1, H), lambda i, f: (0, 0)),
            pl.BlockSpec((1, H), lambda i, f: (0, 0)),
        ],
        out_specs=pl.BlockSpec((tm_e, H), lambda i, f: (i, 0)),
        scratch_shapes=[pltpu.VMEM((tm_e, H), jnp.float32)],
        compiler_params=pltpu.CompilerParams(
            dimension_semantics=("parallel", "arbitrary"),
            vmem_limit_bytes=_vmem_limit_bytes()),
    )(xp, w1p, b1p.reshape(1, Fp).astype(jnp.float32), w2p,
      b2.reshape(1, H).astype(jnp.float32),
      gamma.reshape(1, H).astype(jnp.float32), beta.reshape(1, H).astype(jnp.float32))
    return out[:M] if Mp != M else out


# --------------------------------------------------------------------------- #
# Kernel 4: multi-head attention, grid = (batch, query-tile).
# Heads are split inside the kernel (static lane slices); each head's output is
# stored directly into its lane slice of o_ref (no concat / relayout).
# --------------------------------------------------------------------------- #
def _attention_kernel(qkv_ref, bias_ref, o_ref, *, n_head, tq, scale, mxu_dtype):
    # qkv_ref: (S, 3H) bf16, bias_ref: (1, S) f32 additive key-padding bias, o_ref: (tq, H)
    S, H3 = qkv_ref.shape
    H = H3 // 3
    Dh = H // n_head

    q0 = pl.multiple_of(pl.program_id(1) * tq, tq)
    bias = bias_ref[...]                                   # (1, S) broadcasts over query rows

    # TODO(synk): for S >> 1k switch to a flash-style kv-tiled inner loop with running
    # max/sum scratch, and 128-lane-align each head's slot in the fused Wqkv layout.
    for h in range(n_head):                                # unrolled static loop over heads
        q = qkv_ref[pl.ds(q0, tq), h * Dh:(h + 1) * Dh].astype(mxu_dtype)
        k = qkv_ref[:, H + h * Dh:H + (h + 1) * Dh].astype(mxu_dtype)
        v = qkv_ref[:, 2 * H + h * Dh:2 * H + (h + 1) * Dh].astype(mxu_dtype)

        s = jax.lax.dot_general(q, k, (((1,), (1,)), ((), ())),
                                preferred_element_type=jnp.float32) * scale
        s = s + bias
        m = jnp.max(s, axis=-1, keepdims=True)
        p = jnp.exp(s - m)
        p = p * pl.reciprocal(jnp.sum(p, axis=-1, keepdims=True), approx=True)
        o = jnp.dot(p.astype(mxu_dtype), v, preferred_element_type=jnp.float32)
        o_ref[:, h * Dh:(h + 1) * Dh] = o.astype(o_ref.dtype)   # per-head lane-slice store


def pallas_attention(qkv, bias, n_head, *, tq=256):
    """qkv: (B, S, 3H) bf16, bias: (B, 1, S) f32 -> (B, S, H) bf16."""
    B, S, H3 = qkv.shape
    H = H3 // 3
    Dh = H // n_head

    tq_e = _pick_m_tile(S, tq)
    if S % tq_e != 0:            # fall back to one full-extent q block (no S padding)
        tq_e = S
    nq = S // tq_e

    kernel = functools.partial(_attention_kernel, n_head=n_head, tq=tq_e,
                               scale=1.0 / (Dh ** 0.5), mxu_dtype=MXU_DTYPE)
    return pl.pallas_call(
        kernel,
        out_shape=jax.ShapeDtypeStruct((B, S, H), ACT_DTYPE),
        grid=(B, nq),
        in_specs=[
            pl.BlockSpec((None, S, H3), lambda b, qi: (b, 0, 0)),   # K/V reused across qi
            pl.BlockSpec((None, 1, S), lambda b, qi: (b, 0, 0)),
        ],
        out_specs=pl.BlockSpec((None, tq_e, H), lambda b, qi: (b, qi, 0)),
        compiler_params=pltpu.CompilerParams(
            dimension_semantics=("parallel", "parallel"),
            vmem_limit_bytes=_vmem_limit_bytes()),
    )(qkv, bias)


# --------------------------------------------------------------------------- #
# Model glue (embedding gather + reshapes in plain JAX, hot path in Pallas)
# --------------------------------------------------------------------------- #
def encoder_layer_forward(x2, bias, p, n_head, B, S):
    """One post-norm nn.TransformerEncoderLayer.  x2: (B*S, H) bf16, bias: (B, 1, S) f32."""
    M, H = x2.shape

    # fused Q|K|V projection (one matmul instead of three)
    qkv = pallas_matmul(x2, p["Wqkv"], p["bqkv"])                      # (M, 3H) bf16
    attn = pallas_attention(qkv.reshape(B, S, 3 * H), bias, n_head)    # (B, S, H) bf16
    attn = attn.reshape(M, H)

    # out-projection + residual + LayerNorm1, fused
    x2 = pallas_matmul_res_ln(attn, p["Wo"], p["bo"], x2, p["ln1_g"], p["ln1_b"])

    # FF1(ReLU) -> FF2 -> residual + LayerNorm2, fused (ff intermediate stays in VMEM)
    x2 = pallas_ffn_res_ln(x2, p["Wff1"], p["bff1"], p["Wff2"], p["bff2"],
                           p["ln2_g"], p["ln2_b"])
    return x2


def transformer_forward(params, tokens, key_padding_mask, n_head):
    """tokens: (B, S) int32, key_padding_mask: (B, S) bool (True = pad). Returns f32 logits."""
    B, S = tokens.shape
    V, E = params["tok_emb"].shape

    # embeddings + positional (gather kept in JAX), bf16 throughout
    tok_emb = jnp.take(params["tok_emb"], tokens, axis=0)              # (B, S, E) bf16
    pos_emb = params["pos_emb"][:S]                                    # (S, E) bf16
    h = (tok_emb + pos_emb[None, :, :]).reshape(B * S, E)
    # embed_dropout / hidden_dropout: identity in eval mode

    h = pallas_matmul(h, params["W1"], params["b1"])                   # (M, H) bf16

    # additive key-padding bias (True -> large negative; all-pad row -> uniform softmax)
    if key_padding_mask is None:
        bias = jnp.zeros((B, 1, S), jnp.float32)
    else:
        bias = jnp.where(key_padding_mask, -1e9, 0.0).astype(jnp.float32).reshape(B, 1, S)

    for layer_p in params["layers"]:
        h = encoder_layer_forward(h, bias, layer_p, n_head, B, S)

    h = pallas_matmul(h, params["W2"], params["b2"])                   # (M, E) bf16

    # logits = x @ tok_embedding.weight.T  (lm_head = tok_emb.T precomputed at init -> no
    # transposed-RHS contraction, no zero-bias DMA); final output in f32
    logits = pallas_matmul(h, params["lm_head"], None, out_dtype=jnp.float32)
    return logits.reshape(B, S, V)


def init_params(key, vocab_size, max_seq_len, embed_dim, hidden_dim, n_layer, ff_dim):
    def nrm(k, shape, scale=0.02):
        # weights stored bf16 (MXU operand dtype / half-width HBM streaming)
        return (scale * jax.random.normal(k, shape)).astype(MXU_DTYPE)

    keys = jax.random.split(key, 4 + n_layer)
    tok_emb = nrm(keys[0], (vocab_size, embed_dim))
    params = {
        "tok_emb": tok_emb,                                   # (V, E) bf16
        "lm_head": tok_emb.T,                                 # (E, V) bf16, pre-transposed
        "pos_emb": nrm(keys[1], (max_seq_len, embed_dim)),
        "W1": nrm(keys[2], (embed_dim, hidden_dim)),
        "b1": jnp.zeros((hidden_dim,), jnp.float32),
        "W2": nrm(keys[3], (hidden_dim, embed_dim)),
        "b2": jnp.zeros((embed_dim,), jnp.float32),
        "layers": [],
    }
    for li in range(n_layer):
        ks = jax.random.split(keys[4 + li], 6)
        wq = nrm(ks[0], (hidden_dim, hidden_dim))
        wk = nrm(ks[1], (hidden_dim, hidden_dim))
        wv = nrm(ks[2], (hidden_dim, hidden_dim))
        layer = {
            # fused QKV projection weights (built once at init, not per-forward)
            "Wqkv": jnp.concatenate([wq, wk, wv], axis=1),    # (H, 3H) bf16
            "bqkv": jnp.zeros((3 * hidden_dim,), jnp.float32),
            "Wo": nrm(ks[3], (hidden_dim, hidden_dim)),
            "bo": jnp.zeros((hidden_dim,), jnp.float32),
            "ln1_g": jnp.ones((hidden_dim,), jnp.float32),
            "ln1_b": jnp.zeros((hidden_dim,), jnp.float32),
            "Wff1": nrm(ks[4], (hidden_dim, ff_dim)),
            "bff1": jnp.zeros((ff_dim,), jnp.float32),
            "Wff2": nrm(ks[5], (ff_dim, hidden_dim)),
            "bff2": jnp.zeros((hidden_dim,), jnp.float32),
            "ln2_g": jnp.ones((hidden_dim,), jnp.float32),
            "ln2_b": jnp.zeros((hidden_dim,), jnp.float32),
        }
        params["layers"].append(layer)
    return params


if __name__ == "__main__":
    # small config consistent with the module's __init__
    vocab_size, max_seq_len = 32, 16
    embed_dim, hidden_dim, n_layer, n_head, ff_dim = 32, 32, 2, 4, 64
    B, S = 2, 8

    key = jax.random.PRNGKey(0)
    pkey, tkey = jax.random.split(key)
    params = init_params(pkey, vocab_size, max_seq_len, embed_dim, hidden_dim,
                         n_layer, ff_dim)

    tokens = jax.random.randint(tkey, (B, S), 0, vocab_size, dtype=jnp.int32)
    # key_padding_mask: True = padding position (second sequence has 2 pads)
    mask = jnp.array(
        [[False] * S,
         [False] * (S - 2) + [True] * 2],
        dtype=bool,
    )

    fwd = jax.jit(functools.partial(transformer_forward, n_head=n_head))
    logits = fwd(params, tokens, mask)
    jax.block_until_ready(logits)

    assert logits.shape == (B, S, vocab_size)
    assert bool(jnp.all(jnp.isfinite(logits)))
    print("KERNEL_OK")
</pallas_src>

<mosaic_0001>
module attributes {stable_mosaic.version = 11 : i64} {
  func.func @_matmul_kernel(%arg0: i32, %arg1: i32, %arg2: i32, %arg3: memref<8x32xbf16, #tpu.memory_space<vmem>>, %arg4: memref<32x32xbf16, #tpu.memory_space<vmem>>, %arg5: memref<1x32xf32, #tpu.memory_space<vmem>>, %arg6: memref<8x32xbf16, #tpu.memory_space<vmem>>, %arg7: memref<8x32xf32, #tpu.memory_space<vmem>>) attributes {dimension_semantics = [#tpu.dimension_semantics<parallel>, #tpu.dimension_semantics<parallel>, #tpu.dimension_semantics<arbitrary>], iteration_bounds = array<i64: 2, 1, 1>, scalar_prefetch = 0 : i64, scratch_operands = 1 : i64, tpu.core_type = #tpu.core_type<tc>, window_params = [{transform_indices = @transform_0, window_bounds = array<i64: 8, 32>}, {transform_indices = @transform_1, window_bounds = array<i64: 32, 32>}, {transform_indices = @transform_2, window_bounds = array<i64: 1, 32>}, {transform_indices = @transform_3, window_bounds = array<i64: 8, 32>}]} {
    %c0_i32 = arith.constant 0 : i32
    %0 = arith.cmpi eq, %arg2, %c0_i32 : i32
    %1 = arith.extui %0 : i1 to i32
    %c0_i32_0 = arith.constant 0 : i32
    %2 = arith.cmpi ne, %1, %c0_i32_0 : i32
    scf.if %2 {
      %cst_10 = arith.constant 0.000000e+00 : f32
      %12 = vector.broadcast %cst_10 : f32 to vector<8x32xf32>
      %c0_11 = arith.constant 0 : index
      %c0_12 = arith.constant 0 : index
      %13 = vector.load %arg7[%c0_11, %c0_12] : memref<8x32xf32, #tpu.memory_space<vmem>>, vector<8x32xf32>
      tpu.vector_store %arg7[%c0_11, %c0_12], %12 {strides = array<i32>} : memref<8x32xf32, #tpu.memory_space<vmem>>, vector<8x32xf32>,
    } else {
    }
    %c0 = arith.constant 0 : index
    %c0_1 = arith.constant 0 : index
    %3 = vector.load %arg7[%c0, %c0_1] : memref<8x32xf32, #tpu.memory_space<vmem>>, vector<8x32xf32>
    %c0_2 = arith.constant 0 : index
    %c0_3 = arith.constant 0 : index
    %4 = vector.load %arg3[%c0_2, %c0_3] : memref<8x32xbf16, #tpu.memory_space<vmem>>, vector<8x32xbf16>
    %c0_4 = arith.constant 0 : index
    %c0_5 = arith.constant 0 : index
    %5 = vector.load %arg4[%c0_4, %c0_5] : memref<32x32xbf16, #tpu.memory_space<vmem>>, vector<32x32xbf16>
    %cst = arith.constant dense<0.000000e+00> : vector<8x32xf32>
    %6 = tpu.matmul %4, %5, %cst {dimension_numbers = #tpu.dot_dimension_numbers<[1], [0], [0], [1], [0, 0, 1, 1], [], []>} : vector<8x32xbf16>, vector<32x32xbf16>, vector<8x32xf32> -> vector<8x32xf32>
    %7 = arith.addf %3, %6 : vector<8x32xf32>
    %c0_6 = arith.constant 0 : index
    %c0_7 = arith.constant 0 : index
    %8 = vector.load %arg7[%c0_6, %c0_7] : memref<8x32xf32, #tpu.memory_space<vmem>>, vector<8x32xf32>
    tpu.vector_store %arg7[%c0_6, %c0_7], %7 {strides = array<i32>} : memref<8x32xf32, #tpu.memory_space<vmem>>, vector<8x32xf32>,
    %c0_i32_8 = arith.constant 0 : i32
    %9 = arith.cmpi eq, %arg2, %c0_i32_8 : i32
    %10 = arith.extui %9 : i1 to i32
    %c0_i32_9 = arith.constant 0 : i32
    %11 = arith.cmpi ne, %10, %c0_i32_9 : i32
    scf.if %11 {
      %c0_10 = arith.constant 0 : index
      %c0_11 = arith.constant 0 : index
      %12 = vector.load %arg7[%c0_10, %c0_11] : memref<8x32xf32, #tpu.memory_space<vmem>>, vector<8x32xf32>
      %c0_12 = arith.constant 0 : index
      %c0_13 = arith.constant 0 : index
      %13 = vector.load %arg5[%c0_12, %c0_13] : memref<1x32xf32, #tpu.memory_space<vmem>>, vector<1x32xf32>
      %14 = vector.broadcast %13 : vector<1x32xf32> to vector<8x32xf32>
      %15 = arith.addf %12, %14 : vector<8x32xf32>
      %16 = arith.truncf %15 : vector<8x32xf32> to vector<8x32xbf16>
      %c0_14 = arith.constant 0 : index
      %c0_15 = arith.constant 0 : index
      %17 = vector.load %arg6[%c0_14, %c0_15] : memref<8x32xbf16, #tpu.memory_space<vmem>>, vector<8x32xbf16>
      tpu.vector_store %arg6[%c0_14, %c0_15], %16 {strides = array<i32>} : memref<8x32xbf16, #tpu.memory_space<vmem>>, vector<8x32xbf16>,
    } else {
    }
    return
  }
  func.func @transform_0(%arg0: i32, %arg1: i32, %arg2: i32) -> (i32, i32) {
    %c0_i32 = arith.constant 0 : i32
    return %arg0, %arg2 : i32, i32
  }
  func.func @transform_1(%arg0: i32, %arg1: i32, %arg2: i32) -> (i32, i32) {
    %c0_i32 = arith.constant 0 : i32
    return %arg2, %arg1 : i32, i32
  }
  func.func @transform_2(%arg0: i32, %arg1: i32, %arg2: i32) -> (i32, i32) {
    %c0_i32 = arith.constant 0 : i32
    %c0_i32_0 = arith.constant 0 : i32
    return %c0_i32, %arg1 : i32, i32
  }
  func.func @transform_3(%arg0: i32, %arg1: i32, %arg2: i32) -> (i32, i32) {
    %c0_i32 = arith.constant 0 : i32
    return %arg0, %arg1 : i32, i32
  }
}

module attributes {stable_mosaic.version = 11 : i64} {
  func.func @_matmul_kernel(%arg0: i32, %arg1: i32, %arg2: i32, %arg3: memref<8x32xbf16, #tpu.memory_space<vmem>>, %arg4: memref<32x96xbf16, #tpu.memory_space<vmem>>, %arg5: memref<1x96xf32, #tpu.memory_space<vmem>>, %arg6: memref<8x96xbf16, #tpu.memory_space<vmem>>, %arg7: memref<8x96xf32, #tpu.memory_space<vmem>>) attributes {dimension_semantics = [#tpu.dimension_semantics<parallel>, #tpu.dimension_semantics<parallel>, #tpu.dimension_semantics<arbitrary>], iteration_bounds = array<i64: 2, 1, 1>, scalar_prefetch = 0 : i64, scratch_operands = 1 : i64, tpu.core_type = #tpu.core_type<tc>, window_params = [{transform_indices = @transform_0, window_bounds = array<i64: 8, 32>}, {transform_indices = @transform_1, window_bounds = array<i64: 32, 96>}, {transform_indices = @transform_2, window_bounds = array<i64: 1, 96>}, {transform_indices = @transform_3, window_bounds = array<i64: 8, 96>}]} {
    %c0_i32 = arith.constant 0 : i32
    %0 = arith.cmpi eq, %arg2, %c0_i32 : i32
    %1 = arith.extui %0 : i1 to i32
    %c0_i32_0 = arith.constant 0 : i32
    %2 = arith.cmpi ne, %1, %c0_i32_0 : i32
    scf.if %2 {
      %cst_10 = arith.constant 0.000000e+00 : f32
      %12 = vector.broadcast %cst_10 : f32 to vector<8x96xf32>
      %c0_11 = arith.constant 0 : index
      %c0_12 = arith.constant 0 : index
      %13 = vector.load %arg7[%c0_11, %c0_12] : memref<8x96xf32, #tpu.memory_space<vmem>>, vector<8x96xf32>
      tpu.vector_store %arg7[%c0_11, %c0_12], %12 {strides = array<i32>} : memref<8x96xf32, #tpu.memory_space<vmem>>, vector<8x96xf32>,
    } else {
    }
    %c0 = arith.constant 0 : index
    %c0_1 = arith.constant 0 : index
    %3 = vector.load %arg7[%c0, %c0_1] : memref<8x96xf32, #tpu.memory_space<vmem>>, vector<8x96xf32>
    %c0_2 = arith.constant 0 : index
    %c0_3 = arith.constant 0 : index
    %4 = vector.load %arg3[%c0_2, %c0_3] : memref<8x32xbf16, #tpu.memory_space<vmem>>, vector<8x32xbf16>
    %c0_4 = arith.constant 0 : index
    %c0_5 = arith.constant 0 : index
    %5 = vector.load %arg4[%c0_4, %c0_5] : memref<32x96xbf16, #tpu.memory_space<vmem>>, vector<32x96xbf16>
    %cst = arith.constant dense<0.000000e+00> : vector<8x96xf32>
    %6 = tpu.matmul %4, %5, %cst {dimension_numbers = #tpu.dot_dimension_numbers<[1], [0], [0], [1], [0, 0, 1, 1], [], []>} : vector<8x32xbf16>, vector<32x96xbf16>, vector<8x96xf32> -> vector<8x96xf32>
    %7 = arith.addf %3, %6 : vector<8x96xf32>
    %c0_6 = arith.constant 0 : index
    %c0_7 = arith.constant 0 : index
    %8 = vector.load %arg7[%c0_6, %c0_7] : memref<8x96xf32, #tpu.memory_space<vmem>>, vector<8x96xf32>
    tpu.vector_store %arg7[%c0_6, %c0_7], %7 {strides = array<i32>} : memref<8x96xf32, #tpu.memory_space<vmem>>, vector<8x96xf32>,
    %c0_i32_8 = arith.constant 0 : i32
    %9 = arith.cmpi eq, %arg2, %c0_i32_8 : i32
    %10 = arith.extui %9 : i1 to i32
    %c0_i32_9 = arith.constant 0 : i32
    %11 = arith.cmpi ne, %10, %c0_i32_9 : i32
    scf.if %11 {
      %c0_10 = arith.constant 0 : index
      %c0_11 = arith.constant 0 : index
      %12 = vector.load %arg7[%c0_10, %c0_11] : memref<8x96xf32, #tpu.memory_space<vmem>>, vector<8x96xf32>
      %c0_12 = arith.constant 0 : index
      %c0_13 = arith.constant 0 : index
      %13 = vector.load %arg5[%c0_12, %c0_13] : memref<1x96xf32, #tpu.memory_space<vmem>>, vector<1x96xf32>
      %14 = vector.broadcast %13 : vector<1x96xf32> to vector<8x96xf32>
      %15 = arith.addf %12, %14 : vector<8x96xf32>
      %16 = arith.truncf %15 : vector<8x96xf32> to vector<8x96xbf16>
      %c0_14 = arith.constant 0 : index
      %c0_15 = arith.constant 0 : index
      %17 = vector.load %arg6[%c0_14, %c0_15] : memref<8x96xbf16, #tpu.memory_space<vmem>>, vector<8x96xbf16>
      tpu.vector_store %arg6[%c0_14, %c0_15], %16 {strides = array<i32>} : memref<8x96xbf16, #tpu.memory_space<vmem>>, vector<8x96xbf16>,
    } else {
    }
    return
  }
  func.func @transform_0(%arg0: i32, %arg1: i32, %arg2: i32) -> (i32, i32) {
    %c0_i32 = arith.constant 0 : i32
    return %arg0, %arg2 : i32, i32
  }
  func.func @transform_1(%arg0: i32, %arg1: i32, %arg2: i32) -> (i32, i32) {
    %c0_i32 = arith.constant 0 : i32
    return %arg2, %arg1 : i32, i32
  }
  func.func @transform_2(%arg0: i32, %arg1: i32, %arg2: i32) -> (i32, i32) {
    %c0_i32 = arith.constant 0 : i32
    %c0_i32_0 = arith.constant 0 : i32
    return %c0_i32, %arg1 : i32, i32
  }
  func.func @transform_3(%arg0: i32, %arg1: i32, %arg2: i32) -> (i32, i32) {
    %c0_i32 = arith.constant 0 : i32
    return %arg0, %arg1 : i32, i32
  }
}

module attributes {stable_mosaic.version = 11 : i64} {
  func.func @_attention_kernel(%arg0: i32, %arg1: i32, %arg2: memref<1x8x96xbf16, #tpu.memory_space<vmem>>, %arg3: memref<1x1x8xf32, #tpu.memory_space<vmem>>, %arg4: memref<1x8x32xbf16, #tpu.memory_space<vmem>>) attributes {dimension_semantics = [#tpu.dimension_semantics<parallel>, #tpu.dimension_semantics<parallel>], iteration_bounds = array<i64: 2, 1>, scalar_prefetch = 0 : i64, scratch_operands = 0 : i64, tpu.core_type = #tpu.core_type<tc>, window_params = [{transform_indices = @transform_0, window_bounds = array<i64: 1, 8, 96>}, {transform_indices = @transform_1, window_bounds = array<i64: 1, 1, 8>}, {transform_indices = @transform_2, window_bounds = array<i64: 1, 8, 32>}]} {
    %c8_i32 = arith.constant 8 : i32
    %0 = arith.muli %arg1, %c8_i32 : i32
    %1 = tpu.assume_multiple %0, 8 : i32
    %c0 = arith.constant 0 : index
    %c0_0 = arith.constant 0 : index
    %c0_1 = arith.constant 0 : index
    %2 = vector.load %arg3[%c0, %c0_0, %c0_1] : memref<1x1x8xf32, #tpu.memory_space<vmem>>, vector<1x1x8xf32>
    %3 = vector.shape_cast %2 : vector<1x1x8xf32> to vector<1x8xf32>
    %c0_2 = arith.constant 0 : index
    %4 = arith.index_cast %1 : i32 to index
    %c0_3 = arith.constant 0 : index
    %5 = vector.load %arg2[%c0_2, %4, %c0_3] : memref<1x8x96xbf16, #tpu.memory_space<vmem>>, vector<1x8x8xbf16>
    %6 = vector.shape_cast %5 : vector<1x8x8xbf16> to vector<8x8xbf16>
    %c0_4 = arith.constant 0 : index
    %c0_5 = arith.constant 0 : index
    %c32 = arith.constant 32 : index
    %7 = vector.load %arg2[%c0_4, %c0_5, %c32] : memref<1x8x96xbf16, #tpu.memory_space<vmem>>, vector<1x8x8xbf16>
    %8 = vector.shape_cast %7 : vector<1x8x8xbf16> to vector<8x8xbf16>
    %c0_6 = arith.constant 0 : index
    %c0_7 = arith.constant 0 : index
    %c64 = arith.constant 64 : index
    %9 = vector.load %arg2[%c0_6, %c0_7, %c64] : memref<1x8x96xbf16, #tpu.memory_space<vmem>>, vector<1x8x8xbf16>
    %10 = vector.shape_cast %9 : vector<1x8x8xbf16> to vector<8x8xbf16>
    %cst = arith.constant dense<0.000000e+00> : vector<8x8xf32>
    %11 = tpu.matmul %6, %8, %cst {dimension_numbers = #tpu.dot_dimension_numbers<[1], [1], [0], [0], [0, 0, 1, 0], [], []>} : vector<8x8xbf16>, vector<8x8xbf16>, vector<8x8xf32> -> vector<8x8xf32>
    %cst_8 = arith.constant 0.353553385 : f32
    %12 = vector.broadcast %cst_8 : f32 to vector<8x8xf32>
    %13 = arith.mulf %11, %12 : vector<8x8xf32>
    %14 = vector.broadcast %3 : vector<1x8xf32> to vector<8x8xf32>
    %15 = arith.addf %13, %14 : vector<8x8xf32>
    %cst_9 = arith.constant dense<0xFF800000> : vector<8xf32>
    %16 = vector.multi_reduction <maximumf>, %15, %cst_9 [1] : vector<8x8xf32> to vector<8xf32>
    %17 = vector.shape_cast %16 : vector<8xf32> to vector<8x1xf32>
    %18 = vector.broadcast %17 : vector<8x1xf32> to vector<8x8xf32>
    %19 = arith.subf %15, %18 : vector<8x8xf32>
    %20 = math.exp %19 : vector<8x8xf32>
    %cst_10 = arith.constant dense<0.000000e+00> : vector<8xf32>
    %21 = vector.multi_reduction <add>, %20, %cst_10 [1] : vector<8x8xf32> to vector<8xf32>
    %22 = vector.shape_cast %21 : vector<8xf32> to vector<8x1xf32>
    %23 = tpu.reciprocal %22 {approx = true} : vector<8x1xf32> -> vector<8x1xf32>
    %24 = vector.broadcast %23 : vector<8x1xf32> to vector<8x8xf32>
    %25 = arith.mulf %20, %24 : vector<8x8xf32>
    %26 = arith.truncf %25 : vector<8x8xf32> to vector<8x8xbf16>
    %cst_11 = arith.constant dense<0.000000e+00> : vector<8x8xf32>
    %27 = tpu.matmul %26, %10, %cst_11 {dimension_numbers = #tpu.dot_dimension_numbers<[1], [0], [0], [1], [0, 0, 1, 1], [], []>} : vector<8x8xbf16>, vector<8x8xbf16>, vector<8x8xf32> -> vector<8x8xf32>
    %28 = arith.truncf %27 : vector<8x8xf32> to vector<8x8xbf16>
    %c0_12 = arith.constant 0 : index
    %c0_13 = arith.constant 0 : index
    %c0_14 = arith.constant 0 : index
    %29 = vector.load %arg4[%c0_12, %c0_13, %c0_14] : memref<1x8x32xbf16, #tpu.memory_space<vmem>>, vector<1x8x8xbf16>
    %30 = vector.shape_cast %29 : vector<1x8x8xbf16> to vector<8x8xbf16>
    %31 = vector.shape_cast %28 : vector<8x8xbf16> to vector<1x8x8xbf16>
    tpu.vector_store %arg4[%c0_12, %c0_13, %c0_14], %31 {strides = array<i32>} : memref<1x8x32xbf16, #tpu.memory_space<vmem>>, vector<1x8x8xbf16>,
    %c0_15 = arith.constant 0 : index
    %32 = arith.index_cast %1 : i32 to index
    %c8 = arith.constant 8 : index
    %33 = vector.load %arg2[%c0_15, %32, %c8] : memref<1x8x96xbf16, #tpu.memory_space<vmem>>, vector<1x8x8xbf16>
    %34 = vector.shape_cast %33 : vector<1x8x8xbf16> to vector<8x8xbf16>
    %c0_16 = arith.constant 0 : index
    %c0_17 = arith.constant 0 : index
    %c40 = arith.constant 40 : index
    %35 = vector.load %arg2[%c0_16, %c0_17, %c40] : memref<1x8x96xbf16, #tpu.memory_space<vmem>>, vector<1x8x8xbf16>
    %36 = vector.shape_cast %35 : vector<1x8x8xbf16> to vector<8x8xbf16>
    %c0_18 = arith.constant 0 : index
    %c0_19 = arith.constant 0 : index
    %c72 = arith.constant 72 : index
    %37 = vector.load %arg2[%c0_18, %c0_19, %c72] : memref<1x8x96xbf16, #tpu.memory_space<vmem>>, vector<1x8x8xbf16>
    %38 = vector.shape_cast %37 : vector<1x8x8xbf16> to vector<8x8xbf16>
    %cst_20 = arith.constant dense<0.000000e+00> : vector<8x8xf32>
    %39 = tpu.matmul %34, %36, %cst_20 {dimension_numbers = #tpu.dot_dimension_numbers<[1], [1], [0], [0], [0, 0, 1, 0], [], []>} : vector<8x8xbf16>, vector<8x8xbf16>, vector<8x8xf32> -> vector<8x8xf32>
    %cst_21 = arith.constant 0.353553385 : f32
    %40 = vector.broadcast %cst_21 : f32 to vector<8x8xf32>
    %41 = arith.mulf %39, %40 : vector<8x8xf32>
    %42 = vector.broadcast %3 : vector<1x8xf32> to vector<8x8xf32>
    %43 = arith.addf %41, %42 : vector<8x8xf32>
    %cst_22 = arith.constant dense<0xFF800000> : vector<8xf32>
    %44 = vector.multi_reduction <maximumf>, %43, %cst_22 [1] : vector<8x8xf32> to vector<8xf32>
    %45 = vector.shape_cast %44 : vector<8xf32> to vector<8x1xf32>
    %46 = vector.broadcast %45 : vector<8x1xf32> to vector<8x8xf32>
    %47 = arith.subf %43, %46 : vector<8x8xf32>
    %48 = math.exp %47 : vector<8x8xf32>
    %cst_23 = arith.constant dense<0.000000e+00> : vector<8xf32>
    %49 = vector.multi_reduction <add>, %48, %cst_23 [1] : vector<8x8xf32> to vector<8xf32>
    %50 = vector.shape_cast %49 : vector<8xf32> to vector<8x1xf32>
    %51 = tpu.reciprocal %50 {approx = true} : vector<8x1xf32> -> vector<8x1xf32>
    %52 = vector.broadcast %51 : vector<8x1xf32> to vector<8x8xf32>
    %53 = arith.mulf %48, %52 : vector<8x8xf32>
    %54 = arith.truncf %53 : vector<8x8xf32> to vector<8x8xbf16>
    %cst_24 = arith.constant dense<0.000000e+00> : vector<8x8xf32>
    %55 = tpu.matmul %54, %38, %cst_24 {dimension_numbers = #tpu.dot_dimension_numbers<[1], [0], [0], [1], [0, 0, 1, 1], [], []>} : vector<8x8xbf16>, vector<8x8xbf16>, vector<8x8xf32> -> vector<8x8xf32>
    %56 = arith.truncf %55 : vector<8x8xf32> to vector<8x8xbf16>
    %c0_25 = arith.constant 0 : index
    %c0_26 = arith.constant 0 : index
    %c8_27 = arith.constant 8 : index
    %57 = vector.load %arg4[%c0_25, %c0_26, %c8_27] : memref<1x8x32xbf16, #tpu.memory_space<vmem>>, vector<1x8x8xbf16>
    %58 = vector.shape_cast %57 : vector<1x8x8xbf16> to vector<8x8xbf16>
    %59 = vector.shape_cast %56 : vector<8x8xbf16> to vector<1x8x8xbf16>
    tpu.vector_store %arg4[%c0_25, %c0_26, %c8_27], %59 {strides = array<i32>} : memref<1x8x32xbf16, #tpu.memory_space<vmem>>, vector<1x8x8xbf16>,
    %c0_28 = arith.constant 0 : index
    %60 = arith.index_cast %1 : i32 to index
    %c16 = arith.constant 16 : index
    %61 = vector.load %arg2[%c0_28, %60, %c16] : memref<1x8x96xbf16, #tpu.memory_space<vmem>>, vector<1x8x8xbf16>
    %62 = vector.shape_cast %61 : vector<1x8x8xbf16> to vector<8x8xbf16>
    %c0_29 = arith.constant 0 : index
    %c0_30 = arith.constant 0 : index
    %c48 = arith.constant 48 : index
    %63 = vector.load %arg2[%c0_29, %c0_30, %c48] : memref<1x8x96xbf16, #tpu.memory_space<vmem>>, vector<1x8x8xbf16>
    %64 = vector.shape_cast %63 : vector<1x8x8xbf16> to vector<8x8xbf16>
    %c0_31 = arith.constant 0 : index
    %c0_32 = arith.constant 0 : index
    %c80 = arith.constant 80 : index
    %65 = vector.load %arg2[%c0_31, %c0_32, %c80] : memref<1x8x96xbf16, #tpu.memory_space<vmem>>, vector<1x8x8xbf16>
    %66 = vector.shape_cast %65 : vector<1x8x8xbf16> to vector<8x8xbf16>
    %cst_33 = arith.constant dense<0.000000e+00> : vector<8x8xf32>
    %67 = tpu.matmul %62, %64, %cst_33 {dimension_numbers = #tpu.dot_dimension_numbers<[1], [1], [0], [0], [0, 0, 1, 0], [], []>} : vector<8x8xbf16>, vector<8x8xbf16>, vector<8x8xf32> -> vector<8x8xf32>
    %cst_34 = arith.constant 0.353553385 : f32
    %68 = vector.broadcast %cst_34 : f32 to vector<8x8xf32>
    %69 = arith.mulf %67, %68 : vector<8x8xf32>
    %70 = vector.broadcast %3 : vector<1x8xf32> to vector<8x8xf32>
    %71 = arith.addf %69, %70 : vector<8x8xf32>
    %cst_35 = arith.constant dense<0xFF800000> : vector<8xf32>
    %72 = vector.multi_reduction <maximumf>, %71, %cst_35 [1] : vector<8x8xf32> to vector<8xf32>
    %73 = vector.shape_cast %72 : vector<8xf32> to vector<8x1xf32>
    %74 = vector.broadcast %73 : vector<8x1xf32> to vector<8x8xf32>
    %75 = arith.subf %71, %74 : vector<8x8xf32>
    %76 = math.exp %75 : vector<8x8xf32>
    %cst_36 = arith.constant dense<0.000000e+00> : vector<8xf32>
    %77 = vector.multi_reduction <add>, %76, %cst_36 [1] : vector<8x8xf32> to vector<8xf32>
    %78 = vector.shape_cast %77 : vector<8xf32> to vector<8x1xf32>
    %79 = tpu.reciprocal %78 {approx = true} : vector<8x1xf32> -> vector<8x1xf32>
    %80 = vector.broadcast %79 : vector<8x1xf32> to vector<8x8xf32>
    %81 = arith.mulf %76, %80 : vector<8x8xf32>
    %82 = arith.truncf %81 : vector<8x8xf32> to vector<8x8xbf16>
    %cst_37 = arith.constant dense<0.000000e+00> : vector<8x8xf32>
    %83 = tpu.matmul %82, %66, %cst_37 {dimension_numbers = #tpu.dot_dimension_numbers<[1], [0], [0], [1], [0, 0, 1, 1], [], []>} : vector<8x8xbf16>, vector<8x8xbf16>, vector<8x8xf32> -> vector<8x8xf32>
    %84 = arith.truncf %83 : vector<8x8xf32> to vector<8x8xbf16>
    %c0_38 = arith.constant 0 : index
    %c0_39 = arith.constant 0 : index
    %c16_40 = arith.constant 16 : index
    %85 = vector.load %arg4[%c0_38, %c0_39, %c16_40] : memref<1x8x32xbf16, #tpu.memory_space<vmem>>, vector<1x8x8xbf16>
    %86 = vector.shape_cast %85 : vector<1x8x8xbf16> to vector<8x8xbf16>
    %87 = vector.shape_cast %84 : vector<8x8xbf16> to vector<1x8x8xbf16>
    tpu.vector_store %arg4[%c0_38, %c0_39, %c16_40], %87 {strides = array<i32>} : memref<1x8x32xbf16, #tpu.memory_space<vmem>>, vector<1x8x8xbf16>,
    %c0_41 = arith.constant 0 : index
    %88 = arith.index_cast %1 : i32 to index
    %c24 = arith.constant 24 : index
    %89 = vector.load %arg2[%c0_41, %88, %c24] : memref<1x8x96xbf16, #tpu.memory_space<vmem>>, vector<1x8x8xbf16>
    %90 = vector.shape_cast %89 : vector<1x8x8xbf16> to vector<8x8xbf16>
    %c0_42 = arith.constant 0 : index
    %c0_43 = arith.constant 0 : index
    %c56 = arith.constant 56 : index
    %91 = vector.load %arg2[%c0_42, %c0_43, %c56] : memref<1x8x96xbf16, #tpu.memory_space<vmem>>, vector<1x8x8xbf16>
    %92 = vector.shape_cast %91 : vector<1x8x8xbf16> to vector<8x8xbf16>
    %c0_44 = arith.constant 0 : index
    %c0_45 = arith.constant 0 : index
    %c88 = arith.constant 88 : index
    %93 = vector.load %arg2[%c0_44, %c0_45, %c88] : memref<1x8x96xbf16, #tpu.memory_space<vmem>>, vector<1x8x8xbf16>
    %94 = vector.shape_cast %93 : vector<1x8x8xbf16> to vector<8x8xbf16>
    %cst_46 = arith.constant dense<0.000000e+00> : vector<8x8xf32>
    %95 = tpu.matmul %90, %92, %cst_46 {dimension_numbers = #tpu.dot_dimension_numbers<[1], [1], [0], [0], [0, 0, 1, 0], [], []>} : vector<8x8xbf16>, vector<8x8xbf16>, vector<8x8xf32> -> vector<8x8xf32>
    %cst_47 = arith.constant 0.353553385 : f32
    %96 = vector.broadcast %cst_47 : f32 to vector<8x8xf32>
    %97 = arith.mulf %95, %96 : vector<8x8xf32>
    %98 = vector.broadcast %3 : vector<1x8xf32> to vector<8x8xf32>
    %99 = arith.addf %97, %98 : vector<8x8xf32>
    %cst_48 = arith.constant dense<0xFF800000> : vector<8xf32>
    %100 = vector.multi_reduction <maximumf>, %99, %cst_48 [1] : vector<8x8xf32> to vector<8xf32>
    %101 = vector.shape_cast %100 : vector<8xf32> to vector<8x1xf32>
    %102 = vector.broadcast %101 : vector<8x1xf32> to vector<8x8xf32>
    %103 = arith.subf %99, %102 : vector<8x8xf32>
    %104 = math.exp %103 : vector<8x8xf32>
    %cst_49 = arith.constant dense<0.000000e+00> : vector<8xf32>
    %105 = vector.multi_reduction <add>, %104, %cst_49 [1] : vector<8x8xf32> to vector<8xf32>
    %106 = vector.shape_cast %105 : vector<8xf32> to vector<8x1xf32>
    %107 = tpu.reciprocal %106 {approx = true} : vector<8x1xf32> -> vector<8x1xf32>
    %108 = vector.broadcast %107 : vector<8x1xf32> to vector<8x8xf32>
    %109 = arith.mulf %104, %108 : vector<8x8xf32>
    %110 = arith.truncf %109 : vector<8x8xf32> to vector<8x8xbf16>
    %cst_50 = arith.constant dense<0.000000e+00> : vector<8x8xf32>
    %111 = tpu.matmul %110, %94, %cst_50 {dimension_numbers = #tpu.dot_dimension_numbers<[1], [0], [0], [1], [0, 0, 1, 1], [], []>} : vector<8x8xbf16>, vector<8x8xbf16>, vector<8x8xf32> -> vector<8x8xf32>
    %112 = arith.truncf %111 : vector<8x8xf32> to vector<8x8xbf16>
    %c0_51 = arith.constant 0 : index
    %c0_52 = arith.constant 0 : index
    %c24_53 = arith.constant 24 : index
    %113 = vector.load %arg4[%c0_51, %c0_52, %c24_53] : memref<1x8x32xbf16, #tpu.memory_space<vmem>>, vector<1x8x8xbf16>
    %114 = vector.shape_cast %113 : vector<1x8x8xbf16> to vector<8x8xbf16>
    %115 = vector.shape_cast %112 : vector<8x8xbf16> to vector<1x8x8xbf16>
    tpu.vector_store %arg4[%c0_51, %c0_52, %c24_53], %115 {strides = array<i32>} : memref<1x8x32xbf16, #tpu.memory_space<vmem>>, vector<1x8x8xbf16>,
    return
  }
  func.func @transform_0(%arg0: i32, %arg1: i32) -> (i32, i32, i32) {
    %c0_i32 = arith.constant 0 : i32
    %c0_i32_0 = arith.constant 0 : i32
    %c0_i32_1 = arith.constant 0 : i32
    return %arg0, %c0_i32, %c0_i32_0 : i32, i32, i32
  }
  func.func @transform_1(%arg0: i32, %arg1: i32) -> (i32, i32, i32) {
    %c0_i32 = arith.constant 0 : i32
    %c0_i32_0 = arith.constant 0 : i32
    %c0_i32_1 = arith.constant 0 : i32
    return %arg0, %c0_i32, %c0_i32_0 : i32, i32, i32
  }
  func.func @transform_2(%arg0: i32, %arg1: i32) -> (i32, i32, i32) {
    %c0_i32 = arith.constant 0 : i32
    %c0_i32_0 = arith.constant 0 : i32
    return %arg0, %arg1, %c0_i32 : i32, i32, i32
  }
}

module attributes {stable_mosaic.version = 11 : i64} {
  func.func @_matmul_res_ln_kernel(%arg0: i32, %arg1: i32, %arg2: memref<8x32xbf16, #tpu.memory_space<vmem>>, %arg3: memref<32x32xbf16, #tpu.memory_space<vmem>>, %arg4: memref<1x32xf32, #tpu.memory_space<vmem>>, %arg5: memref<8x32xbf16, #tpu.memory_space<vmem>>, %arg6: memref<1x32xf32, #tpu.memory_space<vmem>>, %arg7: memref<1x32xf32, #tpu.memory_space<vmem>>, %arg8: memref<8x32xbf16, #tpu.memory_space<vmem>>, %arg9: memref<8x32xf32, #tpu.memory_space<vmem>>) attributes {dimension_semantics = [#tpu.dimension_semantics<parallel>, #tpu.dimension_semantics<arbitrary>], iteration_bounds = array<i64: 2, 1>, scalar_prefetch = 0 : i64, scratch_operands = 1 : i64, tpu.core_type = #tpu.core_type<tc>, window_params = [{transform_indices = @transform_0, window_bounds = array<i64: 8, 32>}, {transform_indices = @transform_1, window_bounds = array<i64: 32, 32>}, {pipeline_mode = #tpu.pipeline_mode<synchronous>, transform_indices = @transform_2, window_bounds = array<i64: 1, 32>}, {transform_indices = @transform_3, window_bounds = array<i64: 8, 32>}, {pipeline_mode = #tpu.pipeline_mode<synchronous>, transform_indices = @transform_4, window_bounds = array<i64: 1, 32>}, {pipeline_mode = #tpu.pipeline_mode<synchronous>, transform_indices = @transform_5, window_bounds = array<i64: 1, 32>}, {transform_indices = @transform_6, window_bounds = array<i64: 8, 32>}]} {
    %c0_i32 = arith.constant 0 : i32
    %0 = arith.cmpi eq, %arg1, %c0_i32 : i32
    %1 = arith.extui %0 : i1 to i32
    %c0_i32_0 = arith.constant 0 : i32
    %2 = arith.cmpi ne, %1, %c0_i32_0 : i32
    scf.if %2 {
      %cst_10 = arith.constant 0.000000e+00 : f32
      %12 = vector.broadcast %cst_10 : f32 to vector<8x32xf32>
      %c0_11 = arith.constant 0 : index
      %c0_12 = arith.constant 0 : index
      %13 = vector.load %arg9[%c0_11, %c0_12] : memref<8x32xf32, #tpu.memory_space<vmem>>, vector<8x32xf32>
      tpu.vector_store %arg9[%c0_11, %c0_12], %12 {strides = array<i32>} : memref<8x32xf32, #tpu.memory_space<vmem>>, vector<8x32xf32>,
    } else {
    }
    %c0 = arith.constant 0 : index
    %c0_1 = arith.constant 0 : index
    %3 = vector.load %arg9[%c0, %c0_1] : memref<8x32xf32, #tpu.memory_space<vmem>>, vector<8x32xf32>
    %c0_2 = arith.constant 0 : index
    %c0_3 = arith.constant 0 : index
    %4 = vector.load %arg2[%c0_2, %c0_3] : memref<8x32xbf16, #tpu.memory_space<vmem>>, vector<8x32xbf16>
    %c0_4 = arith.constant 0 : index
    %c0_5 = arith.constant 0 : index
    %5 = vector.load %arg3[%c0_4, %c0_5] : memref<32x32xbf16, #tpu.memory_space<vmem>>, vector<32x32xbf16>
    %cst = arith.constant dense<0.000000e+00> : vector<8x32xf32>
    %6 = tpu.matmul %4, %5, %cst {dimension_numbers = #tpu.dot_dimension_numbers<[1], [0], [0], [1], [0, 0, 1, 1], [], []>} : vector<8x32xbf16>, vector<32x32xbf16>, vector<8x32xf32> -> vector<8x32xf32>
    %7 = arith.addf %3, %6 : vector<8x32xf32>
    %c0_6 = arith.constant 0 : index
    %c0_7 = arith.constant 0 : index
    %8 = vector.load %arg9[%c0_6, %c0_7] : memref<8x32xf32, #tpu.memory_space<vmem>>, vector<8x32xf32>
    tpu.vector_store %arg9[%c0_6, %c0_7], %7 {strides = array<i32>} : memref<8x32xf32, #tpu.memory_space<vmem>>, vector<8x32xf32>,
    %c0_i32_8 = arith.constant 0 : i32
    %9 = arith.cmpi eq, %arg1, %c0_i32_8 : i32
    %10 = arith.extui %9 : i1 to i32
    %c0_i32_9 = arith.constant 0 : i32
    %11 = arith.cmpi ne, %10, %c0_i32_9 : i32
    scf.if %11 {
      %c0_10 = arith.constant 0 : index
      %c0_11 = arith.constant 0 : index
      %12 = vector.load %arg9[%c0_10, %c0_11] : memref<8x32xf32, #tpu.memory_space<vmem>>, vector<8x32xf32>
      %c0_12 = arith.constant 0 : index
      %c0_13 = arith.constant 0 : index
      %13 = vector.load %arg4[%c0_12, %c0_13] : memref<1x32xf32, #tpu.memory_space<vmem>>, vector<1x32xf32>
      %14 = vector.broadcast %13 : vector<1x32xf32> to vector<8x32xf32>
      %15 = arith.addf %12, %14 : vector<8x32xf32>
      %c0_14 = arith.constant 0 : index
      %c0_15 = arith.constant 0 : index
      %16 = vector.load %arg5[%c0_14, %c0_15] : memref<8x32xbf16, #tpu.memory_space<vmem>>, vector<8x32xbf16>
      %17 = arith.extf %16 : vector<8x32xbf16> to vector<8x32xf32>
      %18 = arith.addf %15, %17 : vector<8x32xf32>
      %cst_16 = arith.constant dense<0.000000e+00> : vector<8xf32>
      %19 = vector.multi_reduction <add>, %18, %cst_16 [1] : vector<8x32xf32> to vector<8xf32>
      %20 = vector.shape_cast %19 : vector<8xf32> to vector<8x1xf32>
      %cst_17 = arith.constant 3.200000e+01 : f32
      %21 = vector.broadcast %cst_17 : f32 to vector<8x1xf32>
      %22 = arith.divf %20, %21 : vector<8x1xf32>
      %23 = vector.broadcast %22 : vector<8x1xf32> to vector<8x32xf32>
      %24 = arith.subf %18, %23 : vector<8x32xf32>
      %25 = arith.mulf %24, %24 : vector<8x32xf32>
      %cst_18 = arith.constant dense<0.000000e+00> : vector<8xf32>
      %26 = vector.multi_reduction <add>, %25, %cst_18 [1] : vector<8x32xf32> to vector<8xf32>
      %27 = vector.shape_cast %26 : vector<8xf32> to vector<8x1xf32>
      %cst_19 = arith.constant 3.200000e+01 : f32
      %28 = vector.broadcast %cst_19 : f32 to vector<8x1xf32>
      %29 = arith.divf %27, %28 : vector<8x1xf32>
      %cst_20 = arith.constant 9.99999974E-6 : f32
      %30 = vector.broadcast %cst_20 : f32 to vector<8x1xf32>
      %31 = arith.addf %29, %30 : vector<8x1xf32>
      %32 = math.rsqrt %31 : vector<8x1xf32>
      %33 = vector.broadcast %32 : vector<8x1xf32> to vector<8x32xf32>
      %34 = arith.mulf %24, %33 : vector<8x32xf32>
      %c0_21 = arith.constant 0 : index
      %c0_22 = arith.constant 0 : index
      %35 = vector.load %arg6[%c0_21, %c0_22] : memref<1x32xf32, #tpu.memory_space<vmem>>, vector<1x32xf32>
      %36 = vector.broadcast %35 : vector<1x32xf32> to vector<8x32xf32>
      %37 = arith.mulf %34, %36 : vector<8x32xf32>
      %c0_23 = arith.constant 0 : index
      %c0_24 = arith.constant 0 : index
      %38 = vector.load %arg7[%c0_23, %c0_24] : memref<1x32xf32, #tpu.memory_space<vmem>>, vector<1x32xf32>
      %39 = vector.broadcast %38 : vector<1x32xf32> to vector<8x32xf32>
      %40 = arith.addf %37, %39 : vector<8x32xf32>
      %41 = arith.truncf %40 : vector<8x32xf32> to vector<8x32xbf16>
      %c0_25 = arith.constant 0 : index
      %c0_26 = arith.constant 0 : index
      %42 = vector.load %arg8[%c0_25, %c0_26] : memref<8x32xbf16, #tpu.memory_space<vmem>>, vector<8x32xbf16>
      tpu.vector_store %arg8[%c0_25, %c0_26], %41 {strides = array<i32>} : memref<8x32xbf16, #tpu.memory_space<vmem>>, vector<8x32xbf16>,
    } else {
    }
    return
  }
  func.func @transform_0(%arg0: i32, %arg1: i32) -> (i32, i32) {
    %c0_i32 = arith.constant 0 : i32
    return %arg0, %arg1 : i32, i32
  }
  func.func @transform_1(%arg0: i32, %arg1: i32) -> (i32, i32) {
    %c0_i32 = arith.constant 0 : i32
    %c0_i32_0 = arith.constant 0 : i32
    return %arg1, %c0_i32 : i32, i32
  }
  func.func @transform_2(%arg0: i32, %arg1: i32) -> (i32, i32) {
    %c0_i32 = arith.constant 0 : i32
    %c0_i32_0 = arith.constant 0 : i32
    %c0_i32_1 = arith.constant 0 : i32
    return %c0_i32, %c0_i32_0 : i32, i32
  }
  func.func @transform_3(%arg0: i32, %arg1: i32) -> (i32, i32) {
    %c0_i32 = arith.constant 0 : i32
    %c0_i32_0 = arith.constant 0 : i32
    return %arg0, %c0_i32 : i32, i32
  }
  func.func @transform_4(%arg0: i32, %arg1: i32) -> (i32, i32) {
    %c0_i32 = arith.constant 0 : i32
    %c0_i32_0 = arith.constant 0 : i32
    %c0_i32_1 = arith.constant 0 : i32
    return %c0_i32, %c0_i32_0 : i32, i32
  }
  func.func @transform_5(%arg0: i32, %arg1: i32) -> (i32, i32) {
    %c0_i32 = arith.constant 0 : i32
    %c0_i32_0 = arith.constant 0 : i32
    %c0_i32_1 = arith.constant 0 : i32
    return %c0_i32, %c0_i32_0 : i32, i32
  }
  func.func @transform_6(%arg0: i32, %arg1: i32) -> (i32, i32) {
    %c0_i32 = arith.constant 0 : i32
    %c0_i32_0 = arith.constant 0 : i32
    return %arg0, %c0_i32 : i32, i32
  }
}

module attributes {stable_mosaic.version = 11 : i64} {
  func.func @_matmul_kernel(%arg0: i32, %arg1: i32, %arg2: i32, %arg3: memref<8x32xbf16, #tpu.memory_space<vmem>>, %arg4: memref<32x32xbf16, #tpu.memory_space<vmem>>, %arg5: memref<8x32xf32, #tpu.memory_space<vmem>>, %arg6: memref<8x32xf32, #tpu.memory_space<vmem>>) attributes {dimension_semantics = [#tpu.dimension_semantics<parallel>, #tpu.dimension_semantics<parallel>, #tpu.dimension_semantics<arbitrary>], iteration_bounds = array<i64: 2, 1, 1>, scalar_prefetch = 0 : i64, scratch_operands = 1 : i64, tpu.core_type = #tpu.core_type<tc>, window_params = [{transform_indices = @transform_0, window_bounds = array<i64: 8, 32>}, {transform_indices = @transform_1, window_bounds = array<i64: 32, 32>}, {transform_indices = @transform_2, window_bounds = array<i64: 8, 32>}]} {
    %c0_i32 = arith.constant 0 : i32
    %0 = arith.cmpi eq, %arg2, %c0_i32 : i32
    %1 = arith.extui %0 : i1 to i32
    %c0_i32_0 = arith.constant 0 : i32
    %2 = arith.cmpi ne, %1, %c0_i32_0 : i32
    scf.if %2 {
      %cst_10 = arith.constant 0.000000e+00 : f32
      %12 = vector.broadcast %cst_10 : f32 to vector<8x32xf32>
      %c0_11 = arith.constant 0 : index
      %c0_12 = arith.constant 0 : index
      %13 = vector.load %arg6[%c0_11, %c0_12] : memref<8x32xf32, #tpu.memory_space<vmem>>, vector<8x32xf32>
      tpu.vector_store %arg6[%c0_11, %c0_12], %12 {strides = array<i32>} : memref<8x32xf32, #tpu.memory_space<vmem>>, vector<8x32xf32>,
    } else {
    }
    %c0 = arith.constant 0 : index
    %c0_1 = arith.constant 0 : index
    %3 = vector.load %arg6[%c0, %c0_1] : memref<8x32xf32, #tpu.memory_space<vmem>>, vector<8x32xf32>
    %c0_2 = arith.constant 0 : index
    %c0_3 = arith.constant 0 : index
    %4 = vector.load %arg3[%c0_2, %c0_3] : memref<8x32xbf16, #tpu.memory_space<vmem>>, vector<8x32xbf16>
    %c0_4 = arith.constant 0 : index
    %c0_5 = arith.constant 0 : index
    %5 = vector.load %arg4[%c0_4, %c0_5] : memref<32x32xbf16, #tpu.memory_space<vmem>>, vector<32x32xbf16>
    %cst = arith.constant dense<0.000000e+00> : vector<8x32xf32>
    %6 = tpu.matmul %4, %5, %cst {dimension_numbers = #tpu.dot_dimension_numbers<[1], [0], [0], [1], [0, 0, 1, 1], [], []>} : vector<8x32xbf16>, vector<32x32xbf16>, vector<8x32xf32> -> vector<8x32xf32>
    %7 = arith.addf %3, %6 : vector<8x32xf32>
    %c0_6 = arith.constant 0 : index
    %c0_7 = arith.constant 0 : index
    %8 = vector.load %arg6[%c0_6, %c0_7] : memref<8x32xf32, #tpu.memory_space<vmem>>, vector<8x32xf32>
    tpu.vector_store %arg6[%c0_6, %c0_7], %7 {strides = array<i32>} : memref<8x32xf32, #tpu.memory_space<vmem>>, vector<8x32xf32>,
    %c0_i32_8 = arith.constant 0 : i32
    %9 = arith.cmpi eq, %arg2, %c0_i32_8 : i32
    %10 = arith.extui %9 : i1 to i32
    %c0_i32_9 = arith.constant 0 : i32
    %11 = arith.cmpi ne, %10, %c0_i32_9 : i32
    scf.if %11 {
      %c0_10 = arith.constant 0 : index
      %c0_11 = arith.constant 0 : index
      %12 = vector.load %arg6[%c0_10, %c0_11] : memref<8x32xf32, #tpu.memory_space<vmem>>, vector<8x32xf32>
      %c0_12 = arith.constant 0 : index
      %c0_13 = arith.constant 0 : index
      %13 = vector.load %arg5[%c0_12, %c0_13] : memref<8x32xf32, #tpu.memory_space<vmem>>, vector<8x32xf32>
      tpu.vector_store %arg5[%c0_12, %c0_13], %12 {strides = array<i32>} : memref<8x32xf32, #tpu.memory_space<vmem>>, vector<8x32xf32>,
    } else {
    }
    return
  }
  func.func @transform_0(%arg0: i32, %arg1: i32, %arg2: i32) -> (i32, i32) {
    %c0_i32 = arith.constant 0 : i32
    return %arg0, %arg2 : i32, i32
  }
  func.func @transform_1(%arg0: i32, %arg1: i32, %arg2: i32) -> (i32, i32) {
    %c0_i32 = arith.constant 0 : i32
    return %arg2, %arg1 : i32, i32
  }
  func.func @transform_2(%arg0: i32, %arg1: i32, %arg2: i32) -> (i32, i32) {
    %c0_i32 = arith.constant 0 : i32
    return %arg0, %arg1 : i32, i32
  }
}

module attributes {stable_mosaic.version = 11 : i64} {
  func.func @_ffn_res_ln_kernel(%arg0: i32, %arg1: i32, %arg2: memref<8x32xbf16, #tpu.memory_space<vmem>>, %arg3: memref<32x64xbf16, #tpu.memory_space<vmem>>, %arg4: memref<1x64xf32, #tpu.memory_space<vmem>>, %arg5: memref<64x32xbf16, #tpu.memory_space<vmem>>, %arg6: memref<1x32xf32, #tpu.memory_space<vmem>>, %arg7: memref<1x32xf32, #tpu.memory_space<vmem>>, %arg8: memref<1x32xf32, #tpu.memory_space<vmem>>, %arg9: memref<8x32xbf16, #tpu.memory_space<vmem>>, %arg10: memref<8x32xf32, #tpu.memory_space<vmem>>) attributes {dimension_semantics = [#tpu.dimension_semantics<parallel>, #tpu.dimension_semantics<arbitrary>], iteration_bounds = array<i64: 2, 1>, scalar_prefetch = 0 : i64, scratch_operands = 1 : i64, tpu.core_type = #tpu.core_type<tc>, window_params = [{transform_indices = @transform_0, window_bounds = array<i64: 8, 32>}, {transform_indices = @transform_1, window_bounds = array<i64: 32, 64>}, {transform_indices = @transform_2, window_bounds = array<i64: 1, 64>}, {transform_indices = @transform_3, window_bounds = array<i64: 64, 32>}, {pipeline_mode = #tpu.pipeline_mode<synchronous>, transform_indices = @transform_4, window_bounds = array<i64: 1, 32>}, {pipeline_mode = #tpu.pipeline_mode<synchronous>, transform_indices = @transform_5, window_bounds = array<i64: 1, 32>}, {pipeline_mode = #tpu.pipeline_mode<synchronous>, transform_indices = @transform_6, window_bounds = array<i64: 1, 32>}, {transform_indices = @transform_7, window_bounds = array<i64: 8, 32>}]} {
    %c0_i32 = arith.constant 0 : i32
    %0 = arith.cmpi eq, %arg1, %c0_i32 : i32
    %1 = arith.extui %0 : i1 to i32
    %c0_i32_0 = arith.constant 0 : i32
    %2 = arith.cmpi ne, %1, %c0_i32_0 : i32
    scf.if %2 {
      %cst_16 = arith.constant 0.000000e+00 : f32
      %20 = vector.broadcast %cst_16 : f32 to vector<8x32xf32>
      %c0_17 = arith.constant 0 : index
      %c0_18 = arith.constant 0 : index
      %21 = vector.load %arg10[%c0_17, %c0_18] : memref<8x32xf32, #tpu.memory_space<vmem>>, vector<8x32xf32>
      tpu.vector_store %arg10[%c0_17, %c0_18], %20 {strides = array<i32>} : memref<8x32xf32, #tpu.memory_space<vmem>>, vector<8x32xf32>,
    } else {
    }
    %c0 = arith.constant 0 : index
    %c0_1 = arith.constant 0 : index
    %3 = vector.load %arg2[%c0, %c0_1] : memref<8x32xbf16, #tpu.memory_space<vmem>>, vector<8x32xbf16>
    %c0_2 = arith.constant 0 : index
    %c0_3 = arith.constant 0 : index
    %4 = vector.load %arg3[%c0_2, %c0_3] : memref<32x64xbf16, #tpu.memory_space<vmem>>, vector<32x64xbf16>
    %cst = arith.constant dense<0.000000e+00> : vector<8x64xf32>
    %5 = tpu.matmul %3, %4, %cst {dimension_numbers = #tpu.dot_dimension_numbers<[1], [0], [0], [1], [0, 0, 1, 1], [], []>} : vector<8x32xbf16>, vector<32x64xbf16>, vector<8x64xf32> -> vector<8x64xf32>
    %c0_4 = arith.constant 0 : index
    %c0_5 = arith.constant 0 : index
    %6 = vector.load %arg4[%c0_4, %c0_5] : memref<1x64xf32, #tpu.memory_space<vmem>>, vector<1x64xf32>
    %7 = vector.broadcast %6 : vector<1x64xf32> to vector<8x64xf32>
    %8 = arith.addf %5, %7 : vector<8x64xf32>
    %cst_6 = arith.constant 0.000000e+00 : f32
    %9 = vector.broadcast %cst_6 : f32 to vector<8x64xf32>
    %10 = arith.maximumf %8, %9 : vector<8x64xf32>
    %c0_7 = arith.constant 0 : index
    %c0_8 = arith.constant 0 : index
    %11 = vector.load %arg10[%c0_7, %c0_8] : memref<8x32xf32, #tpu.memory_space<vmem>>, vector<8x32xf32>
    %12 = arith.truncf %10 : vector<8x64xf32> to vector<8x64xbf16>
    %c0_9 = arith.constant 0 : index
    %c0_10 = arith.constant 0 : index
    %13 = vector.load %arg5[%c0_9, %c0_10] : memref<64x32xbf16, #tpu.memory_space<vmem>>, vector<64x32xbf16>
    %cst_11 = arith.constant dense<0.000000e+00> : vector<8x32xf32>
    %14 = tpu.matmul %12, %13, %cst_11 {dimension_numbers = #tpu.dot_dimension_numbers<[1], [0], [0], [1], [0, 0, 1, 1], [], []>} : vector<8x64xbf16>, vector<64x32xbf16>, vector<8x32xf32> -> vector<8x32xf32>
    %15 = arith.addf %11, %14 : vector<8x32xf32>
    %c0_12 = arith.constant 0 : index
    %c0_13 = arith.constant 0 : index
    %16 = vector.load %arg10[%c0_12, %c0_13] : memref<8x32xf32, #tpu.memory_space<vmem>>, vector<8x32xf32>
    tpu.vector_store %arg10[%c0_12, %c0_13], %15 {strides = array<i32>} : memref<8x32xf32, #tpu.memory_space<vmem>>, vector<8x32xf32>,
    %c0_i32_14 = arith.constant 0 : i32
    %17 = arith.cmpi eq, %arg1, %c0_i32_14 : i32
    %18 = arith.extui %17 : i1 to i32
    %c0_i32_15 = arith.constant 0 : i32
    %19 = arith.cmpi ne, %18, %c0_i32_15 : i32
    scf.if %19 {
      %c0_16 = arith.constant 0 : index
      %c0_17 = arith.constant 0 : index
      %20 = vector.load %arg10[%c0_16, %c0_17] : memref<8x32xf32, #tpu.memory_space<vmem>>, vector<8x32xf32>
      %c0_18 = arith.constant 0 : index
      %c0_19 = arith.constant 0 : index
      %21 = vector.load %arg6[%c0_18, %c0_19] : memref<1x32xf32, #tpu.memory_space<vmem>>, vector<1x32xf32>
      %22 = vector.broadcast %21 : vector<1x32xf32> to vector<8x32xf32>
      %23 = arith.addf %20, %22 : vector<8x32xf32>
      %c0_20 = arith.constant 0 : index
      %c0_21 = arith.constant 0 : index
      %24 = vector.load %arg2[%c0_20, %c0_21] : memref<8x32xbf16, #tpu.memory_space<vmem>>, vector<8x32xbf16>
      %25 = arith.extf %24 : vector<8x32xbf16> to vector<8x32xf32>
      %26 = arith.addf %23, %25 : vector<8x32xf32>
      %cst_22 = arith.constant dense<0.000000e+00> : vector<8xf32>
      %27 = vector.multi_reduction <add>, %26, %cst_22 [1] : vector<8x32xf32> to vector<8xf32>
      %28 = vector.shape_cast %27 : vector<8xf32> to vector<8x1xf32>
      %cst_23 = arith.constant 3.200000e+01 : f32
      %29 = vector.broadcast %cst_23 : f32 to vector<8x1xf32>
      %30 = arith.divf %28, %29 : vector<8x1xf32>
      %31 = vector.broadcast %30 : vector<8x1xf32> to vector<8x32xf32>
      %32 = arith.subf %26, %31 : vector<8x32xf32>
      %33 = arith.mulf %32, %32 : vector<8x32xf32>
      %cst_24 = arith.constant dense<0.000000e+00> : vector<8xf32>
      %34 = vector.multi_reduction <add>, %33, %cst_24 [1] : vector<8x32xf32> to vector<8xf32>
      %35 = vector.shape_cast %34 : vector<8xf32> to vector<8x1xf32>
      %cst_25 = arith.constant 3.200000e+01 : f32
      %36 = vector.broadcast %cst_25 : f32 to vector<8x1xf32>
      %37 = arith.divf %35, %36 : vector<8x1xf32>
      %cst_26 = arith.constant 9.99999974E-6 : f32
      %38 = vector.broadcast %cst_26 : f32 to vector<8x1xf32>
      %39 = arith.addf %37, %38 : vector<8x1xf32>
      %40 = math.rsqrt %39 : vector<8x1xf32>
      %41 = vector.broadcast %40 : vector<8x1xf32> to vector<8x32xf32>
      %42 = arith.mulf %32, %41 : vector<8x32xf32>
      %c0_27 = arith.constant 0 : index
      %c0_28 = arith.constant 0 : index
      %43 = vector.load %arg7[%c0_27, %c0_28] : memref<1x32xf32, #tpu.memory_space<vmem>>, vector<1x32xf32>
      %44 = vector.broadcast %43 : vector<1x32xf32> to vector<8x32xf32>
      %45 = arith.mulf %42, %44 : vector<8x32xf32>
      %c0_29 = arith.constant 0 : index
      %c0_30 = arith.constant 0 : index
      %46 = vector.load %arg8[%c0_29, %c0_30] : memref<1x32xf32, #tpu.memory_space<vmem>>, vector<1x32xf32>
      %47 = vector.broadcast %46 : vector<1x32xf32> to vector<8x32xf32>
      %48 = arith.addf %45, %47 : vector<8x32xf32>
      %49 = arith.truncf %48 : vector<8x32xf32> to vector<8x32xbf16>
      %c0_31 = arith.constant 0 : index
      %c0_32 = arith.constant 0 : index
      %50 = vector.load %arg9[%c0_31, %c0_32] : memref<8x32xbf16, #tpu.memory_space<vmem>>, vector<8x32xbf16>
      tpu.vector_store %arg9[%c0_31, %c0_32], %49 {strides = array<i32>} : memref<8x32xbf16, #tpu.memory_space<vmem>>, vector<8x32xbf16>,
    } else {
    }
    return
  }
  func.func @transform_0(%arg0: i32, %arg1: i32) -> (i32, i32) {
    %c0_i32 = arith.constant 0 : i32
    %c0_i32_0 = arith.constant 0 : i32
    return %arg0, %c0_i32 : i32, i32
  }
  func.func @transform_1(%arg0: i32, %arg1: i32) -> (i32, i32) {
    %c0_i32 = arith.constant 0 : i32
    %c0_i32_0 = arith.constant 0 : i32
    return %c0_i32, %arg1 : i32, i32
  }
  func.func @transform_2(%arg0: i32, %arg1: i32) -> (i32, i32) {
    %c0_i32 = arith.constant 0 : i32
    %c0_i32_0 = arith.constant 0 : i32
    return %c0_i32, %arg1 : i32, i32
  }
  func.func @transform_3(%arg0: i32, %arg1: i32) -> (i32, i32) {
    %c0_i32 = arith.constant 0 : i32
    %c0_i32_0 = arith.constant 0 : i32
    return %arg1, %c0_i32 : i32, i32
  }
  func.func @transform_4(%arg0: i32, %arg1: i32) -> (i32, i32) {
    %c0_i32 = arith.constant 0 : i32
    %c0_i32_0 = arith.constant 0 : i32
    %c0_i32_1 = arith.constant 0 : i32
    return %c0_i32, %c0_i32_0 : i32, i32
  }
  func.func @transform_5(%arg0: i32, %arg1: i32) -> (i32, i32) {
    %c0_i32 = arith.constant 0 : i32
    %c0_i32_0 = arith.constant 0 : i32
    %c0_i32_1 = arith.constant 0 : i32
    return %c0_i32, %c0_i32_0 : i32, i32
  }
  func.func @transform_6(%arg0: i32, %arg1: i32) -> (i32, i32) {
    %c0_i32 = arith.constant 0 : i32
    %c0_i32_0 = arith.constant 0 : i32
    %c0_i32_1 = arith.constant 0 : i32
    return %c0_i32, %c0_i32_0 : i32, i32
  }
  func.func @transform_7(%arg0: i32, %arg1: i32) -> (i32, i32) {
    %c0_i32 = arith.constant 0 : i32
    %c0_i32_0 = arith.constant 0 : i32
    return %arg0, %c0_i32 : i32, i32
  }
}

</mosaic_0001>

<llo_original>
// kernel: transformer_forward.11
$region0: #{transformer_forward.11}
  #allocation0 [shape = 'u32[]', space=smem, size = 0x4, offset = 0x4, fixed_abs, tag = 'smem constant byte address 0x4 - core index']
  #allocation1 [shape = 'u32[144,128]{1,0:T(1,128)}', space=vmem, size = 0x12000, scoped, tag = 'internal scratch']
  #allocation2 [shape = 'f32[8,32]{1,0:T(8,128)}', space=vmem, size = 0x1000, scoped, tag = 'scratch operand']
  %s0 = inlined_call_operand.vmem [shape: bf16[16,32], index: 0, kind: input, shape index: {}]
  %s1 = inlined_call_operand.vmem [shape: bf16[32,32], index: 1, kind: input, shape index: {}]
  %s2 = inlined_call_operand.vmem [shape: f32[1,32], index: 2, kind: input, shape index: {}]
  %s3 = inlined_call_operand.vmem [shape: bf16[16,32], index: 3, kind: output, shape index: {}]
  %s4 = sld [smem:[#allocation0]]
  $region53: #{transformer_forward.11} parent=0
    _
  %s6 = ssub.s32 1, %s4
  %s7 = scalar_select 0, %s6, %s4
  loop: start=0, step=1, limit=4
  $region2: #{transformer_forward.11} parent=0 // loop_pre_header
    _
  $region3: #{transformer_forward.11} parent=0 // loop_header
    %s9 = sphi 0, %s13
    %p10 = scmp.ge.s32.totalorder %s9, 4
    %s16 = sphi 0, %s35
    %s17 = sphi 0, %s31
    %s18 = sphi 0, %s27
    %s19 = sphi 0, %s16
    %s20 = sphi 0, %s17
    %s21 = sphi 0, %s18
    %s22 = sphi 0, %s19
    %s23 = sphi 0, %s20
    %s24 = sphi 0, %s21
    %s40 = sphi 0, %s42
    %s43 = sphi 0, %s40
    %s44 = sphi 0, %s43
    %s60 = sphi 0, %s44
    %s68 = sphi 0, %s70
    %s71 = sphi 0, %s68
    %s72 = sphi 0, %s71
    %s88 = sphi 0, %s72
    %s94 = sphi 0, %s96
    %s97 = sphi 0, %s94
    %s98 = sphi 0, %s97
    %s114 = sphi 0, %s98
    %s122 = sphi 0, %s124
    %s125 = sphi 0, %s122
    %s126 = sphi 0, %s125
    %s142 = sphi 0, %s126
  $region4: #{transformer_forward.11} parent=0 // loop_header_branch
    %12 = sbr.rel (%p10) target = $region8
  $region5: #{transformer_forward.11} parent=0 // loop_body
    %s14 = ssub.s32 %s9, 1
    %s15 = ssub.s32 %s9, 2
    %s25 = sadd.s32 1, %s18
    %p26 = scmp.ge.s32.totalorder %s25, 1
    %s27 = scalar_select %p26, 0, %s25
    %s28 = sadd.s32 1, %s17
    %s29 = scalar_select %p26, %s28, %s17
    %p30 = scmp.ge.s32.totalorder %s29, 1
    %s31 = scalar_select %p30, 0, %s29
    %s32 = sadd.s32 1, %s16
    %s33 = scalar_select %p30, %s32, %s16
    %p34 = scmp.ge.s32.totalorder %s33, 2
    %s35 = scalar_select %p34, 0, %s33
    %s36 = ssub.s32 %s16, %s35
    %s37 = ssub.s32 %s18, %s27
    %s38 = sor.u32 %s36, %s37
    %p39 = scmp.eq.s32.totalorder %s38, 0
    %s41 = sadd.s32 %s40, 1
    %s42 = scalar_select %p39, %s40, %s41
    %p45 = pneg %p39
    %p46 = scmp.eq.s32.totalorder %s9, 1
    %p47 = por %p45, %p46
    %p48 = scmp.ne.s32.totalorder %s40, %s43
    %p49 = scmp.eq.s32.totalorder %s9, 0
    %p50 = por %p48, %p49
    %p51 = scmp.ne.s32.totalorder %s40, %s43
    %p52 = scmp.eq.s32.totalorder %s14, 1
    %p53 = por %p51, %p52
    %p54 = scmp.ne.s32.totalorder %s43, %s44
    %p55 = scmp.eq.s32.totalorder %s14, 0
    %p56 = por %p54, %p55
    %p57 = scmp.ne.s32.totalorder %s43, %s44
    %p58 = scmp.eq.s32.totalorder %s15, 1
    %p59 = por %p57, %p58
    %p61 = scmp.ne.s32.totalorder %s44, %s60
    %p62 = scmp.eq.s32.totalorder %s15, 0
    %p63 = por %p61, %p62
    %s64 = ssub.s32 %s18, %s27
    %s65 = ssub.s32 %s17, %s31
    %s66 = sor.u32 %s64, %s65
    %p67 = scmp.eq.s32.totalorder %s66, 0
    %s69 = sadd.s32 %s68, 1
    %s70 = scalar_select %p67, %s68, %s69
    %p73 = pneg %p67
    %p74 = scmp.eq.s32.totalorder %s9, 1
    %p75 = por %p73, %p74
    %p76 = scmp.ne.s32.totalorder %s68, %s71
    %p77 = scmp.eq.s32.totalorder %s9, 0
    %p78 = por %p76, %p77
    %p79 = scmp.ne.s32.totalorder %s68, %s71
    %p80 = scmp.eq.s32.totalorder %s14, 1
    %p81 = por %p79, %p80
    %p82 = scmp.ne.s32.totalorder %s71, %s72
    %p83 = scmp.eq.s32.totalorder %s14, 0
    %p84 = por %p82, %p83
    %p85 = scmp.ne.s32.totalorder %s71, %s72
    %p86 = scmp.eq.s32.totalorder %s15, 1
    %p87 = por %p85, %p86
    %p89 = scmp.ne.s32.totalorder %s72, %s88
    %p90 = scmp.eq.s32.totalorder %s15, 0
    %p91 = por %p89, %p90
    %s92 = ssub.s32 %s17, %s31
    %p93 = scmp.eq.s32.totalorder %s92, 0
    %s95 = sadd.s32 %s94, 1
    %s96 = scalar_select %p93, %s94, %s95
    %p99 = pneg %p93
    %p100 = scmp.eq.s32.totalorder %s9, 1
    %p101 = por %p99, %p100
    %p102 = scmp.ne.s32.totalorder %s94, %s97
    %p103 = scmp.eq.s32.totalorder %s9, 0
    %p104 = por %p102, %p103
    %p105 = scmp.ne.s32.totalorder %s94, %s97
    %p106 = scmp.eq.s32.totalorder %s14, 1
    %p107 = por %p105, %p106
    %p108 = scmp.ne.s32.totalorder %s97, %s98
    %p109 = scmp.eq.s32.totalorder %s14, 0
    %p110 = por %p108, %p109
    %p111 = scmp.ne.s32.totalorder %s97, %s98
    %p112 = scmp.eq.s32.totalorder %s15, 1
    %p113 = por %p111, %p112
    %p115 = scmp.ne.s32.totalorder %s98, %s114
    %p116 = scmp.eq.s32.totalorder %s15, 0
    %p117 = por %p115, %p116
    %s118 = ssub.s32 %s16, %s35
    %s119 = ssub.s32 %s17, %s31
    %s120 = sor.u32 %s118, %s119
    %p121 = scmp.eq.s32.totalorder %s120, 0
    %s123 = sadd.s32 %s122, 1
    %s124 = scalar_select %p121, %s122, %s123
    %p127 = pneg %p121
    %p128 = scmp.eq.s32.totalorder %s9, 1
    %p129 = por %p127, %p128
    %p130 = scmp.ne.s32.totalorder %s122, %s125
    %p131 = scmp.eq.s32.totalorder %s9, 0
    %p132 = por %p130, %p131
    %p133 = scmp.ne.s32.totalorder %s122, %s125
    %p134 = scmp.eq.s32.totalorder %s14, 1
    %p135 = por %p133, %p134
    %p136 = scmp.ne.s32.totalorder %s125, %s126
    %p137 = scmp.eq.s32.totalorder %s14, 0
    %p138 = por %p136, %p137
    %p139 = scmp.ne.s32.totalorder %s125, %s126
    %p140 = scmp.eq.s32.totalorder %s15, 1
    %p141 = por %p139, %p140
    %p143 = scmp.ne.s32.totalorder %s126, %s142
    %p144 = scmp.eq.s32.totalorder %s15, 0
    %p145 = por %p143, %p144
    %p146 = scmp.le.s32.totalorder 1, %s9
    %p147 = scmp.lt.s32.totalorder %s9, 3
    %p148 = pnand %p146, %p147
    %p149 = pneg %p148
    // Predicated region
    $region9: #{transformer_forward.11} parent=5 // pred_check
      _
    $region10: #{transformer_forward.11} parent=5 // pred_check_branch
      %151 = sbr.rel (%p148) target = $region12
    $region11: #{transformer_forward.11} parent=5 // pred_region
      %s152 = ssub.s32 %s9, 1
      // Predicated region
      $region13: #{transformer_forward.11} parent=11 // pred_check
        %p153 = pneg %p84
      $region14: #{transformer_forward.11} parent=11 // pred_check_branch
        %155 = sbr.rel (%p153) target = $region16
      $region15: #{transformer_forward.11} parent=11 // pred_region
        %s156 = smul.u32 4, %s21
        %p157 = scmp.lt.s32.totalorder %s156, 3
        %s158 = scalar_select %p157, %s156, 3
        %p159 = scmp.lt.s32.totalorder %s20, 0
        %s160 = scalar_select %p159, %s20, 0
        %s161 = sadd.s32 %s160, %s158
        %s162 = smul.addr %s161, 4
        %s163 = scalar_lea.vmem %s1, %s162
        %s164 = smul.u32 4, %s21
      $region16: #{transformer_forward.11} parent=11 // pred_fallthru
        _
      // Predicated region
      $region17: #{transformer_forward.11} parent=11 // pred_check
        %p165 = pneg %p110
      $region18: #{transformer_forward.11} parent=11 // pred_check_branch
        %167 = sbr.rel (%p165) target = $region20
      $region19: #{transformer_forward.11} parent=11 // pred_region
        %p168 = scmp.lt.s32.totalorder %s20, 0
        %s169 = scalar_select %p168, %s20, 0
        %s170 = scalar_lea.vmem %s2, %s169
      $region20: #{transformer_forward.11} parent=11 // pred_fallthru
        _
    $region12: #{transformer_forward.11} parent=5 // pred_fallthru
      _
    %p171 = scmp.lt.s32.totalorder %s9, 2
    // Predicated region
    $region21: #{transformer_forward.11} parent=5 // pred_check
      %p172 = pneg %p171
    $region22: #{transformer_forward.11} parent=5 // pred_check_branch
      %174 = sbr.rel (%p172) target = $region24
    $region23: #{transformer_forward.11} parent=5 // pred_region
      // Predicated region
      $region25: #{transformer_forward.11} parent=23 // pred_check
        %p175 = pneg %p50
      $region26: #{transformer_forward.11} parent=23 // pred_check_branch
        %177 = sbr.rel (%p175) target = $region28
      $region27: #{transformer_forward.11} parent=23 // pred_region
        %p178 = scmp.lt.s32.totalorder %s16, 1
        %s179 = scalar_select %p178, %s16, 1
        %p180 = scmp.lt.s32.totalorder %s18, 0
        %s181 = scalar_select %p180, %s18, 0
        %s182 = sadd.s32 %s181, %s179
        %s183 = smul.addr %s182, 4
        %s184 = scalar_lea.vmem %s0, %s183
      $region28: #{transformer_forward.11} parent=23 // pred_fallthru
        _
    $region24: #{transformer_forward.11} parent=5 // pred_fallthru
      _
    %p185 = scmp.le.s32.totalorder 1, %s9
    %p186 = scmp.lt.s32.totalorder %s9, 3
    %p187 = pnand %p185, %p186
    %p188 = pneg %p187
    // Predicated region
    $region29: #{transformer_forward.11} parent=5 // pred_check
      _
    $region30: #{transformer_forward.11} parent=5 // pred_check_branch
      %190 = sbr.rel (%p187) target = $region32
    $region31: #{transformer_forward.11} parent=5 // pred_region
      %s191 = ssub.s32 %s9, 1
      %p192 = scmp.lt.s32.totalorder %s19, 1
      %s193 = scalar_select %p192, %s19, 1
      %p194 = scmp.lt.s32.totalorder %s21, 0
      %s195 = scalar_select %p194, %s21, 0
      %s196 = sadd.s32 %s195, %s193
      %s197 = smul.addr %s196, 4
      %s198 = scalar_lea.vmem %s0, %s197
      %p199 = pneg %p56
      %p200 = pneg %p53
      %s201 = smul.u32 4, %s21
      %p202 = scmp.lt.s32.totalorder %s201, 3
      %s203 = scalar_select %p202, %s201, 3
      %p204 = scmp.lt.s32.totalorder %s20, 0
      %s205 = scalar_select %p204, %s20, 0
      %s206 = sadd.s32 %s205, %s203
      %s207 = smul.addr %s206, 4
      %s208 = scalar_lea.vmem %s1, %s207
      %p209 = pneg %p84
      %p210 = pneg %p81
      %p211 = scmp.lt.s32.totalorder %s20, 0
      %s212 = scalar_select %p211, %s20, 0
      %s213 = scalar_lea.vmem %s2, %s212
      %p214 = pneg %p110
      %p215 = pneg %p107
      %p216 = pneg %p138
      %p217 = pneg %p135
      %p218 = scmp.lt.s32.totalorder %s19, 1
      %s219 = scalar_select %p218, %s19, 1
      %p220 = scmp.lt.s32.totalorder %s20, 0
      %s221 = scalar_select %p220, %s20, 0
      %s222 = sadd.s32 %s221, %s219
      %s223 = smul.addr %s222, 4
      %s224 = scalar_lea.vmem %s3, %s223
      %p225 = scmp.lt.s32.totalorder %s19, 1
      %s226 = scalar_select %p225, %s19, 1
      %p227 = scmp.lt.s32.totalorder %s21, 0
      %s228 = scalar_select %p227, %s21, 0
      %s229 = sadd.s32 %s228, %s226
      %s230 = smul.addr %s229, 4
      %s231 = scalar_lea.vmem %s0, %s230
      %s232 = smul.u32 4, %s21
      %p233 = scmp.lt.s32.totalorder %s232, 3
      %s234 = scalar_select %p233, %s232, 3
      %p235 = scmp.lt.s32.totalorder %s20, 0
      %s236 = scalar_select %p235, %s20, 0
      %s237 = sadd.s32 %s236, %s234
      %s238 = smul.addr %s237, 4
      %s239 = scalar_lea.vmem %s1, %s238
      %s240 = smul.u32 4, %s21
      %p241 = scmp.lt.s32.totalorder %s20, 0
      %s242 = scalar_select %p241, %s20, 0
      %s243 = scalar_lea.vmem %s2, %s242
      %p244 = scmp.lt.s32.totalorder %s19, 1
      %s245 = scalar_select %p244, %s19, 1
      %p246 = scmp.lt.s32.totalorder %s20, 0
      %s247 = scalar_select %p246, %s20, 0
      %s248 = sadd.s32 %s247, %s245
      %s249 = smul.addr %s248, 4
      %s250 = scalar_lea.vmem %s3, %s249
      %p252 = scmp.eq.s32.totalorder %s21, 0
      // Predicated region
      $region33: #{transformer_forward.11} parent=31 // pred_check
        %p253 = pneg %p252
      $region34: #{transformer_forward.11} parent=31 // pred_check_branch
        %255 = sbr.rel (%p253) target = $region36
      $region35: #{transformer_forward.11} parent=31 // pred_region
        %vm256 = vcmask 261120
        %257 = vst.msk [vmem:[#allocation2] sm:$0xff] %vm256, 0.0
      $region36: #{transformer_forward.11} parent=31 // pred_fallthru
        _
      %v258 = vld [vmem:[#allocation2] sm:$0xff]
      %v259 = vld [vmem:[%s231] sm:$0xf]
      %v260 = vld [vmem:[%s239] sm:$0xf]
      %v261 = vld [vmem:[%s239 + $0x4] sm:$0xf]
      %v262 = vld [vmem:[%s239 + $0x8] sm:$0xf]
      %v263 = vld [vmem:[%s239 + $0xc] sm:$0xf]
      %v268 = vunpack.c.l.b16 %v260
      %v269 = vunpack.c.l.b16 %v261
      %v270 = vunpack.c.l.b16 %v262
      %v271 = vunpack.c.l.b16 %v263
      %v272 = vpack.c.b16 %v269, %v268
      %v273 = vpack.c.b16 %v271, %v270
      %vm276 = vcmask 261120
      %v278 = vsel %vm276, %v259, 0
      %280 = vmatprep.subr.bf16.mxu0 0
      %281 = vmatpush1.bf16.msra.mxu0 %v272
      %282 = vmatprep.subr.bf16.mxu0 0
      %283 = vmatpush1.bf16.msra.mxu0 %v273
      %284 = vmatprep.subr.bf16.mxu0 0
      %285 = vmatpush1.bf16.msra.mxu0 0
      %286 = vmatprep.subr.bf16.mxu0 0
      %287 = vmatpush1.bf16.msra.mxu0 0
      %288 = vmatprep.subr.bf16.mxu0 0
      %289 = vmatpush1.bf16.msra.mxu0 0
      %290 = vmatprep.subr.bf16.mxu0 0
      %291 = vmatpush1.bf16.msra.mxu0 0
      %292 = vmatprep.subr.bf16.mxu0 0
      %293 = vmatpush1.bf16.msra.mxu0 0
      %294 = vmatprep.subr.bf16.mxu0 0
      %295 = vmatpush1.bf16.msra.mxu0 0
      %296 = vmatprep.subr.bf16.mxu0 0
      %297 = vmatpush1.bf16.msra.mxu0 0
      %298 = vmatprep.subr.bf16.mxu0 0
      %299 = vmatpush1.bf16.msra.mxu0 0
      %300 = vmatprep.subr.bf16.mxu0 0
      %301 = vmatpush1.bf16.msra.mxu0 0
      %302 = vmatprep.subr.bf16.mxu0 0
      %303 = vmatpush1.bf16.msra.mxu0 0
      %304 = vmatprep.subr.bf16.mxu0 0
      %305 = vmatpush1.bf16.msra.mxu0 0
      %306 = vmatprep.subr.bf16.mxu0 0
      %307 = vmatpush1.bf16.msra.mxu0 0
      %308 = vmatprep.subr.bf16.mxu0 0
      %309 = vmatpush1.bf16.msra.mxu0 0
      %310 = vmatprep.subr.bf16.mxu0 0
      %311 = vmatpush1.bf16.msra.mxu0 0
      %312 = vmatprep.mubr.bf16.mxu0 0
      %313 = vmatmul.mubr.bf16.gmra.mrb[0].mxu0 %v278
      %v314 = vpop.f32.mrb[0].mxu0
      %v315 = vadd.f32 0.0, %v314
      %v316 = vpop.f32.mrb[0].mxu0
      %v317 = vpop.f32.mrb[0].mxu0
      %v318 = vpop.f32.mrb[0].mxu0
      %319 = vdwg.mxu0
      %v320 = vadd.f32 %v258, %v315
      %321 = vst.msk [vmem:[#allocation2] sm:$0xff] %vm276, %v320
      // Predicated region
      $region37: #{transformer_forward.11} parent=31 // pred_check
        %p322 = pneg %p252
      $region38: #{transformer_forward.11} parent=31 // pred_check_branch
        %324 = sbr.rel (%p322) target = $region40
      $region39: #{transformer_forward.11} parent=31 // pred_region
        %v325 = vld [vmem:[#allocation2] sm:$0xff]
        %v326 = vld [vmem:[%s243] sm:$0x1]
        %v328 = vlaneseq
        %v329 = vshrl.u32 %v328, 7
        %v330 = vsub.s32 0, %v329
        %v331 = vrot.slane %v326, %v330
        %v333 = vadd.f32 %v325, %v331
        %v334 = vpack.c.bf16 %v333, %v333
        %vm335 = vcmask 257024
        %336 = vst.msk [vmem:[%s250] sm:$0xf] %vm335, %v334
      $region40: #{transformer_forward.11} parent=31 // pred_fallthru
        _
      %p337 = scmp.lt.s32.totalorder %s19, 1
      %s338 = scalar_select %p337, %s19, 1
      %p339 = scmp.lt.s32.totalorder %s20, 0
      %s340 = scalar_select %p339, %s20, 0
      %s341 = sadd.s32 %s340, %s338
      %s342 = smul.addr %s341, 4
      %s343 = scalar_lea.vmem %s3, %s342
      // Predicated region
      $region41: #{transformer_forward.11} parent=31 // pred_check
        %p344 = pneg %p135
      $region42: #{transformer_forward.11} parent=31 // pred_check_branch
        %346 = sbr.rel (%p344) target = $region44
      $region43: #{transformer_forward.11} parent=31 // pred_region
        _
      $region44: #{transformer_forward.11} parent=31 // pred_fallthru
        _
    $region32: #{transformer_forward.11} parent=5 // pred_fallthru
      _
    %p347 = scmp.le.s32.totalorder 2, %s9
    // Predicated region
    $region45: #{transformer_forward.11} parent=5 // pred_check
      %p348 = pneg %p347
    $region46: #{transformer_forward.11} parent=5 // pred_check_branch
      %350 = sbr.rel (%p348) target = $region48
    $region47: #{transformer_forward.11} parent=5 // pred_region
      %s351 = ssub.s32 %s9, 2
      // Predicated region
      $region49: #{transformer_forward.11} parent=47 // pred_check
        %p352 = pneg %p141
      $region50: #{transformer_forward.11} parent=47 // pred_check_branch
        %354 = sbr.rel (%p352) target = $region52
      $region51: #{transformer_forward.11} parent=47 // pred_region
        %p355 = scmp.lt.s32.totalorder %s22, 1
        %s356 = scalar_select %p355, %s22, 1
        %p357 = scmp.lt.s32.totalorder %s23, 0
        %s358 = scalar_select %p357, %s23, 0
        %s359 = sadd.s32 %s358, %s356
        %s360 = smul.addr %s359, 4
        %s361 = scalar_lea.vmem %s3, %s360
      $region52: #{transformer_forward.11} parent=47 // pred_fallthru
        _
    $region48: #{transformer_forward.11} parent=5 // pred_fallthru
      _
  $region6: #{transformer_forward.11} parent=0 // loop_footer
    %s13 = sadd.s32 1, %s9
  $region7: #{transformer_forward.11} parent=0 // loop_footer_branch
    %8 = sbr.rel target = $region3
  $region8: #{transformer_forward.11} parent=0 // loop_exit
    _

// kernel: transformer_forward.12
$region0: #{transformer_forward.12}
  #allocation0 [shape = 'u32[]', space=smem, size = 0x4, offset = 0x4, fixed_abs, tag = 'smem constant byte address 0x4 - core index']
  #allocation1 [shape = 'u32[144,128]{1,0:T(1,128)}', space=vmem, size = 0x12000, scoped, tag = 'internal scratch']
  #allocation2 [shape = 'f32[8,96]{1,0:T(8,128)}', space=vmem, size = 0x1000, scoped, tag = 'scratch operand']
  %s0 = inlined_call_operand.vmem [shape: bf16[16,32], index: 0, kind: input, shape index: {}]
  %s1 = inlined_call_operand.vmem [shape: bf16[32,96], index: 1, kind: input, shape index: {}]
  %s2 = inlined_call_operand.vmem [shape: f32[1,96], index: 2, kind: input, shape index: {}]
  %s3 = inlined_call_operand.vmem [shape: bf16[16,96], index: 3, kind: output, shape index: {}]
  %s4 = sld [smem:[#allocation0]]
  $region53: #{transformer_forward.12} parent=0
    _
  %s6 = ssub.s32 1, %s4
  %s7 = scalar_select 0, %s6, %s4
  loop: start=0, step=1, limit=4
  $region2: #{transformer_forward.12} parent=0 // loop_pre_header
    _
  $region3: #{transformer_forward.12} parent=0 // loop_header
    %s9 = sphi 0, %s13
    %p10 = scmp.ge.s32.totalorder %s9, 4
    %s16 = sphi 0, %s35
    %s17 = sphi 0, %s31
    %s18 = sphi 0, %s27
    %s19 = sphi 0, %s16
    %s20 = sphi 0, %s17
    %s21 = sphi 0, %s18
    %s22 = sphi 0, %s19
    %s23 = sphi 0, %s20
    %s24 = sphi 0, %s21
    %s40 = sphi 0, %s42
    %s43 = sphi 0, %s40
    %s44 = sphi 0, %s43
    %s60 = sphi 0, %s44
    %s68 = sphi 0, %s70
    %s71 = sphi 0, %s68
    %s72 = sphi 0, %s71
    %s88 = sphi 0, %s72
    %s94 = sphi 0, %s96
    %s97 = sphi 0, %s94
    %s98 = sphi 0, %s97
    %s114 = sphi 0, %s98
    %s122 = sphi 0, %s124
    %s125 = sphi 0, %s122
    %s126 = sphi 0, %s125
    %s142 = sphi 0, %s126
  $region4: #{transformer_forward.12} parent=0 // loop_header_branch
    %12 = sbr.rel (%p10) target = $region8
  $region5: #{transformer_forward.12} parent=0 // loop_body
    %s14 = ssub.s32 %s9, 1
    %s15 = ssub.s32 %s9, 2
    %s25 = sadd.s32 1, %s18
    %p26 = scmp.ge.s32.totalorder %s25, 1
    %s27 = scalar_select %p26, 0, %s25
    %s28 = sadd.s32 1, %s17
    %s29 = scalar_select %p26, %s28, %s17
    %p30 = scmp.ge.s32.totalorder %s29, 1
    %s31 = scalar_select %p30, 0, %s29
    %s32 = sadd.s32 1, %s16
    %s33 = scalar_select %p30, %s32, %s16
    %p34 = scmp.ge.s32.totalorder %s33, 2
    %s35 = scalar_select %p34, 0, %s33
    %s36 = ssub.s32 %s16, %s35
    %s37 = ssub.s32 %s18, %s27
    %s38 = sor.u32 %s36, %s37
    %p39 = scmp.eq.s32.totalorder %s38, 0
    %s41 = sadd.s32 %s40, 1
    %s42 = scalar_select %p39, %s40, %s41
    %p45 = pneg %p39
    %p46 = scmp.eq.s32.totalorder %s9, 1
    %p47 = por %p45, %p46
    %p48 = scmp.ne.s32.totalorder %s40, %s43
    %p49 = scmp.eq.s32.totalorder %s9, 0
    %p50 = por %p48, %p49
    %p51 = scmp.ne.s32.totalorder %s40, %s43
    %p52 = scmp.eq.s32.totalorder %s14, 1
    %p53 = por %p51, %p52
    %p54 = scmp.ne.s32.totalorder %s43, %s44
    %p55 = scmp.eq.s32.totalorder %s14, 0
    %p56 = por %p54, %p55
    %p57 = scmp.ne.s32.totalorder %s43, %s44
    %p58 = scmp.eq.s32.totalorder %s15, 1
    %p59 = por %p57, %p58
    %p61 = scmp.ne.s32.totalorder %s44, %s60
    %p62 = scmp.eq.s32.totalorder %s15, 0
    %p63 = por %p61, %p62
    %s64 = ssub.s32 %s18, %s27
    %s65 = ssub.s32 %s17, %s31
    %s66 = sor.u32 %s64, %s65
    %p67 = scmp.eq.s32.totalorder %s66, 0
    %s69 = sadd.s32 %s68, 1
    %s70 = scalar_select %p67, %s68, %s69
    %p73 = pneg %p67
    %p74 = scmp.eq.s32.totalorder %s9, 1
    %p75 = por %p73, %p74
    %p76 = scmp.ne.s32.totalorder %s68, %s71
    %p77 = scmp.eq.s32.totalorder %s9, 0
    %p78 = por %p76, %p77
    %p79 = scmp.ne.s32.totalorder %s68, %s71
    %p80 = scmp.eq.s32.totalorder %s14, 1
    %p81 = por %p79, %p80
    %p82 = scmp.ne.s32.totalorder %s71, %s72
    %p83 = scmp.eq.s32.totalorder %s14, 0
    %p84 = por %p82, %p83
    %p85 = scmp.ne.s32.totalorder %s71, %s72
    %p86 = scmp.eq.s32.totalorder %s15, 1
    %p87 = por %p85, %p86
    %p89 = scmp.ne.s32.totalorder %s72, %s88
    %p90 = scmp.eq.s32.totalorder %s15, 0
    %p91 = por %p89, %p90
    %s92 = ssub.s32 %s17, %s31
    %p93 = scmp.eq.s32.totalorder %s92, 0
    %s95 = sadd.s32 %s94, 1
    %s96 = scalar_select %p93, %s94, %s95
    %p99 = pneg %p93
    %p100 = scmp.eq.s32.totalorder %s9, 1
    %p101 = por %p99, %p100
    %p102 = scmp.ne.s32.totalorder %s94, %s97
    %p103 = scmp.eq.s32.totalorder %s9, 0
    %p104 = por %p102, %p103
    %p105 = scmp.ne.s32.totalorder %s94, %s97
    %p106 = scmp.eq.s32.totalorder %s14, 1
    %p107 = por %p105, %p106
    %p108 = scmp.ne.s32.totalorder %s97, %s98
    %p109 = scmp.eq.s32.totalorder %s14, 0
    %p110 = por %p108, %p109
    %p111 = scmp.ne.s32.totalorder %s97, %s98
    %p112 = scmp.eq.s32.totalorder %s15, 1
    %p113 = por %p111, %p112
    %p115 = scmp.ne.s32.totalorder %s98, %s114
    %p116 = scmp.eq.s32.totalorder %s15, 0
    %p117 = por %p115, %p116
    %s118 = ssub.s32 %s16, %s35
    %s119 = ssub.s32 %s17, %s31
    %s120 = sor.u32 %s118, %s119
    %p121 = scmp.eq.s32.totalorder %s120, 0
    %s123 = sadd.s32 %s122, 1
    %s124 = scalar_select %p121, %s122, %s123
    %p127 = pneg %p121
    %p128 = scmp.eq.s32.totalorder %s9, 1
    %p129 = por %p127, %p128
    %p130 = scmp.ne.s32.totalorder %s122, %s125
    %p131 = scmp.eq.s32.totalorder %s9, 0
    %p132 = por %p130, %p131
    %p133 = scmp.ne.s32.totalorder %s122, %s125
    %p134 = scmp.eq.s32.totalorder %s14, 1
    %p135 = por %p133, %p134
    %p136 = scmp.ne.s32.totalorder %s125, %s126
    %p137 = scmp.eq.s32.totalorder %s14, 0
    %p138 = por %p136, %p137
    %p139 = scmp.ne.s32.totalorder %s125, %s126
    %p140 = scmp.eq.s32.totalorder %s15, 1
    %p141 = por %p139, %p140
    %p143 = scmp.ne.s32.totalorder %s126, %s142
    %p144 = scmp.eq.s32.totalorder %s15, 0
    %p145 = por %p143, %p144
    %p146 = scmp.le.s32.totalorder 1, %s9
    %p147 = scmp.lt.s32.totalorder %s9, 3
    %p148 = pnand %p146, %p147
    %p149 = pneg %p148
    // Predicated region
    $region9: #{transformer_forward.12} parent=5 // pred_check
      _
    $region10: #{transformer_forward.12} parent=5 // pred_check_branch
      %151 = sbr.rel (%p148) target = $region12
    $region11: #{transformer_forward.12} parent=5 // pred_region
      %s152 = ssub.s32 %s9, 1
      // Predicated region
      $region13: #{transformer_forward.12} parent=11 // pred_check
        %p153 = pneg %p84
      $region14: #{transformer_forward.12} parent=11 // pred_check_branch
        %155 = sbr.rel (%p153) target = $region16
      $region15: #{transformer_forward.12} parent=11 // pred_region
        %s156 = smul.u32 4, %s21
        %p157 = scmp.lt.s32.totalorder %s156, 3
        %s158 = scalar_select %p157, %s156, 3
        %p159 = scmp.lt.s32.totalorder %s20, 0
        %s160 = scalar_select %p159, %s20, 0
        %s161 = sadd.s32 %s160, %s158
        %s162 = smul.addr %s161, 4
        %s163 = scalar_lea.vmem %s1, %s162
        %s164 = smul.u32 4, %s21
      $region16: #{transformer_forward.12} parent=11 // pred_fallthru
        _
      // Predicated region
      $region17: #{transformer_forward.12} parent=11 // pred_check
        %p165 = pneg %p110
      $region18: #{transformer_forward.12} parent=11 // pred_check_branch
        %167 = sbr.rel (%p165) target = $region20
      $region19: #{transformer_forward.12} parent=11 // pred_region
        %p168 = scmp.lt.s32.totalorder %s20, 0
        %s169 = scalar_select %p168, %s20, 0
        %s170 = scalar_lea.vmem %s2, %s169
      $region20: #{transformer_forward.12} parent=11 // pred_fallthru
        _
    $region12: #{transformer_forward.12} parent=5 // pred_fallthru
      _
    %p171 = scmp.lt.s32.totalorder %s9, 2
    // Predicated region
    $region21: #{transformer_forward.12} parent=5 // pred_check
      %p172 = pneg %p171
    $region22: #{transformer_forward.12} parent=5 // pred_check_branch
      %174 = sbr.rel (%p172) target = $region24
    $region23: #{transformer_forward.12} parent=5 // pred_region
      // Predicated region
      $region25: #{transformer_forward.12} parent=23 // pred_check
        %p175 = pneg %p50
      $region26: #{transformer_forward.12} parent=23 // pred_check_branch
        %177 = sbr.rel (%p175) target = $region28
      $region27: #{transformer_forward.12} parent=23 // pred_region
        %p178 = scmp.lt.s32.totalorder %s16, 1
        %s179 = scalar_select %p178, %s16, 1
        %p180 = scmp.lt.s32.totalorder %s18, 0
        %s181 = scalar_select %p180, %s18, 0
        %s182 = sadd.s32 %s181, %s179
        %s183 = smul.addr %s182, 4
        %s184 = scalar_lea.vmem %s0, %s183
      $region28: #{transformer_forward.12} parent=23 // pred_fallthru
        _
    $region24: #{transformer_forward.12} parent=5 // pred_fallthru
      _
    %p185 = scmp.le.s32.totalorder 1, %s9
    %p186 = scmp.lt.s32.totalorder %s9, 3
    %p187 = pnand %p185, %p186
    %p188 = pneg %p187
    // Predicated region
    $region29: #{transformer_forward.12} parent=5 // pred_check
      _
    $region30: #{transformer_forward.12} parent=5 // pred_check_branch
      %190 = sbr.rel (%p187) target = $region32
    $region31: #{transformer_forward.12} parent=5 // pred_region
      %s191 = ssub.s32 %s9, 1
      %p192 = scmp.lt.s32.totalorder %s19, 1
      %s193 = scalar_select %p192, %s19, 1
      %p194 = scmp.lt.s32.totalorder %s21, 0
      %s195 = scalar_select %p194, %s21, 0
      %s196 = sadd.s32 %s195, %s193
      %s197 = smul.addr %s196, 4
      %s198 = scalar_lea.vmem %s0, %s197
      %p199 = pneg %p56
      %p200 = pneg %p53
      %s201 = smul.u32 4, %s21
      %p202 = scmp.lt.s32.totalorder %s201, 3
      %s203 = scalar_select %p202, %s201, 3
      %p204 = scmp.lt.s32.totalorder %s20, 0
      %s205 = scalar_select %p204, %s20, 0
      %s206 = sadd.s32 %s205, %s203
      %s207 = smul.addr %s206, 4
      %s208 = scalar_lea.vmem %s1, %s207
      %p209 = pneg %p84
      %p210 = pneg %p81
      %p211 = scmp.lt.s32.totalorder %s20, 0
      %s212 = scalar_select %p211, %s20, 0
      %s213 = scalar_lea.vmem %s2, %s212
      %p214 = pneg %p110
      %p215 = pneg %p107
      %p216 = pneg %p138
      %p217 = pneg %p135
      %p218 = scmp.lt.s32.totalorder %s19, 1
      %s219 = scalar_select %p218, %s19, 1
      %p220 = scmp.lt.s32.totalorder %s20, 0
      %s221 = scalar_select %p220, %s20, 0
      %s222 = sadd.s32 %s221, %s219
      %s223 = smul.addr %s222, 4
      %s224 = scalar_lea.vmem %s3, %s223
      %p225 = scmp.lt.s32.totalorder %s19, 1
      %s226 = scalar_select %p225, %s19, 1
      %p227 = scmp.lt.s32.totalorder %s21, 0
      %s228 = scalar_select %p227, %s21, 0
      %s229 = sadd.s32 %s228, %s226
      %s230 = smul.addr %s229, 4
      %s231 = scalar_lea.vmem %s0, %s230
      %s232 = smul.u32 4, %s21
      %p233 = scmp.lt.s32.totalorder %s232, 3
      %s234 = scalar_select %p233, %s232, 3
      %p235 = scmp.lt.s32.totalorder %s20, 0
      %s236 = scalar_select %p235, %s20, 0
      %s237 = sadd.s32 %s236, %s234
      %s238 = smul.addr %s237, 4
      %s239 = scalar_lea.vmem %s1, %s238
      %s240 = smul.u32 4, %s21
      %p241 = scmp.lt.s32.totalorder %s20, 0
      %s242 = scalar_select %p241, %s20, 0
      %s243 = scalar_lea.vmem %s2, %s242
      %p244 = scmp.lt.s32.totalorder %s19, 1
      %s245 = scalar_select %p244, %s19, 1
      %p246 = scmp.lt.s32.totalorder %s20, 0
      %s247 = scalar_select %p246, %s20, 0
      %s248 = sadd.s32 %s247, %s245
      %s249 = smul.addr %s248, 4
      %s250 = scalar_lea.vmem %s3, %s249
      %p252 = scmp.eq.s32.totalorder %s21, 0
      // Predicated region
      $region33: #{transformer_forward.12} parent=31 // pred_check
        %p253 = pneg %p252
      $region34: #{transformer_forward.12} parent=31 // pred_check_branch
        %255 = sbr.rel (%p253) target = $region36
      $region35: #{transformer_forward.12} parent=31 // pred_region
        %vm256 = vcmask 785408
        %257 = vst.msk [vmem:[#allocation2] sm:$0xff] %vm256, 0.0
      $region36: #{transformer_forward.12} parent=31 // pred_fallthru
        _
      %v258 = vld [vmem:[#allocation2] sm:$0xff]
      %v259 = vld [vmem:[%s231] sm:$0xf]
      %v260 = vld [vmem:[%s239] sm:$0xf]
      %v261 = vld [vmem:[%s239 + $0x4] sm:$0xf]
      %v262 = vld [vmem:[%s239 + $0x8] sm:$0xf]
      %v263 = vld [vmem:[%s239 + $0xc] sm:$0xf]
      %v268 = vunpack.c.l.b16 %v260
      %v269 = vunpack.c.l.b16 %v261
      %v270 = vunpack.c.l.b16 %v262
      %v271 = vunpack.c.l.b16 %v263
      %v272 = vpack.c.b16 %v269, %v268
      %v273 = vpack.c.b16 %v271, %v270
      %vm276 = vcmask 261120
      %v278 = vsel %vm276, %v259, 0
      %280 = vmatprep.subr.bf16.mxu0 0
      %281 = vmatpush1.bf16.msra.mxu0 %v272
      %282 = vmatprep.subr.bf16.mxu0 0
      %283 = vmatpush1.bf16.msra.mxu0 %v273
      %284 = vmatprep.subr.bf16.mxu0 0
      %285 = vmatpush1.bf16.msra.mxu0 0
      %286 = vmatprep.subr.bf16.mxu0 0
      %287 = vmatpush1.bf16.msra.mxu0 0
      %288 = vmatprep.subr.bf16.mxu0 0
      %289 = vmatpush1.bf16.msra.mxu0 0
      %290 = vmatprep.subr.bf16.mxu0 0
      %291 = vmatpush1.bf16.msra.mxu0 0
      %292 = vmatprep.subr.bf16.mxu0 0
      %293 = vmatpush1.bf16.msra.mxu0 0
      %294 = vmatprep.subr.bf16.mxu0 0
      %295 = vmatpush1.bf16.msra.mxu0 0
      %296 = vmatprep.subr.bf16.mxu0 0
      %297 = vmatpush1.bf16.msra.mxu0 0
      %298 = vmatprep.subr.bf16.mxu0 0
      %299 = vmatpush1.bf16.msra.mxu0 0
      %300 = vmatprep.subr.bf16.mxu0 0
      %301 = vmatpush1.bf16.msra.mxu0 0
      %302 = vmatprep.subr.bf16.mxu0 0
      %303 = vmatpush1.bf16.msra.mxu0 0
      %304 = vmatprep.subr.bf16.mxu0 0
      %305 = vmatpush1.bf16.msra.mxu0 0
      %306 = vmatprep.subr.bf16.mxu0 0
      %307 = vmatpush1.bf16.msra.mxu0 0
      %308 = vmatprep.subr.bf16.mxu0 0
      %309 = vmatpush1.bf16.msra.mxu0 0
      %310 = vmatprep.subr.bf16.mxu0 0
      %311 = vmatpush1.bf16.msra.mxu0 0
      %312 = vmatprep.mubr.bf16.mxu0 0
      %313 = vmatmul.mubr.bf16.gmra.mrb[0].mxu0 %v278
      %v314 = vpop.f32.mrb[0].mxu0
      %v315 = vadd.f32 0.0, %v314
      %v316 = vpop.f32.mrb[0].mxu0
      %v317 = vpop.f32.mrb[0].mxu0
      %v318 = vpop.f32.mrb[0].mxu0
      %319 = vdwg.mxu0
      %v320 = vadd.f32 %v258, %v315
      %vm321 = vcmask 785408
      %322 = vst.msk [vmem:[#allocation2] sm:$0xff] %vm321, %v320
      // Predicated region
      $region37: #{transformer_forward.12} parent=31 // pred_check
        %p323 = pneg %p252
      $region38: #{transformer_forward.12} parent=31 // pred_check_branch
        %325 = sbr.rel (%p323) target = $region40
      $region39: #{transformer_forward.12} parent=31 // pred_region
        %v326 = vld [vmem:[#allocation2] sm:$0xff]
        %v327 = vld [vmem:[%s243] sm:$0x1]
        %v329 = vlaneseq
        %v330 = vshrl.u32 %v329, 7
        %v331 = vsub.s32 0, %v330
        %v332 = vrot.slane %v327, %v331
        %v334 = vadd.f32 %v326, %v332
        %v335 = vpack.c.bf16 %v334, %v334
        %vm336 = vcmask 781312
        %337 = vst.msk [vmem:[%s250] sm:$0xf] %vm336, %v335
      $region40: #{transformer_forward.12} parent=31 // pred_fallthru
        _
      %p338 = scmp.lt.s32.totalorder %s19, 1
      %s339 = scalar_select %p338, %s19, 1
      %p340 = scmp.lt.s32.totalorder %s20, 0
      %s341 = scalar_select %p340, %s20, 0
      %s342 = sadd.s32 %s341, %s339
      %s343 = smul.addr %s342, 4
      %s344 = scalar_lea.vmem %s3, %s343
      // Predicated region
      $region41: #{transformer_forward.12} parent=31 // pred_check
        %p345 = pneg %p135
      $region42: #{transformer_forward.12} parent=31 // pred_check_branch
        %347 = sbr.rel (%p345) target = $region44
      $region43: #{transformer_forward.12} parent=31 // pred_region
        _
      $region44: #{transformer_forward.12} parent=31 // pred_fallthru
        _
    $region32: #{transformer_forward.12} parent=5 // pred_fallthru
      _
    %p348 = scmp.le.s32.totalorder 2, %s9
    // Predicated region
    $region45: #{transformer_forward.12} parent=5 // pred_check
      %p349 = pneg %p348
    $region46: #{transformer_forward.12} parent=5 // pred_check_branch
      %351 = sbr.rel (%p349) target = $region48
    $region47: #{transformer_forward.12} parent=5 // pred_region
      %s352 = ssub.s32 %s9, 2
      // Predicated region
      $region49: #{transformer_forward.12} parent=47 // pred_check
        %p353 = pneg %p141
      $region50: #{transformer_forward.12} parent=47 // pred_check_branch
        %355 = sbr.rel (%p353) target = $region52
      $region51: #{transformer_forward.12} parent=47 // pred_region
        %p356 = scmp.lt.s32.totalorder %s22, 1
        %s357 = scalar_select %p356, %s22, 1
        %p358 = scmp.lt.s32.totalorder %s23, 0
        %s359 = scalar_select %p358, %s23, 0
        %s360 = sadd.s32 %s359, %s357
        %s361 = smul.addr %s360, 4
        %s362 = scalar_lea.vmem %s3, %s361
      $region52: #{transformer_forward.12} parent=47 // pred_fallthru
        _
    $region48: #{transformer_forward.12} parent=5 // pred_fallthru
      _
  $region6: #{transformer_forward.12} parent=0 // loop_footer
    %s13 = sadd.s32 1, %s9
  $region7: #{transformer_forward.12} parent=0 // loop_footer_branch
    %8 = sbr.rel target = $region3
  $region8: #{transformer_forward.12} parent=0 // loop_exit
    _

// kernel: transformer_forward.14
$region0: #{transformer_forward.14}
  #allocation0 [shape = 'u32[]', space=smem, size = 0x4, offset = 0x4, fixed_abs, tag = 'smem constant byte address 0x4 - core index']
  #allocation1 [shape = 'u32[144,128]{1,0:T(1,128)}', space=vmem, size = 0x12000, scoped, tag = 'internal scratch']
  #allocation2 [shape = 'f32[8,32]{1,0:T(8,128)}', space=vmem, size = 0x1000, scoped, tag = 'scratch operand']
  %s0 = inlined_call_operand.vmem [shape: bf16[16,32], index: 0, kind: input, shape index: {}]
  %s1 = inlined_call_operand.vmem [shape: bf16[32,32], index: 1, kind: input, shape index: {}]
  %s2 = inlined_call_operand.vmem [shape: f32[1,32], index: 2, kind: input, shape index: {}]
  %s3 = inlined_call_operand.vmem [shape: bf16[16,32], index: 3, kind: input, shape index: {}]
  %s4 = inlined_call_operand.vmem [shape: f32[1,32], index: 4, kind: input, shape index: {}]
  %s5 = inlined_call_operand.vmem [shape: f32[1,32], index: 5, kind: input, shape index: {}]
  %s6 = inlined_call_operand.vmem [shape: bf16[16,32], index: 6, kind: output, shape index: {}]
  %s7 = sld [smem:[#allocation0]]
  $region65: #{transformer_forward.14} parent=0
    _
  %s9 = ssub.s32 1, %s7
  %s10 = scalar_select 0, %s9, %s7
  loop: start=0, step=1, limit=4
  $region2: #{transformer_forward.14} parent=0 // loop_pre_header
    _
  $region3: #{transformer_forward.14} parent=0 // loop_header
    %s12 = sphi 0, %s16
    %p13 = scmp.ge.s32.totalorder %s12, 4
    %s19 = sphi 0, %s31
    %s20 = sphi 0, %s27
    %s21 = sphi 0, %s19
    %s22 = sphi 0, %s20
    %s23 = sphi 0, %s21
    %s24 = sphi 0, %s22
    %s36 = sphi 0, %s38
    %s39 = sphi 0, %s36
    %s40 = sphi 0, %s39
    %s56 = sphi 0, %s40
    %s62 = sphi 0, %s64
    %s65 = sphi 0, %s62
    %s66 = sphi 0, %s65
    %s82 = sphi 0, %s66
    %s86 = sphi 0, %s86
    %s88 = sphi 0, %s86
    %s89 = sphi 0, %s88
    %s103 = sphi 0, %s89
    %s109 = sphi 0, %s111
    %s112 = sphi 0, %s109
    %s113 = sphi 0, %s112
    %s129 = sphi 0, %s113
    %s133 = sphi 0, %s133
    %s135 = sphi 0, %s133
    %s136 = sphi 0, %s135
    %s150 = sphi 0, %s136
    %s154 = sphi 0, %s154
    %s156 = sphi 0, %s154
    %s157 = sphi 0, %s156
    %s171 = sphi 0, %s157
    %s177 = sphi 0, %s179
    %s180 = sphi 0, %s177
    %s181 = sphi 0, %s180
    %s197 = sphi 0, %s181
  $region4: #{transformer_forward.14} parent=0 // loop_header_branch
    %15 = sbr.rel (%p13) target = $region8
  $region5: #{transformer_forward.14} parent=0 // loop_body
    %s17 = ssub.s32 %s12, 1
    %s18 = ssub.s32 %s12, 2
    %s25 = sadd.s32 1, %s20
    %p26 = scmp.ge.s32.totalorder %s25, 1
    %s27 = scalar_select %p26, 0, %s25
    %s28 = sadd.s32 1, %s19
    %s29 = scalar_select %p26, %s28, %s19
    %p30 = scmp.ge.s32.totalorder %s29, 2
    %s31 = scalar_select %p30, 0, %s29
    %s32 = ssub.s32 %s19, %s31
    %s33 = ssub.s32 %s20, %s27
    %s34 = sor.u32 %s32, %s33
    %p35 = scmp.eq.s32.totalorder %s34, 0
    %s37 = sadd.s32 %s36, 1
    %s38 = scalar_select %p35, %s36, %s37
    %p41 = pneg %p35
    %p42 = scmp.eq.s32.totalorder %s12, 1
    %p43 = por %p41, %p42
    %p44 = scmp.ne.s32.totalorder %s36, %s39
    %p45 = scmp.eq.s32.totalorder %s12, 0
    %p46 = por %p44, %p45
    %p47 = scmp.ne.s32.totalorder %s36, %s39
    %p48 = scmp.eq.s32.totalorder %s17, 1
    %p49 = por %p47, %p48
    %p50 = scmp.ne.s32.totalorder %s39, %s40
    %p51 = scmp.eq.s32.totalorder %s17, 0
    %p52 = por %p50, %p51
    %p53 = scmp.ne.s32.totalorder %s39, %s40
    %p54 = scmp.eq.s32.totalorder %s18, 1
    %p55 = por %p53, %p54
    %p57 = scmp.ne.s32.totalorder %s40, %s56
    %p58 = scmp.eq.s32.totalorder %s18, 0
    %p59 = por %p57, %p58
    %s60 = ssub.s32 %s20, %s27
    %p61 = scmp.eq.s32.totalorder %s60, 0
    %s63 = sadd.s32 %s62, 1
    %s64 = scalar_select %p61, %s62, %s63
    %p67 = pneg %p61
    %p68 = scmp.eq.s32.totalorder %s12, 1
    %p69 = por %p67, %p68
    %p70 = scmp.ne.s32.totalorder %s62, %s65
    %p71 = scmp.eq.s32.totalorder %s12, 0
    %p72 = por %p70, %p71
    %p73 = scmp.ne.s32.totalorder %s62, %s65
    %p74 = scmp.eq.s32.totalorder %s17, 1
    %p75 = por %p73, %p74
    %p76 = scmp.ne.s32.totalorder %s65, %s66
    %p77 = scmp.eq.s32.totalorder %s17, 0
    %p78 = por %p76, %p77
    %p79 = scmp.ne.s32.totalorder %s65, %s66
    %p80 = scmp.eq.s32.totalorder %s18, 1
    %p81 = por %p79, %p80
    %p83 = scmp.ne.s32.totalorder %s66, %s82
    %p84 = scmp.eq.s32.totalorder %s18, 0
    %p85 = por %p83, %p84
    %s87 = sadd.s32 %s86, 1
    %p90 = scmp.eq.s32.totalorder %s12, 1
    %p91 = scmp.ne.s32.totalorder %s86, %s88
    %p92 = scmp.eq.s32.totalorder %s12, 0
    %p93 = por %p91, %p92
    %p94 = scmp.ne.s32.totalorder %s86, %s88
    %p95 = scmp.eq.s32.totalorder %s17, 1
    %p96 = por %p94, %p95
    %p97 = scmp.ne.s32.totalorder %s88, %s89
    %p98 = scmp.eq.s32.totalorder %s17, 0
    %p99 = por %p97, %p98
    %p100 = scmp.ne.s32.totalorder %s88, %s89
    %p101 = scmp.eq.s32.totalorder %s18, 1
    %p102 = por %p100, %p101
    %p104 = scmp.ne.s32.totalorder %s89, %s103
    %p105 = scmp.eq.s32.totalorder %s18, 0
    %p106 = por %p104, %p105
    %s107 = ssub.s32 %s19, %s31
    %p108 = scmp.eq.s32.totalorder %s107, 0
    %s110 = sadd.s32 %s109, 1
    %s111 = scalar_select %p108, %s109, %s110
    %p114 = pneg %p108
    %p115 = scmp.eq.s32.totalorder %s12, 1
    %p116 = por %p114, %p115
    %p117 = scmp.ne.s32.totalorder %s109, %s112
    %p118 = scmp.eq.s32.totalorder %s12, 0
    %p119 = por %p117, %p118
    %p120 = scmp.ne.s32.totalorder %s109, %s112
    %p121 = scmp.eq.s32.totalorder %s17, 1
    %p122 = por %p120, %p121
    %p123 = scmp.ne.s32.totalorder %s112, %s113
    %p124 = scmp.eq.s32.totalorder %s17, 0
    %p125 = por %p123, %p124
    %p126 = scmp.ne.s32.totalorder %s112, %s113
    %p127 = scmp.eq.s32.totalorder %s18, 1
    %p128 = por %p126, %p127
    %p130 = scmp.ne.s32.totalorder %s113, %s129
    %p131 = scmp.eq.s32.totalorder %s18, 0
    %p132 = por %p130, %p131
    %s134 = sadd.s32 %s133, 1
    %p137 = scmp.eq.s32.totalorder %s12, 1
    %p138 = scmp.ne.s32.totalorder %s133, %s135
    %p139 = scmp.eq.s32.totalorder %s12, 0
    %p140 = por %p138, %p139
    %p141 = scmp.ne.s32.totalorder %s133, %s135
    %p142 = scmp.eq.s32.totalorder %s17, 1
    %p143 = por %p141, %p142
    %p144 = scmp.ne.s32.totalorder %s135, %s136
    %p145 = scmp.eq.s32.totalorder %s17, 0
    %p146 = por %p144, %p145
    %p147 = scmp.ne.s32.totalorder %s135, %s136
    %p148 = scmp.eq.s32.totalorder %s18, 1
    %p149 = por %p147, %p148
    %p151 = scmp.ne.s32.totalorder %s136, %s150
    %p152 = scmp.eq.s32.totalorder %s18, 0
    %p153 = por %p151, %p152
    %s155 = sadd.s32 %s154, 1
    %p158 = scmp.eq.s32.totalorder %s12, 1
    %p159 = scmp.ne.s32.totalorder %s154, %s156
    %p160 = scmp.eq.s32.totalorder %s12, 0
    %p161 = por %p159, %p160
    %p162 = scmp.ne.s32.totalorder %s154, %s156
    %p163 = scmp.eq.s32.totalorder %s17, 1
    %p164 = por %p162, %p163
    %p165 = scmp.ne.s32.totalorder %s156, %s157
    %p166 = scmp.eq.s32.totalorder %s17, 0
    %p167 = por %p165, %p166
    %p168 = scmp.ne.s32.totalorder %s156, %s157
    %p169 = scmp.eq.s32.totalorder %s18, 1
    %p170 = por %p168, %p169
    %p172 = scmp.ne.s32.totalorder %s157, %s171
    %p173 = scmp.eq.s32.totalorder %s18, 0
    %p174 = por %p172, %p173
    %s175 = ssub.s32 %s19, %s31
    %p176 = scmp.eq.s32.totalorder %s175, 0
    %s178 = sadd.s32 %s177, 1
    %s179 = scalar_select %p176, %s177, %s178
    %p182 = pneg %p176
    %p183 = scmp.eq.s32.totalorder %s12, 1
    %p184 = por %p182, %p183
    %p185 = scmp.ne.s32.totalorder %s177, %s180
    %p186 = scmp.eq.s32.totalorder %s12, 0
    %p187 = por %p185, %p186
    %p188 = scmp.ne.s32.totalorder %s177, %s180
    %p189 = scmp.eq.s32.totalorder %s17, 1
    %p190 = por %p188, %p189
    %p191 = scmp.ne.s32.totalorder %s180, %s181
    %p192 = scmp.eq.s32.totalorder %s17, 0
    %p193 = por %p191, %p192
    %p194 = scmp.ne.s32.totalorder %s180, %s181
    %p195 = scmp.eq.s32.totalorder %s18, 1
    %p196 = por %p194, %p195
    %p198 = scmp.ne.s32.totalorder %s181, %s197
    %p199 = scmp.eq.s32.totalorder %s18, 0
    %p200 = por %p198, %p199
    %p201 = scmp.le.s32.totalorder 1, %s12
    %p202 = scmp.lt.s32.totalorder %s12, 3
    %p203 = pnand %p201, %p202
    %p204 = pneg %p203
    // Predicated region
    $region9: #{transformer_forward.14} parent=5 // pred_check
      _
    $region10: #{transformer_forward.14} parent=5 // pred_check_branch
      %206 = sbr.rel (%p203) target = $region12
    $region11: #{transformer_forward.14} parent=5 // pred_region
      %s207 = ssub.s32 %s12, 1
      // Predicated region
      $region13: #{transformer_forward.14} parent=11 // pred_check
        %p208 = pneg %p78
      $region14: #{transformer_forward.14} parent=11 // pred_check_branch
        %210 = sbr.rel (%p208) target = $region16
      $region15: #{transformer_forward.14} parent=11 // pred_region
        %s211 = smul.u32 4, %s22
        %p212 = scmp.lt.s32.totalorder %s211, 3
        %s213 = scalar_select %p212, %s211, 3
        %s214 = smul.addr %s213, 4
        %s215 = scalar_lea.vmem %s1, %s214
        %s216 = smul.u32 4, %s22
      $region16: #{transformer_forward.14} parent=11 // pred_fallthru
        _
      // Predicated region
      $region17: #{transformer_forward.14} parent=11 // pred_check
        %p217 = pneg %p99
      $region18: #{transformer_forward.14} parent=11 // pred_check_branch
        %219 = sbr.rel (%p217) target = $region20
      $region19: #{transformer_forward.14} parent=11 // pred_region
        _
      $region20: #{transformer_forward.14} parent=11 // pred_fallthru
        _
      // Predicated region
      $region21: #{transformer_forward.14} parent=11 // pred_check
        %p220 = pneg %p146
      $region22: #{transformer_forward.14} parent=11 // pred_check_branch
        %222 = sbr.rel (%p220) target = $region24
      $region23: #{transformer_forward.14} parent=11 // pred_region
        _
      $region24: #{transformer_forward.14} parent=11 // pred_fallthru
        _
      // Predicated region
      $region25: #{transformer_forward.14} parent=11 // pred_check
        %p223 = pneg %p167
      $region26: #{transformer_forward.14} parent=11 // pred_check_branch
        %225 = sbr.rel (%p223) target = $region28
      $region27: #{transformer_forward.14} parent=11 // pred_region
        _
      $region28: #{transformer_forward.14} parent=11 // pred_fallthru
        _
    $region12: #{transformer_forward.14} parent=5 // pred_fallthru
      _
    %p226 = scmp.lt.s32.totalorder %s12, 2
    // Predicated region
    $region29: #{transformer_forward.14} parent=5 // pred_check
      %p227 = pneg %p226
    $region30: #{transformer_forward.14} parent=5 // pred_check_branch
      %229 = sbr.rel (%p227) target = $region32
    $region31: #{transformer_forward.14} parent=5 // pred_region
      // Predicated region
      $region33: #{transformer_forward.14} parent=31 // pred_check
        %p230 = pneg %p46
      $region34: #{transformer_forward.14} parent=31 // pred_check_branch
        %232 = sbr.rel (%p230) target = $region36
      $region35: #{transformer_forward.14} parent=31 // pred_region
        %p233 = scmp.lt.s32.totalorder %s19, 1
        %s234 = scalar_select %p233, %s19, 1
        %p235 = scmp.lt.s32.totalorder %s20, 0
        %s236 = scalar_select %p235, %s20, 0
        %s237 = sadd.s32 %s236, %s234
        %s238 = smul.addr %s237, 4
        %s239 = scalar_lea.vmem %s0, %s238
      $region36: #{transformer_forward.14} parent=31 // pred_fallthru
        _
      // Predicated region
      $region37: #{transformer_forward.14} parent=31 // pred_check
        %p240 = pneg %p119
      $region38: #{transformer_forward.14} parent=31 // pred_check_branch
        %242 = sbr.rel (%p240) target = $region40
      $region39: #{transformer_forward.14} parent=31 // pred_region
        %p243 = scmp.lt.s32.totalorder %s19, 1
        %s244 = scalar_select %p243, %s19, 1
        %s245 = smul.addr %s244, 4
        %s246 = scalar_lea.vmem %s3, %s245
      $region40: #{transformer_forward.14} parent=31 // pred_fallthru
        _
    $region32: #{transformer_forward.14} parent=5 // pred_fallthru
      _
    %p247 = scmp.le.s32.totalorder 1, %s12
    %p248 = scmp.lt.s32.totalorder %s12, 3
    %p249 = pnand %p247, %p248
    %p250 = pneg %p249
    // Predicated region
    $region41: #{transformer_forward.14} parent=5 // pred_check
      _
    $region42: #{transformer_forward.14} parent=5 // pred_check_branch
      %252 = sbr.rel (%p249) target = $region44
    $region43: #{transformer_forward.14} parent=5 // pred_region
      %s253 = ssub.s32 %s12, 1
      %p254 = scmp.lt.s32.totalorder %s21, 1
      %s255 = scalar_select %p254, %s21, 1
      %p256 = scmp.lt.s32.totalorder %s22, 0
      %s257 = scalar_select %p256, %s22, 0
      %s258 = sadd.s32 %s257, %s255
      %s259 = smul.addr %s258, 4
      %s260 = scalar_lea.vmem %s0, %s259
      %p261 = pneg %p52
      %p262 = pneg %p49
      %s263 = smul.u32 4, %s22
      %p264 = scmp.lt.s32.totalorder %s263, 3
      %s265 = scalar_select %p264, %s263, 3
      %s266 = smul.addr %s265, 4
      %s267 = scalar_lea.vmem %s1, %s266
      %p268 = pneg %p78
      %p269 = pneg %p75
      %p270 = pneg %p99
      %p271 = pneg %p96
      %p272 = scmp.lt.s32.totalorder %s21, 1
      %s273 = scalar_select %p272, %s21, 1
      %s274 = smul.addr %s273, 4
      %s275 = scalar_lea.vmem %s3, %s274
      %p276 = pneg %p125
      %p277 = pneg %p122
      %p278 = pneg %p146
      %p279 = pneg %p143
      %p280 = pneg %p167
      %p281 = pneg %p164
      %p282 = pneg %p193
      %p283 = pneg %p190
      %p284 = scmp.lt.s32.totalorder %s21, 1
      %s285 = scalar_select %p284, %s21, 1
      %s286 = smul.addr %s285, 4
      %s287 = scalar_lea.vmem %s6, %s286
      %p288 = scmp.lt.s32.totalorder %s21, 1
      %s289 = scalar_select %p288, %s21, 1
      %p290 = scmp.lt.s32.totalorder %s22, 0
      %s291 = scalar_select %p290, %s22, 0
      %s292 = sadd.s32 %s291, %s289
      %s293 = smul.addr %s292, 4
      %s294 = scalar_lea.vmem %s0, %s293
      %s295 = smul.u32 4, %s22
      %p296 = scmp.lt.s32.totalorder %s295, 3
      %s297 = scalar_select %p296, %s295, 3
      %s298 = smul.addr %s297, 4
      %s299 = scalar_lea.vmem %s1, %s298
      %s300 = smul.u32 4, %s22
      %p301 = scmp.lt.s32.totalorder %s21, 1
      %s302 = scalar_select %p301, %s21, 1
      %s303 = smul.addr %s302, 4
      %s304 = scalar_lea.vmem %s3, %s303
      %p305 = scmp.lt.s32.totalorder %s21, 1
      %s306 = scalar_select %p305, %s21, 1
      %s307 = smul.addr %s306, 4
      %s308 = scalar_lea.vmem %s6, %s307
      %p310 = scmp.eq.s32.totalorder %s22, 0
      // Predicated region
      $region45: #{transformer_forward.14} parent=43 // pred_check
        %p311 = pneg %p310
      $region46: #{transformer_forward.14} parent=43 // pred_check_branch
        %313 = sbr.rel (%p311) target = $region48
      $region47: #{transformer_forward.14} parent=43 // pred_region
        %vm314 = vcmask 261120
        %315 = vst.msk [vmem:[#allocation2] sm:$0xff] %vm314, 0.0
      $region48: #{transformer_forward.14} parent=43 // pred_fallthru
        _
      %v316 = vld [vmem:[#allocation2] sm:$0xff]
      %v317 = vld [vmem:[%s294] sm:$0xf]
      %v318 = vld [vmem:[%s299] sm:$0xf]
      %v319 = vld [vmem:[%s299 + $0x4] sm:$0xf]
      %v320 = vld [vmem:[%s299 + $0x8] sm:$0xf]
      %v321 = vld [vmem:[%s299 + $0xc] sm:$0xf]
      %v326 = vunpack.c.l.b16 %v318
      %v327 = vunpack.c.l.b16 %v319
      %v328 = vunpack.c.l.b16 %v320
      %v329 = vunpack.c.l.b16 %v321
      %v330 = vpack.c.b16 %v327, %v326
      %v331 = vpack.c.b16 %v329, %v328
      %vm334 = vcmask 261120
      %v336 = vsel %vm334, %v317, 0
      %338 = vmatprep.subr.bf16.mxu0 0
      %339 = vmatpush1.bf16.msra.mxu0 %v330
      %340 = vmatprep.subr.bf16.mxu0 0
      %341 = vmatpush1.bf16.msra.mxu0 %v331
      %342 = vmatprep.subr.bf16.mxu0 0
      %343 = vmatpush1.bf16.msra.mxu0 0
      %344 = vmatprep.subr.bf16.mxu0 0
      %345 = vmatpush1.bf16.msra.mxu0 0
      %346 = vmatprep.subr.bf16.mxu0 0
      %347 = vmatpush1.bf16.msra.mxu0 0
      %348 = vmatprep.subr.bf16.mxu0 0
      %349 = vmatpush1.bf16.msra.mxu0 0
      %350 = vmatprep.subr.bf16.mxu0 0
      %351 = vmatpush1.bf16.msra.mxu0 0
      %352 = vmatprep.subr.bf16.mxu0 0
      %353 = vmatpush1.bf16.msra.mxu0 0
      %354 = vmatprep.subr.bf16.mxu0 0
      %355 = vmatpush1.bf16.msra.mxu0 0
      %356 = vmatprep.subr.bf16.mxu0 0
      %357 = vmatpush1.bf16.msra.mxu0 0
      %358 = vmatprep.subr.bf16.mxu0 0
      %359 = vmatpush1.bf16.msra.mxu0 0
      %360 = vmatprep.subr.bf16.mxu0 0
      %361 = vmatpush1.bf16.msra.mxu0 0
      %362 = vmatprep.subr.bf16.mxu0 0
      %363 = vmatpush1.bf16.msra.mxu0 0
      %364 = vmatprep.subr.bf16.mxu0 0
      %365 = vmatpush1.bf16.msra.mxu0 0
      %366 = vmatprep.subr.bf16.mxu0 0
      %367 = vmatpush1.bf16.msra.mxu0 0
      %368 = vmatprep.subr.bf16.mxu0 0
      %369 = vmatpush1.bf16.msra.mxu0 0
      %370 = vmatprep.mubr.bf16.mxu0 0
      %371 = vmatmul.mubr.bf16.gmra.mrb[0].mxu0 %v336
      %v372 = vpop.f32.mrb[0].mxu0
      %v373 = vadd.f32 0.0, %v372
      %v374 = vpop.f32.mrb[0].mxu0
      %v375 = vpop.f32.mrb[0].mxu0
      %v376 = vpop.f32.mrb[0].mxu0
      %377 = vdwg.mxu0
      %v378 = vadd.f32 %v316, %v373
      %379 = vst.msk [vmem:[#allocation2] sm:$0xff] %vm334, %v378
      // Predicated region
      $region49: #{transformer_forward.14} parent=43 // pred_check
        %p380 = pneg %p310
      $region50: #{transformer_forward.14} parent=43 // pred_check_branch
        %382 = sbr.rel (%p380) target = $region52
      $region51: #{transformer_forward.14} parent=43 // pred_region
        %v383 = vld [vmem:[#allocation2] sm:$0xff]
        %v384 = vld [vmem:[%s2] sm:$0x1]
        %v386 = vlaneseq
        %v387 = vshrl.u32 %v386, 7
        %v388 = vsub.s32 0, %v387
        %v389 = vrot.slane %v384, %v388
        %v391 = vadd.f32 %v383, %v389
        %v392 = vld [vmem:[%s304] sm:$0xf]
        %v393 = vunpack.c.l.bf16 %v392
        %v394 = vadd.f32 %v391, %v393
        %v395 = vsel %vm334, %v394, 0.0
        %396 = vadd.xlane.f32.xlu0 %v395
        %v397 = vpop.xlane.xlu0 %396
        %v398 = vrcp.pop 32.0
        %v399 = vmul.f32 %v397, %v398
        %v400 = vsub.f32 %v394, %v399
        %v401 = vmul.f32 %v400, %v400
        %v402 = vsel %vm334, %v401, 0.0
        %403 = vadd.xlane.f32.xlu0 %v402
        %v404 = vpop.xlane.xlu0 %403
        %v405 = vmul.f32 %v404, %v398
        %v406 = vadd.f32 %v405, 1e-05
        %v407 = vrsqrt.pop %v406
        %v408 = vmul.f32 %v400, %v407
        %v409 = vld [vmem:[%s4] sm:$0x1]
        %v411 = vlaneseq
        %v412 = vshrl.u32 %v411, 7
        %v413 = vsub.s32 0, %v412
        %v414 = vrot.slane %v409, %v413
        %v416 = vmul.f32 %v408, %v414
        %v417 = vld [vmem:[%s5] sm:$0x1]
        %v419 = vlaneseq
        %v420 = vshrl.u32 %v419, 7
        %v421 = vsub.s32 0, %v420
        %v422 = vrot.slane %v417, %v421
        %v424 = vadd.f32 %v416, %v422
        %v425 = vpack.c.bf16 %v424, %v424
        %vm426 = vcmask 257024
        %427 = vst.msk [vmem:[%s308] sm:$0xf] %vm426, %v425
      $region52: #{transformer_forward.14} parent=43 // pred_fallthru
        _
      %p428 = scmp.lt.s32.totalorder %s21, 1
      %s429 = scalar_select %p428, %s21, 1
      %s430 = smul.addr %s429, 4
      %s431 = scalar_lea.vmem %s6, %s430
      // Predicated region
      $region53: #{transformer_forward.14} parent=43 // pred_check
        %p432 = pneg %p190
      $region54: #{transformer_forward.14} parent=43 // pred_check_branch
        %434 = sbr.rel (%p432) target = $region56
      $region55: #{transformer_forward.14} parent=43 // pred_region
        _
      $region56: #{transformer_forward.14} parent=43 // pred_fallthru
        _
    $region44: #{transformer_forward.14} parent=5 // pred_fallthru
      _
    %p435 = scmp.le.s32.totalorder 2, %s12
    // Predicated region
    $region57: #{transformer_forward.14} parent=5 // pred_check
      %p436 = pneg %p435
    $region58: #{transformer_forward.14} parent=5 // pred_check_branch
      %438 = sbr.rel (%p436) target = $region60
    $region59: #{transformer_forward.14} parent=5 // pred_region
      %s439 = ssub.s32 %s12, 2
      // Predicated region
      $region61: #{transformer_forward.14} parent=59 // pred_check
        %p440 = pneg %p196
      $region62: #{transformer_forward.14} parent=59 // pred_check_branch
        %442 = sbr.rel (%p440) target = $region64
      $region63: #{transformer_forward.14} parent=59 // pred_region
        %p443 = scmp.lt.s32.totalorder %s23, 1
        %s444 = scalar_select %p443, %s23, 1
        %s445 = smul.addr %s444, 4
        %s446 = scalar_lea.vmem %s6, %s445
      $region64: #{transformer_forward.14} parent=59 // pred_fallthru
        _
    $region60: #{transformer_forward.14} parent=5 // pred_fallthru
      _
  $region6: #{transformer_forward.14} parent=0 // loop_footer
    %s16 = sadd.s32 1, %s12
  $region7: #{transformer_forward.14} parent=0 // loop_footer_branch
    %11 = sbr.rel target = $region3
  $region8: #{transformer_forward.14} parent=0 // loop_exit
    _

// kernel: transformer_forward.13
$region0: #{transformer_forward.13}
  #allocation0 [shape = 'u32[]', space=smem, size = 0x4, offset = 0x4, fixed_abs, tag = 'smem constant byte address 0x4 - core index']
  #allocation1 [shape = 'u32[144,128]{1,0:T(1,128)}', space=vmem, size = 0x12000, scoped, tag = 'internal scratch']
  %s0 = inlined_call_operand.vmem [shape: bf16[2,8,96], index: 0, kind: input, shape index: {}]
  %s1 = inlined_call_operand.vmem [shape: f32[2,1,8], index: 1, kind: input, shape index: {}]
  %s2 = inlined_call_operand.vmem [shape: bf16[2,8,32], index: 2, kind: output, shape index: {}]
  %s3 = sld [smem:[#allocation0]]
  $region41: #{transformer_forward.13} parent=0
    _
  %s5 = ssub.s32 1, %s3
  %s6 = scalar_select 0, %s5, %s3
  loop: start=0, step=1, limit=4
  $region2: #{transformer_forward.13} parent=0 // loop_pre_header
    _
  $region3: #{transformer_forward.13} parent=0 // loop_header
    %s8 = sphi 0, %s12
    %p9 = scmp.ge.s32.totalorder %s8, 4
    %s15 = sphi 0, %s27
    %s16 = sphi 0, %s23
    %s17 = sphi 0, %s15
    %s18 = sphi 0, %s16
    %s19 = sphi 0, %s17
    %s20 = sphi 0, %s18
    %s30 = sphi 0, %s32
    %s33 = sphi 0, %s30
    %s34 = sphi 0, %s33
    %s50 = sphi 0, %s34
    %s56 = sphi 0, %s58
    %s59 = sphi 0, %s56
    %s60 = sphi 0, %s59
    %s76 = sphi 0, %s60
    %s84 = sphi 0, %s86
    %s87 = sphi 0, %s84
    %s88 = sphi 0, %s87
    %s104 = sphi 0, %s88
  $region4: #{transformer_forward.13} parent=0 // loop_header_branch
    %11 = sbr.rel (%p9) target = $region8
  $region5: #{transformer_forward.13} parent=0 // loop_body
    %s13 = ssub.s32 %s8, 1
    %s14 = ssub.s32 %s8, 2
    %s21 = sadd.s32 1, %s16
    %p22 = scmp.ge.s32.totalorder %s21, 1
    %s23 = scalar_select %p22, 0, %s21
    %s24 = sadd.s32 1, %s15
    %s25 = scalar_select %p22, %s24, %s15
    %p26 = scmp.ge.s32.totalorder %s25, 2
    %s27 = scalar_select %p26, 0, %s25
    %s28 = ssub.s32 %s15, %s27
    %p29 = scmp.eq.s32.totalorder %s28, 0
    %s31 = sadd.s32 %s30, 1
    %s32 = scalar_select %p29, %s30, %s31
    %p35 = pneg %p29
    %p36 = scmp.eq.s32.totalorder %s8, 1
    %p37 = por %p35, %p36
    %p38 = scmp.ne.s32.totalorder %s30, %s33
    %p39 = scmp.eq.s32.totalorder %s8, 0
    %p40 = por %p38, %p39
    %p41 = scmp.ne.s32.totalorder %s30, %s33
    %p42 = scmp.eq.s32.totalorder %s13, 1
    %p43 = por %p41, %p42
    %p44 = scmp.ne.s32.totalorder %s33, %s34
    %p45 = scmp.eq.s32.totalorder %s13, 0
    %p46 = por %p44, %p45
    %p47 = scmp.ne.s32.totalorder %s33, %s34
    %p48 = scmp.eq.s32.totalorder %s14, 1
    %p49 = por %p47, %p48
    %p51 = scmp.ne.s32.totalorder %s34, %s50
    %p52 = scmp.eq.s32.totalorder %s14, 0
    %p53 = por %p51, %p52
    %s54 = ssub.s32 %s15, %s27
    %p55 = scmp.eq.s32.totalorder %s54, 0
    %s57 = sadd.s32 %s56, 1
    %s58 = scalar_select %p55, %s56, %s57
    %p61 = pneg %p55
    %p62 = scmp.eq.s32.totalorder %s8, 1
    %p63 = por %p61, %p62
    %p64 = scmp.ne.s32.totalorder %s56, %s59
    %p65 = scmp.eq.s32.totalorder %s8, 0
    %p66 = por %p64, %p65
    %p67 = scmp.ne.s32.totalorder %s56, %s59
    %p68 = scmp.eq.s32.totalorder %s13, 1
    %p69 = por %p67, %p68
    %p70 = scmp.ne.s32.totalorder %s59, %s60
    %p71 = scmp.eq.s32.totalorder %s13, 0
    %p72 = por %p70, %p71
    %p73 = scmp.ne.s32.totalorder %s59, %s60
    %p74 = scmp.eq.s32.totalorder %s14, 1
    %p75 = por %p73, %p74
    %p77 = scmp.ne.s32.totalorder %s60, %s76
    %p78 = scmp.eq.s32.totalorder %s14, 0
    %p79 = por %p77, %p78
    %s80 = ssub.s32 %s15, %s27
    %s81 = ssub.s32 %s16, %s23
    %s82 = sor.u32 %s80, %s81
    %p83 = scmp.eq.s32.totalorder %s82, 0
    %s85 = sadd.s32 %s84, 1
    %s86 = scalar_select %p83, %s84, %s85
    %p89 = pneg %p83
    %p90 = scmp.eq.s32.totalorder %s8, 1
    %p91 = por %p89, %p90
    %p92 = scmp.ne.s32.totalorder %s84, %s87
    %p93 = scmp.eq.s32.totalorder %s8, 0
    %p94 = por %p92, %p93
    %p95 = scmp.ne.s32.totalorder %s84, %s87
    %p96 = scmp.eq.s32.totalorder %s13, 1
    %p97 = por %p95, %p96
    %p98 = scmp.ne.s32.totalorder %s87, %s88
    %p99 = scmp.eq.s32.totalorder %s13, 0
    %p100 = por %p98, %p99
    %p101 = scmp.ne.s32.totalorder %s87, %s88
    %p102 = scmp.eq.s32.totalorder %s14, 1
    %p103 = por %p101, %p102
    %p105 = scmp.ne.s32.totalorder %s88, %s104
    %p106 = scmp.eq.s32.totalorder %s14, 0
    %p107 = por %p105, %p106
    %p108 = scmp.le.s32.totalorder 1, %s8
    %p109 = scmp.lt.s32.totalorder %s8, 3
    %p110 = pnand %p108, %p109
    %p111 = pneg %p110
    // Predicated region
    $region9: #{transformer_forward.13} parent=5 // pred_check
      _
    $region10: #{transformer_forward.13} parent=5 // pred_check_branch
      %113 = sbr.rel (%p110) target = $region12
    $region11: #{transformer_forward.13} parent=5 // pred_region
      %s114 = ssub.s32 %s8, 1
    $region12: #{transformer_forward.13} parent=5 // pred_fallthru
      _
    %p115 = scmp.lt.s32.totalorder %s8, 2
    // Predicated region
    $region13: #{transformer_forward.13} parent=5 // pred_check
      %p116 = pneg %p115
    $region14: #{transformer_forward.13} parent=5 // pred_check_branch
      %118 = sbr.rel (%p116) target = $region16
    $region15: #{transformer_forward.13} parent=5 // pred_region
      // Predicated region
      $region17: #{transformer_forward.13} parent=15 // pred_check
        %p119 = pneg %p40
      $region18: #{transformer_forward.13} parent=15 // pred_check_branch
        %121 = sbr.rel (%p119) target = $region20
      $region19: #{transformer_forward.13} parent=15 // pred_region
        %p122 = scmp.lt.s32.totalorder %s15, 1
        %s123 = scalar_select %p122, %s15, 1
        %s124 = smul.addr %s123, 4
        %s125 = scalar_lea.vmem %s0, %s124
      $region20: #{transformer_forward.13} parent=15 // pred_fallthru
        _
      // Predicated region
      $region21: #{transformer_forward.13} parent=15 // pred_check
        %p126 = pneg %p66
      $region22: #{transformer_forward.13} parent=15 // pred_check_branch
        %128 = sbr.rel (%p126) target = $region24
      $region23: #{transformer_forward.13} parent=15 // pred_region
        %p129 = scmp.lt.s32.totalorder %s15, 1
        %s130 = scalar_select %p129, %s15, 1
        %s131 = scalar_lea.vmem %s1, %s130
      $region24: #{transformer_forward.13} parent=15 // pred_fallthru
        _
    $region16: #{transformer_forward.13} parent=5 // pred_fallthru
      _
    %p132 = scmp.le.s32.totalorder 1, %s8
    %p133 = scmp.lt.s32.totalorder %s8, 3
    %p134 = pnand %p132, %p133
    %p135 = pneg %p134
    // Predicated region
    $region25: #{transformer_forward.13} parent=5 // pred_check
      _
    $region26: #{transformer_forward.13} parent=5 // pred_check_branch
      %137 = sbr.rel (%p134) target = $region28
    $region27: #{transformer_forward.13} parent=5 // pred_region
      %s138 = ssub.s32 %s8, 1
      %p139 = scmp.lt.s32.totalorder %s17, 1
      %s140 = scalar_select %p139, %s17, 1
      %s141 = smul.addr %s140, 4
      %s142 = scalar_lea.vmem %s0, %s141
      %p143 = pneg %p46
      %p144 = pneg %p43
      %p145 = scmp.lt.s32.totalorder %s17, 1
      %s146 = scalar_select %p145, %s17, 1
      %s147 = scalar_lea.vmem %s1, %s146
      %p148 = pneg %p72
      %p149 = pneg %p69
      %p150 = pneg %p100
      %p151 = pneg %p97
      %p152 = scmp.lt.s32.totalorder %s17, 1
      %s153 = scalar_select %p152, %s17, 1
      %p154 = scmp.lt.s32.totalorder %s18, 0
      %s155 = scalar_select %p154, %s18, 0
      %s156 = sadd.s32 %s155, %s153
      %s157 = smul.addr %s156, 4
      %s158 = scalar_lea.vmem %s2, %s157
      %p159 = scmp.lt.s32.totalorder %s17, 1
      %s160 = scalar_select %p159, %s17, 1
      %s161 = smul.addr %s160, 4
      %s162 = scalar_lea.vmem %s0, %s161
      %p163 = scmp.lt.s32.totalorder %s17, 1
      %s164 = scalar_select %p163, %s17, 1
      %s165 = scalar_lea.vmem %s1, %s164
      %p166 = scmp.lt.s32.totalorder %s17, 1
      %s167 = scalar_select %p166, %s17, 1
      %p168 = scmp.lt.s32.totalorder %s18, 0
      %s169 = scalar_select %p168, %s18, 0
      %s170 = sadd.s32 %s169, %s167
      %s171 = smul.addr %s170, 4
      %s172 = scalar_lea.vmem %s2, %s171
      %s174 = smul.u32 %s18, 8
      %v175 = vld [vmem:[%s165] sm:$0x1]
      %s176 = sshra.s32 %s174, 3
      %s177 = sand.u32 %s174, 7
      %s178 = smul.addr %s176, 4
      %s179 = scalar_lea.vmem %s162, %s178
      %v180 = vld [vmem:[%s179] sm:$0xf]
      %v181 = vld [vmem:[%s162] sm:$0xf]
      %v183 = vunpack.c.l.b16 %v181
      %v184 = vpack.c.b16 %v183, %v183
      %185 = vrot.lane.b32.xlu0 %v184, 96
      %v186 = vpop.permute.xlu0 %185
      %vm187 = vcmask 64512
      %v189 = vsel %vm187, %v180, 0
      %v192 = vsel %vm187, %v186, 0
      %194 = vmatprep.subr.bf16.mxu0 0
      %195 = vmatpush1.bf16.xpose.msra.mxu0 %v192
      %196 = vmatprep.subr.bf16.mxu0 0
      %197 = vmatpush1.bf16.xpose.msra.mxu0 0
      %198 = vmatprep.subr.bf16.mxu0 0
      %199 = vmatpush1.bf16.xpose.msra.mxu0 0
      %200 = vmatprep.subr.bf16.mxu0 0
      %201 = vmatpush1.bf16.xpose.msra.mxu0 0
      %202 = vmatprep.subr.bf16.mxu0 0
      %203 = vmatpush1.bf16.xpose.msra.mxu0 0
      %204 = vmatprep.subr.bf16.mxu0 0
      %205 = vmatpush1.bf16.xpose.msra.mxu0 0
      %206 = vmatprep.subr.bf16.mxu0 0
      %207 = vmatpush1.bf16.xpose.msra.mxu0 0
      %208 = vmatprep.subr.bf16.mxu0 0
      %209 = vmatpush1.bf16.xpose.msra.mxu0 0
      %210 = vmatprep.subr.bf16.mxu0 0
      %211 = vmatpush1.bf16.xpose.msra.mxu0 0
      %212 = vmatprep.subr.bf16.mxu0 0
      %213 = vmatpush1.bf16.xpose.msra.mxu0 0
      %214 = vmatprep.subr.bf16.mxu0 0
      %215 = vmatpush1.bf16.xpose.msra.mxu0 0
      %216 = vmatprep.subr.bf16.mxu0 0
      %217 = vmatpush1.bf16.xpose.msra.mxu0 0
      %218 = vmatprep.subr.bf16.mxu0 0
      %219 = vmatpush1.bf16.xpose.msra.mxu0 0
      %220 = vmatprep.subr.bf16.mxu0 0
      %221 = vmatpush1.bf16.xpose.msra.mxu0 0
      %222 = vmatprep.subr.bf16.mxu0 0
      %223 = vmatpush1.bf16.xpose.msra.mxu0 0
      %224 = vmatprep.subr.bf16.mxu0 0
      %225 = vmatpush1.bf16.xpose.msra.mxu0 0
      %226 = vmatprep.mubr.bf16.mxu0 0
      %227 = vmatmul.mubr.bf16.gmra.mrb[0].mxu0 %v189
      %v228 = vpop.f32.mrb[0].mxu0
      %v229 = vadd.f32 0.0, %v228
      %v230 = vpop.f32.mrb[0].mxu0
      %v231 = vpop.f32.mrb[0].mxu0
      %v232 = vpop.f32.mrb[0].mxu0
      %233 = vdwg.mxu0
      %v234 = vmul.f32 %v229, 0.35355338
      %v236 = vlaneseq
      %v237 = vshrl.u32 %v236, 7
      %v238 = vsub.s32 0, %v237
      %v239 = vrot.slane %v175, %v238
      %v241 = vadd.f32 %v234, %v239
      %v242 = vsel %vm187, %v241, -inf
      %243 = vmax.xlane.f32.xlu0 %v242
      %v244 = vpop.xlane.xlu0 %243
      %v245 = vsub.f32 %v241, %v244
      %v246 = vmul.f32 %v245, 1.442695
      %v247 = vpow.pop %v246
      %v248 = vsel %vm187, %v247, 0.0
      %249 = vadd.xlane.f32.xlu0 %v248
      %v250 = vpop.xlane.xlu0 %249
      %v251 = vrcp.pop %v250
      %v252 = vmul.f32 %v247, %v251
      %v253 = vpack.c.bf16 %v252, %v252
      %254 = vrot.lane.b32.xlu0 %v184, 64
      %v255 = vpop.permute.xlu0 %254
      %v257 = vsel %vm187, %v253, 0
      %vm259 = vcmask 1043456
      %v261 = vsel %vm259, %v255, 0
      %263 = vmatprep.subr.bf16.mxu0 0
      %264 = vmatpush1.bf16.msra.mxu0 %v261
      %265 = vmatprep.subr.bf16.mxu0 0
      %266 = vmatpush1.bf16.msra.mxu0 0
      %267 = vmatprep.subr.bf16.mxu0 0
      %268 = vmatpush1.bf16.msra.mxu0 0
      %269 = vmatprep.subr.bf16.mxu0 0
      %270 = vmatpush1.bf16.msra.mxu0 0
      %271 = vmatprep.subr.bf16.mxu0 0
      %272 = vmatpush1.bf16.msra.mxu0 0
      %273 = vmatprep.subr.bf16.mxu0 0
      %274 = vmatpush1.bf16.msra.mxu0 0
      %275 = vmatprep.subr.bf16.mxu0 0
      %276 = vmatpush1.bf16.msra.mxu0 0
      %277 = vmatprep.subr.bf16.mxu0 0
      %278 = vmatpush1.bf16.msra.mxu0 0
      %279 = vmatprep.subr.bf16.mxu0 0
      %280 = vmatpush1.bf16.msra.mxu0 0
      %281 = vmatprep.subr.bf16.mxu0 0
      %282 = vmatpush1.bf16.msra.mxu0 0
      %283 = vmatprep.subr.bf16.mxu0 0
      %284 = vmatpush1.bf16.msra.mxu0 0
      %285 = vmatprep.subr.bf16.mxu0 0
      %286 = vmatpush1.bf16.msra.mxu0 0
      %287 = vmatprep.subr.bf16.mxu0 0
      %288 = vmatpush1.bf16.msra.mxu0 0
      %289 = vmatprep.subr.bf16.mxu0 0
      %290 = vmatpush1.bf16.msra.mxu0 0
      %291 = vmatprep.subr.bf16.mxu0 0
      %292 = vmatpush1.bf16.msra.mxu0 0
      %293 = vmatprep.subr.bf16.mxu0 0
      %294 = vmatpush1.bf16.msra.mxu0 0
      %295 = vmatprep.mubr.bf16.mxu0 0
      %296 = vmatmul.mubr.bf16.gmra.mrb[0].mxu0 %v257
      %v297 = vpop.f32.mrb[0].mxu0
      %v298 = vadd.f32 0.0, %v297
      %v299 = vpop.f32.mrb[0].mxu0
      %v300 = vpop.f32.mrb[0].mxu0
      %v301 = vpop.f32.mrb[0].mxu0
      %302 = vdwg.mxu0
      %v303 = vpack.c.bf16 %v298, %v298
      %vm304 = vcmask 60416
      %305 = vst.msk [vmem:[%s172] sm:$0xf] %vm304, %v303
      %v306 = vld [vmem:[%s179] sm:$0xf]
      %v307 = vld [vmem:[%s162] sm:$0xf]
      %v309 = vunpack.c.l.b16 %v306
      %v310 = vpack.c.b16 %v309, %v309
      %311 = vrot.lane.b32.xlu0 %v310, 120
      %v312 = vpop.permute.xlu0 %311
      %v314 = vunpack.c.l.b16 %v307
      %v315 = vpack.c.b16 %v314, %v314
      %316 = vrot.lane.b32.xlu0 %v315, 88
      %v317 = vpop.permute.xlu0 %316
      %v319 = vsel %vm187, %v312, 0
      %v322 = vsel %vm187, %v317, 0
      %324 = vmatprep.subr.bf16.mxu0 0
      %325 = vmatpush1.bf16.xpose.msra.mxu0 %v322
      %326 = vmatprep.subr.bf16.mxu0 0
      %327 = vmatpush1.bf16.xpose.msra.mxu0 0
      %328 = vmatprep.subr.bf16.mxu0 0
      %329 = vmatpush1.bf16.xpose.msra.mxu0 0
      %330 = vmatprep.subr.bf16.mxu0 0
      %331 = vmatpush1.bf16.xpose.msra.mxu0 0
      %332 = vmatprep.subr.bf16.mxu0 0
      %333 = vmatpush1.bf16.xpose.msra.mxu0 0
      %334 = vmatprep.subr.bf16.mxu0 0
      %335 = vmatpush1.bf16.xpose.msra.mxu0 0
      %336 = vmatprep.subr.bf16.mxu0 0
      %337 = vmatpush1.bf16.xpose.msra.mxu0 0
      %338 = vmatprep.subr.bf16.mxu0 0
      %339 = vmatpush1.bf16.xpose.msra.mxu0 0
      %340 = vmatprep.subr.bf16.mxu0 0
      %341 = vmatpush1.bf16.xpose.msra.mxu0 0
      %342 = vmatprep.subr.bf16.mxu0 0
      %343 = vmatpush1.bf16.xpose.msra.mxu0 0
      %344 = vmatprep.subr.bf16.mxu0 0
      %345 = vmatpush1.bf16.xpose.msra.mxu0 0
      %346 = vmatprep.subr.bf16.mxu0 0
      %347 = vmatpush1.bf16.xpose.msra.mxu0 0
      %348 = vmatprep.subr.bf16.mxu0 0
      %349 = vmatpush1.bf16.xpose.msra.mxu0 0
      %350 = vmatprep.subr.bf16.mxu0 0
      %351 = vmatpush1.bf16.xpose.msra.mxu0 0
      %352 = vmatprep.subr.bf16.mxu0 0
      %353 = vmatpush1.bf16.xpose.msra.mxu0 0
      %354 = vmatprep.subr.bf16.mxu0 0
      %355 = vmatpush1.bf16.xpose.msra.mxu0 0
      %356 = vmatprep.mubr.bf16.mxu0 0
      %357 = vmatmul.mubr.bf16.gmra.mrb[0].mxu0 %v319
      %v358 = vpop.f32.mrb[0].mxu0
      %v359 = vadd.f32 0.0, %v358
      %v360 = vpop.f32.mrb[0].mxu0
      %v361 = vpop.f32.mrb[0].mxu0
      %v362 = vpop.f32.mrb[0].mxu0
      %363 = vdwg.mxu0
      %v364 = vmul.f32 %v359, 0.35355338
      %v365 = vadd.f32 %v364, %v239
      %v366 = vsel %vm187, %v365, -inf
      %367 = vmax.xlane.f32.xlu0 %v366
      %v368 = vpop.xlane.xlu0 %367
      %v369 = vsub.f32 %v365, %v368
      %v370 = vmul.f32 %v369, 1.442695
      %v371 = vpow.pop %v370
      %v372 = vsel %vm187, %v371, 0.0
      %373 = vadd.xlane.f32.xlu0 %v372
      %v374 = vpop.xlane.xlu0 %373
      %v375 = vrcp.pop %v374
      %v376 = vmul.f32 %v371, %v375
      %v377 = vpack.c.bf16 %v376, %v376
      %378 = vrot.lane.b32.xlu0 %v315, 56
      %v379 = vpop.permute.xlu0 %378
      %v381 = vsel %vm187, %v377, 0
      %v384 = vsel %vm259, %v379, 0
      %386 = vmatprep.subr.bf16.mxu0 0
      %387 = vmatpush1.bf16.msra.mxu0 %v384
      %388 = vmatprep.subr.bf16.mxu0 0
      %389 = vmatpush1.bf16.msra.mxu0 0
      %390 = vmatprep.subr.bf16.mxu0 0
      %391 = vmatpush1.bf16.msra.mxu0 0
      %392 = vmatprep.subr.bf16.mxu0 0
      %393 = vmatpush1.bf16.msra.mxu0 0
      %394 = vmatprep.subr.bf16.mxu0 0
      %395 = vmatpush1.bf16.msra.mxu0 0
      %396 = vmatprep.subr.bf16.mxu0 0
      %397 = vmatpush1.bf16.msra.mxu0 0
      %398 = vmatprep.subr.bf16.mxu0 0
      %399 = vmatpush1.bf16.msra.mxu0 0
      %400 = vmatprep.subr.bf16.mxu0 0
      %401 = vmatpush1.bf16.msra.mxu0 0
      %402 = vmatprep.subr.bf16.mxu0 0
      %403 = vmatpush1.bf16.msra.mxu0 0
      %404 = vmatprep.subr.bf16.mxu0 0
      %405 = vmatpush1.bf16.msra.mxu0 0
      %406 = vmatprep.subr.bf16.mxu0 0
      %407 = vmatpush1.bf16.msra.mxu0 0
      %408 = vmatprep.subr.bf16.mxu0 0
      %409 = vmatpush1.bf16.msra.mxu0 0
      %410 = vmatprep.subr.bf16.mxu0 0
      %411 = vmatpush1.bf16.msra.mxu0 0
      %412 = vmatprep.subr.bf16.mxu0 0
      %413 = vmatpush1.bf16.msra.mxu0 0
      %414 = vmatprep.subr.bf16.mxu0 0
      %415 = vmatpush1.bf16.msra.mxu0 0
      %416 = vmatprep.subr.bf16.mxu0 0
      %417 = vmatpush1.bf16.msra.mxu0 0
      %418 = vmatprep.mubr.bf16.mxu0 0
      %419 = vmatmul.mubr.bf16.gmra.mrb[0].mxu0 %v381
      %v420 = vpop.f32.mrb[0].mxu0
      %v421 = vadd.f32 0.0, %v420
      %v422 = vpop.f32.mrb[0].mxu0
      %v423 = vpop.f32.mrb[0].mxu0
      %v424 = vpop.f32.mrb[0].mxu0
      %425 = vdwg.mxu0
      %v426 = vpack.c.bf16 %v421, %v421
      %v428 = vunpack.c.l.b16 %v426
      %v429 = vpack.c.b16 %v428, %v428
      %430 = vrot.lane.b32.xlu0 %v429, 8
      %v431 = vpop.permute.xlu0 %430
      %vm433 = vcmask 126016
      %434 = vst.msk [vmem:[%s172] sm:$0xf] %vm433, %v431
      %v435 = vld [vmem:[%s179] sm:$0xf]
      %v436 = vld [vmem:[%s162] sm:$0xf]
      %v438 = vunpack.c.l.b16 %v435
      %v439 = vpack.c.b16 %v438, %v438
      %440 = vrot.lane.b32.xlu0 %v439, 112
      %v441 = vpop.permute.xlu0 %440
      %v443 = vunpack.c.l.b16 %v436
      %v444 = vpack.c.b16 %v443, %v443
      %445 = vrot.lane.b32.xlu0 %v444, 80
      %v446 = vpop.permute.xlu0 %445
      %v448 = vsel %vm187, %v441, 0
      %v451 = vsel %vm187, %v446, 0
      %453 = vmatprep.subr.bf16.mxu0 0
      %454 = vmatpush1.bf16.xpose.msra.mxu0 %v451
      %455 = vmatprep.subr.bf16.mxu0 0
      %456 = vmatpush1.bf16.xpose.msra.mxu0 0
      %457 = vmatprep.subr.bf16.mxu0 0
      %458 = vmatpush1.bf16.xpose.msra.mxu0 0
      %459 = vmatprep.subr.bf16.mxu0 0
      %460 = vmatpush1.bf16.xpose.msra.mxu0 0
      %461 = vmatprep.subr.bf16.mxu0 0
      %462 = vmatpush1.bf16.xpose.msra.mxu0 0
      %463 = vmatprep.subr.bf16.mxu0 0
      %464 = vmatpush1.bf16.xpose.msra.mxu0 0
      %465 = vmatprep.subr.bf16.mxu0 0
      %466 = vmatpush1.bf16.xpose.msra.mxu0 0
      %467 = vmatprep.subr.bf16.mxu0 0
      %468 = vmatpush1.bf16.xpose.msra.mxu0 0
      %469 = vmatprep.subr.bf16.mxu0 0
      %470 = vmatpush1.bf16.xpose.msra.mxu0 0
      %471 = vmatprep.subr.bf16.mxu0 0
      %472 = vmatpush1.bf16.xpose.msra.mxu0 0
      %473 = vmatprep.subr.bf16.mxu0 0
      %474 = vmatpush1.bf16.xpose.msra.mxu0 0
      %475 = vmatprep.subr.bf16.mxu0 0
      %476 = vmatpush1.bf16.xpose.msra.mxu0 0
      %477 = vmatprep.subr.bf16.mxu0 0
      %478 = vmatpush1.bf16.xpose.msra.mxu0 0
      %479 = vmatprep.subr.bf16.mxu0 0
      %480 = vmatpush1.bf16.xpose.msra.mxu0 0
      %481 = vmatprep.subr.bf16.mxu0 0
      %482 = vmatpush1.bf16.xpose.msra.mxu0 0
      %483 = vmatprep.subr.bf16.mxu0 0
      %484 = vmatpush1.bf16.xpose.msra.mxu0 0
      %485 = vmatprep.mubr.bf16.mxu0 0
      %486 = vmatmul.mubr.bf16.gmra.mrb[0].mxu0 %v448
      %v487 = vpop.f32.mrb[0].mxu0
      %v488 = vadd.f32 0.0, %v487
      %v489 = vpop.f32.mrb[0].mxu0
      %v490 = vpop.f32.mrb[0].mxu0
      %v491 = vpop.f32.mrb[0].mxu0
      %492 = vdwg.mxu0
      %v493 = vmul.f32 %v488, 0.35355338
      %v494 = vadd.f32 %v493, %v239
      %v495 = vsel %vm187, %v494, -inf
      %496 = vmax.xlane.f32.xlu0 %v495
      %v497 = vpop.xlane.xlu0 %496
      %v498 = vsub.f32 %v494, %v497
      %v499 = vmul.f32 %v498, 1.442695
      %v500 = vpow.pop %v499
      %v501 = vsel %vm187, %v500, 0.0
      %502 = vadd.xlane.f32.xlu0 %v501
      %v503 = vpop.xlane.xlu0 %502
      %v504 = vrcp.pop %v503
      %v505 = vmul.f32 %v500, %v504
      %v506 = vpack.c.bf16 %v505, %v505
      %507 = vrot.lane.b32.xlu0 %v444, 48
      %v508 = vpop.permute.xlu0 %507
      %v510 = vsel %vm187, %v506, 0
      %v513 = vsel %vm259, %v508, 0
      %515 = vmatprep.subr.bf16.mxu0 0
      %516 = vmatpush1.bf16.msra.mxu0 %v513
      %517 = vmatprep.subr.bf16.mxu0 0
      %518 = vmatpush1.bf16.msra.mxu0 0
      %519 = vmatprep.subr.bf16.mxu0 0
      %520 = vmatpush1.bf16.msra.mxu0 0
      %521 = vmatprep.subr.bf16.mxu0 0
      %522 = vmatpush1.bf16.msra.mxu0 0
      %523 = vmatprep.subr.bf16.mxu0 0
      %524 = vmatpush1.bf16.msra.mxu0 0
      %525 = vmatprep.subr.bf16.mxu0 0
      %526 = vmatpush1.bf16.msra.mxu0 0
      %527 = vmatprep.subr.bf16.mxu0 0
      %528 = vmatpush1.bf16.msra.mxu0 0
      %529 = vmatprep.subr.bf16.mxu0 0
      %530 = vmatpush1.bf16.msra.mxu0 0
      %531 = vmatprep.subr.bf16.mxu0 0
      %532 = vmatpush1.bf16.msra.mxu0 0
      %533 = vmatprep.subr.bf16.mxu0 0
      %534 = vmatpush1.bf16.msra.mxu0 0
      %535 = vmatprep.subr.bf16.mxu0 0
      %536 = vmatpush1.bf16.msra.mxu0 0
      %537 = vmatprep.subr.bf16.mxu0 0
      %538 = vmatpush1.bf16.msra.mxu0 0
      %539 = vmatprep.subr.bf16.mxu0 0
      %540 = vmatpush1.bf16.msra.mxu0 0
      %541 = vmatprep.subr.bf16.mxu0 0
      %542 = vmatpush1.bf16.msra.mxu0 0
      %543 = vmatprep.subr.bf16.mxu0 0
      %544 = vmatpush1.bf16.msra.mxu0 0
      %545 = vmatprep.subr.bf16.mxu0 0
      %546 = vmatpush1.bf16.msra.mxu0 0
      %547 = vmatprep.mubr.bf16.mxu0 0
      %548 = vmatmul.mubr.bf16.gmra.mrb[0].mxu0 %v510
      %v549 = vpop.f32.mrb[0].mxu0
      %v550 = vadd.f32 0.0, %v549
      %v551 = vpop.f32.mrb[0].mxu0
      %v552 = vpop.f32.mrb[0].mxu0
      %v553 = vpop.f32.mrb[0].mxu0
      %554 = vdwg.mxu0
      %v555 = vpack.c.bf16 %v550, %v550
      %v557 = vunpack.c.l.b16 %v555
      %v558 = vpack.c.b16 %v557, %v557
      %559 = vrot.lane.b32.xlu0 %v558, 16
      %v560 = vpop.permute.xlu0 %559
      %vm562 = vcmask 191616
      %563 = vst.msk [vmem:[%s172] sm:$0xf] %vm562, %v560
      %v564 = vld [vmem:[%s179] sm:$0xf]
      %v565 = vld [vmem:[%s162] sm:$0xf]
      %v567 = vunpack.c.l.b16 %v564
      %v568 = vpack.c.b16 %v567, %v567
      %569 = vrot.lane.b32.xlu0 %v568, 104
      %v570 = vpop.permute.xlu0 %569
      %v572 = vunpack.c.l.b16 %v565
      %v573 = vpack.c.b16 %v572, %v572
      %574 = vrot.lane.b32.xlu0 %v573, 72
      %v575 = vpop.permute.xlu0 %574
      %v577 = vsel %vm187, %v570, 0
      %v580 = vsel %vm187, %v575, 0
      %582 = vmatprep.subr.bf16.mxu0 0
      %583 = vmatpush1.bf16.xpose.msra.mxu0 %v580
      %584 = vmatprep.subr.bf16.mxu0 0
      %585 = vmatpush1.bf16.xpose.msra.mxu0 0
      %586 = vmatprep.subr.bf16.mxu0 0
      %587 = vmatpush1.bf16.xpose.msra.mxu0 0
      %588 = vmatprep.subr.bf16.mxu0 0
      %589 = vmatpush1.bf16.xpose.msra.mxu0 0
      %590 = vmatprep.subr.bf16.mxu0 0
      %591 = vmatpush1.bf16.xpose.msra.mxu0 0
      %592 = vmatprep.subr.bf16.mxu0 0
      %593 = vmatpush1.bf16.xpose.msra.mxu0 0
      %594 = vmatprep.subr.bf16.mxu0 0
      %595 = vmatpush1.bf16.xpose.msra.mxu0 0
      %596 = vmatprep.subr.bf16.mxu0 0
      %597 = vmatpush1.bf16.xpose.msra.mxu0 0
      %598 = vmatprep.subr.bf16.mxu0 0
      %599 = vmatpush1.bf16.xpose.msra.mxu0 0
      %600 = vmatprep.subr.bf16.mxu0 0
      %601 = vmatpush1.bf16.xpose.msra.mxu0 0
      %602 = vmatprep.subr.bf16.mxu0 0
      %603 = vmatpush1.bf16.xpose.msra.mxu0 0
      %604 = vmatprep.subr.bf16.mxu0 0
      %605 = vmatpush1.bf16.xpose.msra.mxu0 0
      %606 = vmatprep.subr.bf16.mxu0 0
      %607 = vmatpush1.bf16.xpose.msra.mxu0 0
      %608 = vmatprep.subr.bf16.mxu0 0
      %609 = vmatpush1.bf16.xpose.msra.mxu0 0
      %610 = vmatprep.subr.bf16.mxu0 0
      %611 = vmatpush1.bf16.xpose.msra.mxu0 0
      %612 = vmatprep.subr.bf16.mxu0 0
      %613 = vmatpush1.bf16.xpose.msra.mxu0 0
      %614 = vmatprep.mubr.bf16.mxu0 0
      %615 = vmatmul.mubr.bf16.gmra.mrb[0].mxu0 %v577
      %v616 = vpop.f32.mrb[0].mxu0
      %v617 = vadd.f32 0.0, %v616
      %v618 = vpop.f32.mrb[0].mxu0
      %v619 = vpop.f32.mrb[0].mxu0
      %v620 = vpop.f32.mrb[0].mxu0
      %621 = vdwg.mxu0
      %v622 = vmul.f32 %v617, 0.35355338
      %v623 = vadd.f32 %v622, %v239
      %v624 = vsel %vm187, %v623, -inf
      %625 = vmax.xlane.f32.xlu0 %v624
      %v626 = vpop.xlane.xlu0 %625
      %v627 = vsub.f32 %v623, %v626
      %v628 = vmul.f32 %v627, 1.442695
      %v629 = vpow.pop %v628
      %v630 = vsel %vm187, %v629, 0.0
      %631 = vadd.xlane.f32.xlu0 %v630
      %v632 = vpop.xlane.xlu0 %631
      %v633 = vrcp.pop %v632
      %v634 = vmul.f32 %v629, %v633
      %v635 = vpack.c.bf16 %v634, %v634
      %636 = vrot.lane.b32.xlu0 %v573, 40
      %v637 = vpop.permute.xlu0 %636
      %v639 = vsel %vm187, %v635, 0
      %v642 = vsel %vm259, %v637, 0
      %644 = vmatprep.subr.bf16.mxu0 0
      %645 = vmatpush1.bf16.msra.mxu0 %v642
      %646 = vmatprep.subr.bf16.mxu0 0
      %647 = vmatpush1.bf16.msra.mxu0 0
      %648 = vmatprep.subr.bf16.mxu0 0
      %649 = vmatpush1.bf16.msra.mxu0 0
      %650 = vmatprep.subr.bf16.mxu0 0
      %651 = vmatpush1.bf16.msra.mxu0 0
      %652 = vmatprep.subr.bf16.mxu0 0
      %653 = vmatpush1.bf16.msra.mxu0 0
      %654 = vmatprep.subr.bf16.mxu0 0
      %655 = vmatpush1.bf16.msra.mxu0 0
      %656 = vmatprep.subr.bf16.mxu0 0
      %657 = vmatpush1.bf16.msra.mxu0 0
      %658 = vmatprep.subr.bf16.mxu0 0
      %659 = vmatpush1.bf16.msra.mxu0 0
      %660 = vmatprep.subr.bf16.mxu0 0
      %661 = vmatpush1.bf16.msra.mxu0 0
      %662 = vmatprep.subr.bf16.mxu0 0
      %663 = vmatpush1.bf16.msra.mxu0 0
      %664 = vmatprep.subr.bf16.mxu0 0
      %665 = vmatpush1.bf16.msra.mxu0 0
      %666 = vmatprep.subr.bf16.mxu0 0
      %667 = vmatpush1.bf16.msra.mxu0 0
      %668 = vmatprep.subr.bf16.mxu0 0
      %669 = vmatpush1.bf16.msra.mxu0 0
      %670 = vmatprep.subr.bf16.mxu0 0
      %671 = vmatpush1.bf16.msra.mxu0 0
      %672 = vmatprep.subr.bf16.mxu0 0
      %673 = vmatpush1.bf16.msra.mxu0 0
      %674 = vmatprep.subr.bf16.mxu0 0
      %675 = vmatpush1.bf16.msra.mxu0 0
      %676 = vmatprep.mubr.bf16.mxu0 0
      %677 = vmatmul.mubr.bf16.gmra.mrb[0].mxu0 %v639
      %v678 = vpop.f32.mrb[0].mxu0
      %v679 = vadd.f32 0.0, %v678
      %v680 = vpop.f32.mrb[0].mxu0
      %v681 = vpop.f32.mrb[0].mxu0
      %v682 = vpop.f32.mrb[0].mxu0
      %683 = vdwg.mxu0
      %v684 = vpack.c.bf16 %v679, %v679
      %v686 = vunpack.c.l.b16 %v684
      %v687 = vpack.c.b16 %v686, %v686
      %688 = vrot.lane.b32.xlu0 %v687, 24
      %v689 = vpop.permute.xlu0 %688
      %vm691 = vcmask 257216
      %692 = vst.msk [vmem:[%s172] sm:$0xf] %vm691, %v689
      %p693 = scmp.lt.s32.totalorder %s17, 1
      %s694 = scalar_select %p693, %s17, 1
      %p695 = scmp.lt.s32.totalorder %s18, 0
      %s696 = scalar_select %p695, %s18, 0
      %s697 = sadd.s32 %s696, %s694
      %s698 = smul.addr %s697, 4
      %s699 = scalar_lea.vmem %s2, %s698
      // Predicated region
      $region29: #{transformer_forward.13} parent=27 // pred_check
        %p700 = pneg %p97
      $region30: #{transformer_forward.13} parent=27 // pred_check_branch
        %702 = sbr.rel (%p700) target = $region32
      $region31: #{transformer_forward.13} parent=27 // pred_region
        _
      $region32: #{transformer_forward.13} parent=27 // pred_fallthru
        _
    $region28: #{transformer_forward.13} parent=5 // pred_fallthru
      _
    %p703 = scmp.le.s32.totalorder 2, %s8
    // Predicated region
    $region33: #{transformer_forward.13} parent=5 // pred_check
      %p704 = pneg %p703
    $region34: #{transformer_forward.13} parent=5 // pred_check_branch
      %706 = sbr.rel (%p704) target = $region36
    $region35: #{transformer_forward.13} parent=5 // pred_region
      %s707 = ssub.s32 %s8, 2
      // Predicated region
      $region37: #{transformer_forward.13} parent=35 // pred_check
        %p708 = pneg %p103
      $region38: #{transformer_forward.13} parent=35 // pred_check_branch
        %710 = sbr.rel (%p708) target = $region40
      $region39: #{transformer_forward.13} parent=35 // pred_region
        %p711 = scmp.lt.s32.totalorder %s19, 1
        %s712 = scalar_select %p711, %s19, 1
        %p713 = scmp.lt.s32.totalorder %s20, 0
        %s714 = scalar_select %p713, %s20, 0
        %s715 = sadd.s32 %s714, %s712
        %s716 = smul.addr %s715, 4
        %s717 = scalar_lea.vmem %s2, %s716
      $region40: #{transformer_forward.13} parent=35 // pred_fallthru
        _
    $region36: #{transformer_forward.13} parent=5 // pred_fallthru
      _
  $region6: #{transformer_forward.13} parent=0 // loop_footer
    %s12 = sadd.s32 1, %s8
  $region7: #{transformer_forward.13} parent=0 // loop_footer_branch
    %7 = sbr.rel target = $region3
  $region8: #{transformer_forward.13} parent=0 // loop_exit
    _

// kernel: transformer_forward.21
$region0: #{transformer_forward.21}
  #allocation0 [shape = 'u32[]', space=smem, size = 0x4, offset = 0x4, fixed_abs, tag = 'smem constant byte address 0x4 - core index']
  #allocation1 [shape = 'u32[144,128]{1,0:T(1,128)}', space=vmem, size = 0x12000, scoped, tag = 'internal scratch']
  #allocation2 [shape = 'f32[8,32]{1,0:T(8,128)}', space=vmem, size = 0x1000, scoped, tag = 'scratch operand']
  %s0 = inlined_call_operand.vmem [shape: bf16[16,32], index: 0, kind: input, shape index: {}]
  %s1 = inlined_call_operand.vmem [shape: bf16[32,32], index: 1, kind: input, shape index: {}]
  %s2 = inlined_call_operand.hbm [shape: f32[16,32], index: 2, kind: output, shape index: {}]
  %s3 = sld [smem:[#allocation0]]
  $region49: #{transformer_forward.21} parent=0
    _
  %s5 = ssub.s32 1, %s3
  %s6 = scalar_select 0, %s5, %s3
  $region1: #{transformer_forward.21} parent=0
    #allocation3 [shape = 'u8[8192]{0}', space=vmem, size = 0x2000, scoped, tag = 'output window, operand 0']
    #allocation4 [shape = 's32[2]{0}', space=sflag, size = 0x8, scoped, tag = 'scoped memory for transformer_forward.21']
    %7 = vsyncpa [#allocation4], 0
    %s8 = scalar_lea.sflag [#allocation4], 1
    %9 = vsyncpa %s8, 0
    loop: start=0, step=1, limit=4
    $region2: #{transformer_forward.21} parent=1 // loop_pre_header
      _
    $region3: #{transformer_forward.21} parent=1 // loop_header
      %s11 = sphi 0, %s15
      %p12 = scmp.ge.s32.totalorder %s11, 4
      %s18 = sphi 0, %s37
      %s19 = sphi 0, %s33
      %s20 = sphi 0, %s29
      %s21 = sphi 0, %s18
      %s22 = sphi 0, %s19
      %s23 = sphi 0, %s20
      %s24 = sphi 0, %s21
      %s25 = sphi 0, %s22
      %s26 = sphi 0, %s23
      %s42 = sphi 0, %s44
      %s45 = sphi 0, %s42
      %s46 = sphi 0, %s45
      %s62 = sphi 0, %s46
      %s70 = sphi 0, %s72
      %s73 = sphi 0, %s70
      %s74 = sphi 0, %s73
      %s90 = sphi 0, %s74
      %s98 = sphi 0, %s100
      %s101 = sphi 0, %s98
      %s102 = sphi 0, %s101
      %s118 = sphi 0, %s102
    $region4: #{transformer_forward.21} parent=1 // loop_header_branch
      %14 = sbr.rel (%p12) target = $region8
    $region5: #{transformer_forward.21} parent=1 // loop_body
      %s16 = ssub.s32 %s11, 1
      %s17 = ssub.s32 %s11, 2
      %s27 = sadd.s32 1, %s20
      %p28 = scmp.ge.s32.totalorder %s27, 1
      %s29 = scalar_select %p28, 0, %s27
      %s30 = sadd.s32 1, %s19
      %s31 = scalar_select %p28, %s30, %s19
      %p32 = scmp.ge.s32.totalorder %s31, 1
      %s33 = scalar_select %p32, 0, %s31
      %s34 = sadd.s32 1, %s18
      %s35 = scalar_select %p32, %s34, %s18
      %p36 = scmp.ge.s32.totalorder %s35, 2
      %s37 = scalar_select %p36, 0, %s35
      %s38 = ssub.s32 %s18, %s37
      %s39 = ssub.s32 %s20, %s29
      %s40 = sor.u32 %s38, %s39
      %p41 = scmp.eq.s32.totalorder %s40, 0
      %s43 = sadd.s32 %s42, 1
      %s44 = scalar_select %p41, %s42, %s43
      %p47 = pneg %p41
      %p48 = scmp.eq.s32.totalorder %s11, 1
      %p49 = por %p47, %p48
      %p50 = scmp.ne.s32.totalorder %s42, %s45
      %p51 = scmp.eq.s32.totalorder %s11, 0
      %p52 = por %p50, %p51
      %p53 = scmp.ne.s32.totalorder %s42, %s45
      %p54 = scmp.eq.s32.totalorder %s16, 1
      %p55 = por %p53, %p54
      %p56 = scmp.ne.s32.totalorder %s45, %s46
      %p57 = scmp.eq.s32.totalorder %s16, 0
      %p58 = por %p56, %p57
      %p59 = scmp.ne.s32.totalorder %s45, %s46
      %p60 = scmp.eq.s32.totalorder %s17, 1
      %p61 = por %p59, %p60
      %p63 = scmp.ne.s32.totalorder %s46, %s62
      %p64 = scmp.eq.s32.totalorder %s17, 0
      %p65 = por %p63, %p64
      %s66 = ssub.s32 %s20, %s29
      %s67 = ssub.s32 %s19, %s33
      %s68 = sor.u32 %s66, %s67
      %p69 = scmp.eq.s32.totalorder %s68, 0
      %s71 = sadd.s32 %s70, 1
      %s72 = scalar_select %p69, %s70, %s71
      %p75 = pneg %p69
      %p76 = scmp.eq.s32.totalorder %s11, 1
      %p77 = por %p75, %p76
      %p78 = scmp.ne.s32.totalorder %s70, %s73
      %p79 = scmp.eq.s32.totalorder %s11, 0
      %p80 = por %p78, %p79
      %p81 = scmp.ne.s32.totalorder %s70, %s73
      %p82 = scmp.eq.s32.totalorder %s16, 1
      %p83 = por %p81, %p82
      %p84 = scmp.ne.s32.totalorder %s73, %s74
      %p85 = scmp.eq.s32.totalorder %s16, 0
      %p86 = por %p84, %p85
      %p87 = scmp.ne.s32.totalorder %s73, %s74
      %p88 = scmp.eq.s32.totalorder %s17, 1
      %p89 = por %p87, %p88
      %p91 = scmp.ne.s32.totalorder %s74, %s90
      %p92 = scmp.eq.s32.totalorder %s17, 0
      %p93 = por %p91, %p92
      %s94 = ssub.s32 %s18, %s37
      %s95 = ssub.s32 %s19, %s33
      %s96 = sor.u32 %s94, %s95
      %p97 = scmp.eq.s32.totalorder %s96, 0
      %s99 = sadd.s32 %s98, 1
      %s100 = scalar_select %p97, %s98, %s99
      %p103 = pneg %p97
      %p104 = scmp.eq.s32.totalorder %s11, 1
      %p105 = por %p103, %p104
      %p106 = scmp.ne.s32.totalorder %s98, %s101
      %p107 = scmp.eq.s32.totalorder %s11, 0
      %p108 = por %p106, %p107
      %p109 = scmp.ne.s32.totalorder %s98, %s101
      %p110 = scmp.eq.s32.totalorder %s16, 1
      %p111 = por %p109, %p110
      %p112 = scmp.ne.s32.totalorder %s101, %s102
      %p113 = scmp.eq.s32.totalorder %s16, 0
      %p114 = por %p112, %p113
      %p115 = scmp.ne.s32.totalorder %s101, %s102
      %p116 = scmp.eq.s32.totalorder %s17, 1
      %p117 = por %p115, %p116
      %p119 = scmp.ne.s32.totalorder %s102, %s118
      %p120 = scmp.eq.s32.totalorder %s17, 0
      %p121 = por %p119, %p120
      %p122 = scmp.le.s32.totalorder 1, %s11
      %p123 = scmp.lt.s32.totalorder %s11, 3
      %p124 = pnand %p122, %p123
      %p125 = pneg %p124
      // Predicated region
      $region9: #{transformer_forward.21} parent=5 // pred_check
        _
      $region10: #{transformer_forward.21} parent=5 // pred_check_branch
        %127 = sbr.rel (%p124) target = $region12
      $region11: #{transformer_forward.21} parent=5 // pred_region
        %s128 = ssub.s32 %s11, 1
        // Predicated region
        $region13: #{transformer_forward.21} parent=11 // pred_check
          %p129 = pneg %p86
        $region14: #{transformer_forward.21} parent=11 // pred_check_branch
          %131 = sbr.rel (%p129) target = $region16
        $region15: #{transformer_forward.21} parent=11 // pred_region
          %s132 = smul.u32 4, %s23
          %p133 = scmp.lt.s32.totalorder %s132, 3
          %s134 = scalar_select %p133, %s132, 3
          %p135 = scmp.lt.s32.totalorder %s22, 0
          %s136 = scalar_select %p135, %s22, 0
          %s137 = sadd.s32 %s136, %s134
          %s138 = smul.addr %s137, 4
          %s139 = scalar_lea.vmem %s1, %s138
          %s140 = smul.u32 4, %s23
        $region16: #{transformer_forward.21} parent=11 // pred_fallthru
          _
      $region12: #{transformer_forward.21} parent=5 // pred_fallthru
        _
      %p141 = scmp.lt.s32.totalorder %s11, 2
      // Predicated region
      $region17: #{transformer_forward.21} parent=5 // pred_check
        %p142 = pneg %p141
      $region18: #{transformer_forward.21} parent=5 // pred_check_branch
        %144 = sbr.rel (%p142) target = $region20
      $region19: #{transformer_forward.21} parent=5 // pred_region
        // Predicated region
        $region21: #{transformer_forward.21} parent=19 // pred_check
          %p145 = pneg %p52
        $region22: #{transformer_forward.21} parent=19 // pred_check_branch
          %147 = sbr.rel (%p145) target = $region24
        $region23: #{transformer_forward.21} parent=19 // pred_region
          %p148 = scmp.lt.s32.totalorder %s18, 1
          %s149 = scalar_select %p148, %s18, 1
          %p150 = scmp.lt.s32.totalorder %s20, 0
          %s151 = scalar_select %p150, %s20, 0
          %s152 = sadd.s32 %s151, %s149
          %s153 = smul.addr %s152, 4
          %s154 = scalar_lea.vmem %s0, %s153
        $region24: #{transformer_forward.21} parent=19 // pred_fallthru
          _
      $region20: #{transformer_forward.21} parent=5 // pred_fallthru
        _
      %p155 = scmp.le.s32.totalorder 1, %s11
      %p156 = scmp.lt.s32.totalorder %s11, 3
      %p157 = pnand %p155, %p156
      %p158 = pneg %p157
      // Predicated region
      $region25: #{transformer_forward.21} parent=5 // pred_check
        _
      $region26: #{transformer_forward.21} parent=5 // pred_check_branch
        %160 = sbr.rel (%p157) target = $region28
      $region27: #{transformer_forward.21} parent=5 // pred_region
        %s161 = ssub.s32 %s11, 1
        %p162 = scmp.lt.s32.totalorder %s21, 1
        %s163 = scalar_select %p162, %s21, 1
        %p164 = scmp.lt.s32.totalorder %s23, 0
        %s165 = scalar_select %p164, %s23, 0
        %s166 = sadd.s32 %s165, %s163
        %s167 = smul.addr %s166, 4
        %s168 = scalar_lea.vmem %s0, %s167
        %p169 = pneg %p58
        %p170 = pneg %p55
        %s171 = smul.u32 4, %s23
        %p172 = scmp.lt.s32.totalorder %s171, 3
        %s173 = scalar_select %p172, %s171, 3
        %p174 = scmp.lt.s32.totalorder %s22, 0
        %s175 = scalar_select %p174, %s22, 0
        %s176 = sadd.s32 %s175, %s173
        %s177 = smul.addr %s176, 4
        %s178 = scalar_lea.vmem %s1, %s177
        %p179 = pneg %p86
        %p180 = pneg %p83
        %p181 = pneg %p114
        %p182 = pneg %p111
        %s183 = sand.u32 %s101, 1
        %s184 = scalar_lea.sflag [#allocation4], %s183
        %s185 = sand.u32 %s101, 1
        %s186 = smul.addr %s185, 8
        %s187 = scalar_lea.vmem [#allocation3], %s186
        %p188 = scmp.lt.s32.totalorder %s21, 1
        %s189 = scalar_select %p188, %s21, 1
        %p190 = scmp.lt.s32.totalorder %s23, 0
        %s191 = scalar_select %p190, %s23, 0
        %s192 = sadd.s32 %s191, %s189
        %s193 = smul.addr %s192, 4
        %s194 = scalar_lea.vmem %s0, %s193
        %s195 = smul.u32 4, %s23
        %p196 = scmp.lt.s32.totalorder %s195, 3
        %s197 = scalar_select %p196, %s195, 3
        %p198 = scmp.lt.s32.totalorder %s22, 0
        %s199 = scalar_select %p198, %s22, 0
        %s200 = sadd.s32 %s199, %s197
        %s201 = smul.addr %s200, 4
        %s202 = scalar_lea.vmem %s1, %s201
        %s203 = smul.u32 4, %s23
        %p205 = scmp.eq.s32.totalorder %s23, 0
        // Predicated region
        $region29: #{transformer_forward.21} parent=27 // pred_check
          %p206 = pneg %p205
        $region30: #{transformer_forward.21} parent=27 // pred_check_branch
          %208 = sbr.rel (%p206) target = $region32
        $region31: #{transformer_forward.21} parent=27 // pred_region
          %vm209 = vcmask 261120
          %210 = vst.msk [vmem:[#allocation2] sm:$0xff] %vm209, 0.0
        $region32: #{transformer_forward.21} parent=27 // pred_fallthru
          _
        %v211 = vld [vmem:[#allocation2] sm:$0xff]
        %v212 = vld [vmem:[%s194] sm:$0xf]
        %v213 = vld [vmem:[%s202] sm:$0xf]
        %v214 = vld [vmem:[%s202 + $0x4] sm:$0xf]
        %v215 = vld [vmem:[%s202 + $0x8] sm:$0xf]
        %v216 = vld [vmem:[%s202 + $0xc] sm:$0xf]
        %v221 = vunpack.c.l.b16 %v213
        %v222 = vunpack.c.l.b16 %v214
        %v223 = vunpack.c.l.b16 %v215
        %v224 = vunpack.c.l.b16 %v216
        %v225 = vpack.c.b16 %v222, %v221
        %v226 = vpack.c.b16 %v224, %v223
        %vm229 = vcmask 261120
        %v231 = vsel %vm229, %v212, 0
        %233 = vmatprep.subr.bf16.mxu0 0
        %234 = vmatpush1.bf16.msra.mxu0 %v225
        %235 = vmatprep.subr.bf16.mxu0 0
        %236 = vmatpush1.bf16.msra.mxu0 %v226
        %237 = vmatprep.subr.bf16.mxu0 0
        %238 = vmatpush1.bf16.msra.mxu0 0
        %239 = vmatprep.subr.bf16.mxu0 0
        %240 = vmatpush1.bf16.msra.mxu0 0
        %241 = vmatprep.subr.bf16.mxu0 0
        %242 = vmatpush1.bf16.msra.mxu0 0
        %243 = vmatprep.subr.bf16.mxu0 0
        %244 = vmatpush1.bf16.msra.mxu0 0
        %245 = vmatprep.subr.bf16.mxu0 0
        %246 = vmatpush1.bf16.msra.mxu0 0
        %247 = vmatprep.subr.bf16.mxu0 0
        %248 = vmatpush1.bf16.msra.mxu0 0
        %249 = vmatprep.subr.bf16.mxu0 0
        %250 = vmatpush1.bf16.msra.mxu0 0
        %251 = vmatprep.subr.bf16.mxu0 0
        %252 = vmatpush1.bf16.msra.mxu0 0
        %253 = vmatprep.subr.bf16.mxu0 0
        %254 = vmatpush1.bf16.msra.mxu0 0
        %255 = vmatprep.subr.bf16.mxu0 0
        %256 = vmatpush1.bf16.msra.mxu0 0
        %257 = vmatprep.subr.bf16.mxu0 0
        %258 = vmatpush1.bf16.msra.mxu0 0
        %259 = vmatprep.subr.bf16.mxu0 0
        %260 = vmatpush1.bf16.msra.mxu0 0
        %261 = vmatprep.subr.bf16.mxu0 0
        %262 = vmatpush1.bf16.msra.mxu0 0
        %263 = vmatprep.subr.bf16.mxu0 0
        %264 = vmatpush1.bf16.msra.mxu0 0
        %265 = vmatprep.mubr.bf16.mxu0 0
        %266 = vmatmul.mubr.bf16.gmra.mrb[0].mxu0 %v231
        %v267 = vpop.f32.mrb[0].mxu0
        %v268 = vadd.f32 0.0, %v267
        %v269 = vpop.f32.mrb[0].mxu0
        %v270 = vpop.f32.mrb[0].mxu0
        %v271 = vpop.f32.mrb[0].mxu0
        %272 = vdwg.mxu0
        %v273 = vadd.f32 %v211, %v268
        %274 = vst.msk [vmem:[#allocation2] sm:$0xff] %vm229, %v273
        // Predicated region
        $region33: #{transformer_forward.21} parent=27 // pred_check
          %p275 = pneg %p205
        $region34: #{transformer_forward.21} parent=27 // pred_check_branch
          %277 = sbr.rel (%p275) target = $region36
        $region35: #{transformer_forward.21} parent=27 // pred_region
          %v278 = vld [vmem:[#allocation2] sm:$0xff]
          %279 = vst.msk [vmem:[%s187] sm:$0xff] %vm229, %v278
        $region36: #{transformer_forward.21} parent=27 // pred_fallthru
          _
        %s280 = sand.u32 %s101, 1
        %s281 = scalar_lea.sflag [#allocation4], %s280
        %s282 = sand.u32 %s101, 1
        %s283 = smul.addr %s282, 8
        %s284 = scalar_lea.vmem [#allocation3], %s283
        // Predicated region
        $region37: #{transformer_forward.21} parent=27 // pred_check
          %p285 = pneg %p111
        $region38: #{transformer_forward.21} parent=27 // pred_check_branch
          %287 = sbr.rel (%p285) target = $region40
        $region39: #{transformer_forward.21} parent=27 // pred_region
          %s289 = ssub.s32 128, 128
          %290 = vsyncadd %s281, %s289
          %s291 = sadd.s32 %s22, %s21
          %s292 = smul.addr %s291, 128
          %s293 = scalar_lea.hbm %s2, %s292
          %s295 = sshll.u32 %s284, 4
          %s296 = int_to_ptr.vmem [resolvable:$true] %s295
          %298 = dma.vmem_to_hbm [thread:$0]  %s296, 128, %s293, %s281
        $region40: #{transformer_forward.21} parent=27 // pred_fallthru
          _
      $region28: #{transformer_forward.21} parent=5 // pred_fallthru
        _
      %p299 = scmp.le.s32.totalorder 2, %s11
      // Predicated region
      $region41: #{transformer_forward.21} parent=5 // pred_check
        %p300 = pneg %p299
      $region42: #{transformer_forward.21} parent=5 // pred_check_branch
        %302 = sbr.rel (%p300) target = $region44
      $region43: #{transformer_forward.21} parent=5 // pred_region
        %s303 = ssub.s32 %s11, 2
        // Predicated region
        $region45: #{transformer_forward.21} parent=43 // pred_check
          %p304 = pneg %p117
        $region46: #{transformer_forward.21} parent=43 // pred_check_branch
          %306 = sbr.rel (%p304) target = $region48
        $region47: #{transformer_forward.21} parent=43 // pred_region
          %s307 = sand.u32 %s102, 1
          %s308 = scalar_lea.sflag [#allocation4], %s307
          %s309 = sand.u32 %s102, 1
          %s310 = smul.addr %s309, 8
          %s311 = scalar_lea.vmem [#allocation3], %s310
          %312 = dma.done %s308, 128
        $region48: #{transformer_forward.21} parent=43 // pred_fallthru
          _
      $region44: #{transformer_forward.21} parent=5 // pred_fallthru
        _
    $region6: #{transformer_forward.21} parent=1 // loop_footer
      %s15 = sadd.s32 1, %s11
    $region7: #{transformer_forward.21} parent=1 // loop_footer_branch
      %10 = sbr.rel target = $region3
    $region8: #{transformer_forward.21} parent=1 // loop_exit
      _
    %313 = vsyncpa [#allocation4], 1
    %s314 = scalar_lea.sflag [#allocation4], 1
    %315 = vsyncpa %s314, 1

// kernel: transformer_forward.15
$region0: #{transformer_forward.15}
  #allocation0 [shape = 'u32[]', space=smem, size = 0x4, offset = 0x4, fixed_abs, tag = 'smem constant byte address 0x4 - core index']
  #allocation1 [shape = 'u32[144,128]{1,0:T(1,128)}', space=vmem, size = 0x12000, scoped, tag = 'internal scratch']
  #allocation2 [shape = 'f32[8,32]{1,0:T(8,128)}', space=vmem, size = 0x1000, scoped, tag = 'scratch operand']
  %s0 = inlined_call_operand.vmem [shape: bf16[16,32], index: 0, kind: input, shape index: {}]
  %s1 = inlined_call_operand.vmem [shape: bf16[32,64], index: 1, kind: input, shape index: {}]
  %s2 = inlined_call_operand.vmem [shape: f32[1,64], index: 2, kind: input, shape index: {}]
  %s3 = inlined_call_operand.vmem [shape: bf16[64,32], index: 3, kind: input, shape index: {}]
  %s4 = inlined_call_operand.vmem [shape: f32[1,32], index: 4, kind: input, shape index: {}]
  %s5 = inlined_call_operand.vmem [shape: f32[1,32], index: 5, kind: input, shape index: {}]
  %s6 = inlined_call_operand.vmem [shape: f32[1,32], index: 6, kind: input, shape index: {}]
  %s7 = inlined_call_operand.vmem [shape: bf16[16,32], index: 7, kind: output, shape index: {}]
  %s8 = sld [smem:[#allocation0]]
  $region69: #{transformer_forward.15} parent=0
    _
  %s10 = ssub.s32 1, %s8
  %s11 = scalar_select 0, %s10, %s8
  loop: start=0, step=1, limit=4
  $region2: #{transformer_forward.15} parent=0 // loop_pre_header
    _
  $region3: #{transformer_forward.15} parent=0 // loop_header
    %s13 = sphi 0, %s17
    %p14 = scmp.ge.s32.totalorder %s13, 4
    %s20 = sphi 0, %s32
    %s21 = sphi 0, %s28
    %s22 = sphi 0, %s20
    %s23 = sphi 0, %s21
    %s24 = sphi 0, %s22
    %s25 = sphi 0, %s23
    %s35 = sphi 0, %s37
    %s38 = sphi 0, %s35
    %s39 = sphi 0, %s38
    %s55 = sphi 0, %s39
    %s61 = sphi 0, %s63
    %s64 = sphi 0, %s61
    %s65 = sphi 0, %s64
    %s81 = sphi 0, %s65
    %s87 = sphi 0, %s89
    %s90 = sphi 0, %s87
    %s91 = sphi 0, %s90
    %s107 = sphi 0, %s91
    %s113 = sphi 0, %s115
    %s116 = sphi 0, %s113
    %s117 = sphi 0, %s116
    %s133 = sphi 0, %s117
    %s137 = sphi 0, %s137
    %s139 = sphi 0, %s137
    %s140 = sphi 0, %s139
    %s154 = sphi 0, %s140
    %s158 = sphi 0, %s158
    %s160 = sphi 0, %s158
    %s161 = sphi 0, %s160
    %s175 = sphi 0, %s161
    %s179 = sphi 0, %s179
    %s181 = sphi 0, %s179
    %s182 = sphi 0, %s181
    %s196 = sphi 0, %s182
    %s202 = sphi 0, %s204
    %s205 = sphi 0, %s202
    %s206 = sphi 0, %s205
    %s222 = sphi 0, %s206
  $region4: #{transformer_forward.15} parent=0 // loop_header_branch
    %16 = sbr.rel (%p14) target = $region8
  $region5: #{transformer_forward.15} parent=0 // loop_body
    %s18 = ssub.s32 %s13, 1
    %s19 = ssub.s32 %s13, 2
    %s26 = sadd.s32 1, %s21
    %p27 = scmp.ge.s32.totalorder %s26, 1
    %s28 = scalar_select %p27, 0, %s26
    %s29 = sadd.s32 1, %s20
    %s30 = scalar_select %p27, %s29, %s20
    %p31 = scmp.ge.s32.totalorder %s30, 2
    %s32 = scalar_select %p31, 0, %s30
    %s33 = ssub.s32 %s20, %s32
    %p34 = scmp.eq.s32.totalorder %s33, 0
    %s36 = sadd.s32 %s35, 1
    %s37 = scalar_select %p34, %s35, %s36
    %p40 = pneg %p34
    %p41 = scmp.eq.s32.totalorder %s13, 1
    %p42 = por %p40, %p41
    %p43 = scmp.ne.s32.totalorder %s35, %s38
    %p44 = scmp.eq.s32.totalorder %s13, 0
    %p45 = por %p43, %p44
    %p46 = scmp.ne.s32.totalorder %s35, %s38
    %p47 = scmp.eq.s32.totalorder %s18, 1
    %p48 = por %p46, %p47
    %p49 = scmp.ne.s32.totalorder %s38, %s39
    %p50 = scmp.eq.s32.totalorder %s18, 0
    %p51 = por %p49, %p50
    %p52 = scmp.ne.s32.totalorder %s38, %s39
    %p53 = scmp.eq.s32.totalorder %s19, 1
    %p54 = por %p52, %p53
    %p56 = scmp.ne.s32.totalorder %s39, %s55
    %p57 = scmp.eq.s32.totalorder %s19, 0
    %p58 = por %p56, %p57
    %s59 = ssub.s32 %s21, %s28
    %p60 = scmp.eq.s32.totalorder %s59, 0
    %s62 = sadd.s32 %s61, 1
    %s63 = scalar_select %p60, %s61, %s62
    %p66 = pneg %p60
    %p67 = scmp.eq.s32.totalorder %s13, 1
    %p68 = por %p66, %p67
    %p69 = scmp.ne.s32.totalorder %s61, %s64
    %p70 = scmp.eq.s32.totalorder %s13, 0
    %p71 = por %p69, %p70
    %p72 = scmp.ne.s32.totalorder %s61, %s64
    %p73 = scmp.eq.s32.totalorder %s18, 1
    %p74 = por %p72, %p73
    %p75 = scmp.ne.s32.totalorder %s64, %s65
    %p76 = scmp.eq.s32.totalorder %s18, 0
    %p77 = por %p75, %p76
    %p78 = scmp.ne.s32.totalorder %s64, %s65
    %p79 = scmp.eq.s32.totalorder %s19, 1
    %p80 = por %p78, %p79
    %p82 = scmp.ne.s32.totalorder %s65, %s81
    %p83 = scmp.eq.s32.totalorder %s19, 0
    %p84 = por %p82, %p83
    %s85 = ssub.s32 %s21, %s28
    %p86 = scmp.eq.s32.totalorder %s85, 0
    %s88 = sadd.s32 %s87, 1
    %s89 = scalar_select %p86, %s87, %s88
    %p92 = pneg %p86
    %p93 = scmp.eq.s32.totalorder %s13, 1
    %p94 = por %p92, %p93
    %p95 = scmp.ne.s32.totalorder %s87, %s90
    %p96 = scmp.eq.s32.totalorder %s13, 0
    %p97 = por %p95, %p96
    %p98 = scmp.ne.s32.totalorder %s87, %s90
    %p99 = scmp.eq.s32.totalorder %s18, 1
    %p100 = por %p98, %p99
    %p101 = scmp.ne.s32.totalorder %s90, %s91
    %p102 = scmp.eq.s32.totalorder %s18, 0
    %p103 = por %p101, %p102
    %p104 = scmp.ne.s32.totalorder %s90, %s91
    %p105 = scmp.eq.s32.totalorder %s19, 1
    %p106 = por %p104, %p105
    %p108 = scmp.ne.s32.totalorder %s91, %s107
    %p109 = scmp.eq.s32.totalorder %s19, 0
    %p110 = por %p108, %p109
    %s111 = ssub.s32 %s21, %s28
    %p112 = scmp.eq.s32.totalorder %s111, 0
    %s114 = sadd.s32 %s113, 1
    %s115 = scalar_select %p112, %s113, %s114
    %p118 = pneg %p112
    %p119 = scmp.eq.s32.totalorder %s13, 1
    %p120 = por %p118, %p119
    %p121 = scmp.ne.s32.totalorder %s113, %s116
    %p122 = scmp.eq.s32.totalorder %s13, 0
    %p123 = por %p121, %p122
    %p124 = scmp.ne.s32.totalorder %s113, %s116
    %p125 = scmp.eq.s32.totalorder %s18, 1
    %p126 = por %p124, %p125
    %p127 = scmp.ne.s32.totalorder %s116, %s117
    %p128 = scmp.eq.s32.totalorder %s18, 0
    %p129 = por %p127, %p128
    %p130 = scmp.ne.s32.totalorder %s116, %s117
    %p131 = scmp.eq.s32.totalorder %s19, 1
    %p132 = por %p130, %p131
    %p134 = scmp.ne.s32.totalorder %s117, %s133
    %p135 = scmp.eq.s32.totalorder %s19, 0
    %p136 = por %p134, %p135
    %s138 = sadd.s32 %s137, 1
    %p141 = scmp.eq.s32.totalorder %s13, 1
    %p142 = scmp.ne.s32.totalorder %s137, %s139
    %p143 = scmp.eq.s32.totalorder %s13, 0
    %p144 = por %p142, %p143
    %p145 = scmp.ne.s32.totalorder %s137, %s139
    %p146 = scmp.eq.s32.totalorder %s18, 1
    %p147 = por %p145, %p146
    %p148 = scmp.ne.s32.totalorder %s139, %s140
    %p149 = scmp.eq.s32.totalorder %s18, 0
    %p150 = por %p148, %p149
    %p151 = scmp.ne.s32.totalorder %s139, %s140
    %p152 = scmp.eq.s32.totalorder %s19, 1
    %p153 = por %p151, %p152
    %p155 = scmp.ne.s32.totalorder %s140, %s154
    %p156 = scmp.eq.s32.totalorder %s19, 0
    %p157 = por %p155, %p156
    %s159 = sadd.s32 %s158, 1
    %p162 = scmp.eq.s32.totalorder %s13, 1
    %p163 = scmp.ne.s32.totalorder %s158, %s160
    %p164 = scmp.eq.s32.totalorder %s13, 0
    %p165 = por %p163, %p164
    %p166 = scmp.ne.s32.totalorder %s158, %s160
    %p167 = scmp.eq.s32.totalorder %s18, 1
    %p168 = por %p166, %p167
    %p169 = scmp.ne.s32.totalorder %s160, %s161
    %p170 = scmp.eq.s32.totalorder %s18, 0
    %p171 = por %p169, %p170
    %p172 = scmp.ne.s32.totalorder %s160, %s161
    %p173 = scmp.eq.s32.totalorder %s19, 1
    %p174 = por %p172, %p173
    %p176 = scmp.ne.s32.totalorder %s161, %s175
    %p177 = scmp.eq.s32.totalorder %s19, 0
    %p178 = por %p176, %p177
    %s180 = sadd.s32 %s179, 1
    %p183 = scmp.eq.s32.totalorder %s13, 1
    %p184 = scmp.ne.s32.totalorder %s179, %s181
    %p185 = scmp.eq.s32.totalorder %s13, 0
    %p186 = por %p184, %p185
    %p187 = scmp.ne.s32.totalorder %s179, %s181
    %p188 = scmp.eq.s32.totalorder %s18, 1
    %p189 = por %p187, %p188
    %p190 = scmp.ne.s32.totalorder %s181, %s182
    %p191 = scmp.eq.s32.totalorder %s18, 0
    %p192 = por %p190, %p191
    %p193 = scmp.ne.s32.totalorder %s181, %s182
    %p194 = scmp.eq.s32.totalorder %s19, 1
    %p195 = por %p193, %p194
    %p197 = scmp.ne.s32.totalorder %s182, %s196
    %p198 = scmp.eq.s32.totalorder %s19, 0
    %p199 = por %p197, %p198
    %s200 = ssub.s32 %s20, %s32
    %p201 = scmp.eq.s32.totalorder %s200, 0
    %s203 = sadd.s32 %s202, 1
    %s204 = scalar_select %p201, %s202, %s203
    %p207 = pneg %p201
    %p208 = scmp.eq.s32.totalorder %s13, 1
    %p209 = por %p207, %p208
    %p210 = scmp.ne.s32.totalorder %s202, %s205
    %p211 = scmp.eq.s32.totalorder %s13, 0
    %p212 = por %p210, %p211
    %p213 = scmp.ne.s32.totalorder %s202, %s205
    %p214 = scmp.eq.s32.totalorder %s18, 1
    %p215 = por %p213, %p214
    %p216 = scmp.ne.s32.totalorder %s205, %s206
    %p217 = scmp.eq.s32.totalorder %s18, 0
    %p218 = por %p216, %p217
    %p219 = scmp.ne.s32.totalorder %s205, %s206
    %p220 = scmp.eq.s32.totalorder %s19, 1
    %p221 = por %p219, %p220
    %p223 = scmp.ne.s32.totalorder %s206, %s222
    %p224 = scmp.eq.s32.totalorder %s19, 0
    %p225 = por %p223, %p224
    %p226 = scmp.le.s32.totalorder 1, %s13
    %p227 = scmp.lt.s32.totalorder %s13, 3
    %p228 = pnand %p226, %p227
    %p229 = pneg %p228
    // Predicated region
    $region9: #{transformer_forward.15} parent=5 // pred_check
      _
    $region10: #{transformer_forward.15} parent=5 // pred_check_branch
      %231 = sbr.rel (%p228) target = $region12
    $region11: #{transformer_forward.15} parent=5 // pred_region
      %s232 = ssub.s32 %s13, 1
      // Predicated region
      $region13: #{transformer_forward.15} parent=11 // pred_check
        %p233 = pneg %p77
      $region14: #{transformer_forward.15} parent=11 // pred_check_branch
        %235 = sbr.rel (%p233) target = $region16
      $region15: #{transformer_forward.15} parent=11 // pred_region
        %p236 = scmp.lt.s32.totalorder %s23, 0
        %s237 = scalar_select %p236, %s23, 0
        %s238 = smul.addr %s237, 4
        %s239 = scalar_lea.vmem %s1, %s238
      $region16: #{transformer_forward.15} parent=11 // pred_fallthru
        _
      // Predicated region
      $region17: #{transformer_forward.15} parent=11 // pred_check
        %p240 = pneg %p103
      $region18: #{transformer_forward.15} parent=11 // pred_check_branch
        %242 = sbr.rel (%p240) target = $region20
      $region19: #{transformer_forward.15} parent=11 // pred_region
        %p243 = scmp.lt.s32.totalorder %s23, 0
        %s244 = scalar_select %p243, %s23, 0
        %s245 = scalar_lea.vmem %s2, %s244
      $region20: #{transformer_forward.15} parent=11 // pred_fallthru
        _
      // Predicated region
      $region21: #{transformer_forward.15} parent=11 // pred_check
        %p246 = pneg %p129
      $region22: #{transformer_forward.15} parent=11 // pred_check_branch
        %248 = sbr.rel (%p246) target = $region24
      $region23: #{transformer_forward.15} parent=11 // pred_region
        %s249 = smul.u32 8, %s23
        %p250 = scmp.lt.s32.totalorder %s249, 7
        %s251 = scalar_select %p250, %s249, 7
        %s252 = smul.addr %s251, 4
        %s253 = scalar_lea.vmem %s3, %s252
        %s254 = smul.u32 8, %s23
      $region24: #{transformer_forward.15} parent=11 // pred_fallthru
        _
      // Predicated region
      $region25: #{transformer_forward.15} parent=11 // pred_check
        %p255 = pneg %p150
      $region26: #{transformer_forward.15} parent=11 // pred_check_branch
        %257 = sbr.rel (%p255) target = $region28
      $region27: #{transformer_forward.15} parent=11 // pred_region
        _
      $region28: #{transformer_forward.15} parent=11 // pred_fallthru
        _
      // Predicated region
      $region29: #{transformer_forward.15} parent=11 // pred_check
        %p258 = pneg %p171
      $region30: #{transformer_forward.15} parent=11 // pred_check_branch
        %260 = sbr.rel (%p258) target = $region32
      $region31: #{transformer_forward.15} parent=11 // pred_region
        _
      $region32: #{transformer_forward.15} parent=11 // pred_fallthru
        _
      // Predicated region
      $region33: #{transformer_forward.15} parent=11 // pred_check
        %p261 = pneg %p192
      $region34: #{transformer_forward.15} parent=11 // pred_check_branch
        %263 = sbr.rel (%p261) target = $region36
      $region35: #{transformer_forward.15} parent=11 // pred_region
        _
      $region36: #{transformer_forward.15} parent=11 // pred_fallthru
        _
    $region12: #{transformer_forward.15} parent=5 // pred_fallthru
      _
    %p264 = scmp.lt.s32.totalorder %s13, 2
    // Predicated region
    $region37: #{transformer_forward.15} parent=5 // pred_check
      %p265 = pneg %p264
    $region38: #{transformer_forward.15} parent=5 // pred_check_branch
      %267 = sbr.rel (%p265) target = $region40
    $region39: #{transformer_forward.15} parent=5 // pred_region
      // Predicated region
      $region41: #{transformer_forward.15} parent=39 // pred_check
        %p268 = pneg %p45
      $region42: #{transformer_forward.15} parent=39 // pred_check_branch
        %270 = sbr.rel (%p268) target = $region44
      $region43: #{transformer_forward.15} parent=39 // pred_region
        %p271 = scmp.lt.s32.totalorder %s20, 1
        %s272 = scalar_select %p271, %s20, 1
        %s273 = smul.addr %s272, 4
        %s274 = scalar_lea.vmem %s0, %s273
      $region44: #{transformer_forward.15} parent=39 // pred_fallthru
        _
    $region40: #{transformer_forward.15} parent=5 // pred_fallthru
      _
    %p275 = scmp.le.s32.totalorder 1, %s13
    %p276 = scmp.lt.s32.totalorder %s13, 3
    %p277 = pnand %p275, %p276
    %p278 = pneg %p277
    // Predicated region
    $region45: #{transformer_forward.15} parent=5 // pred_check
      _
    $region46: #{transformer_forward.15} parent=5 // pred_check_branch
      %280 = sbr.rel (%p277) target = $region48
    $region47: #{transformer_forward.15} parent=5 // pred_region
      %s281 = ssub.s32 %s13, 1
      %p282 = scmp.lt.s32.totalorder %s22, 1
      %s283 = scalar_select %p282, %s22, 1
      %s284 = smul.addr %s283, 4
      %s285 = scalar_lea.vmem %s0, %s284
      %p286 = pneg %p51
      %p287 = pneg %p48
      %p288 = scmp.lt.s32.totalorder %s23, 0
      %s289 = scalar_select %p288, %s23, 0
      %s290 = smul.addr %s289, 4
      %s291 = scalar_lea.vmem %s1, %s290
      %p292 = pneg %p77
      %p293 = pneg %p74
      %p294 = scmp.lt.s32.totalorder %s23, 0
      %s295 = scalar_select %p294, %s23, 0
      %s296 = scalar_lea.vmem %s2, %s295
      %p297 = pneg %p103
      %p298 = pneg %p100
      %s299 = smul.u32 8, %s23
      %p300 = scmp.lt.s32.totalorder %s299, 7
      %s301 = scalar_select %p300, %s299, 7
      %s302 = smul.addr %s301, 4
      %s303 = scalar_lea.vmem %s3, %s302
      %p304 = pneg %p129
      %p305 = pneg %p126
      %p306 = pneg %p150
      %p307 = pneg %p147
      %p308 = pneg %p171
      %p309 = pneg %p168
      %p310 = pneg %p192
      %p311 = pneg %p189
      %p312 = pneg %p218
      %p313 = pneg %p215
      %p314 = scmp.lt.s32.totalorder %s22, 1
      %s315 = scalar_select %p314, %s22, 1
      %s316 = smul.addr %s315, 4
      %s317 = scalar_lea.vmem %s7, %s316
      %p318 = scmp.lt.s32.totalorder %s22, 1
      %s319 = scalar_select %p318, %s22, 1
      %s320 = smul.addr %s319, 4
      %s321 = scalar_lea.vmem %s0, %s320
      %p322 = scmp.lt.s32.totalorder %s23, 0
      %s323 = scalar_select %p322, %s23, 0
      %s324 = smul.addr %s323, 4
      %s325 = scalar_lea.vmem %s1, %s324
      %p326 = scmp.lt.s32.totalorder %s23, 0
      %s327 = scalar_select %p326, %s23, 0
      %s328 = scalar_lea.vmem %s2, %s327
      %s329 = smul.u32 8, %s23
      %p330 = scmp.lt.s32.totalorder %s329, 7
      %s331 = scalar_select %p330, %s329, 7
      %s332 = smul.addr %s331, 4
      %s333 = scalar_lea.vmem %s3, %s332
      %s334 = smul.u32 8, %s23
      %p335 = scmp.lt.s32.totalorder %s22, 1
      %s336 = scalar_select %p335, %s22, 1
      %s337 = smul.addr %s336, 4
      %s338 = scalar_lea.vmem %s7, %s337
      %p340 = scmp.eq.s32.totalorder %s23, 0
      // Predicated region
      $region49: #{transformer_forward.15} parent=47 // pred_check
        %p341 = pneg %p340
      $region50: #{transformer_forward.15} parent=47 // pred_check_branch
        %343 = sbr.rel (%p341) target = $region52
      $region51: #{transformer_forward.15} parent=47 // pred_region
        %vm344 = vcmask 261120
        %345 = vst.msk [vmem:[#allocation2] sm:$0xff] %vm344, 0.0
      $region52: #{transformer_forward.15} parent=47 // pred_fallthru
        _
      %v346 = vld [vmem:[%s321] sm:$0xf]
      %v347 = vld [vmem:[%s325] sm:$0xf]
      %v348 = vld [vmem:[%s325 + $0x4] sm:$0xf]
      %v349 = vld [vmem:[%s325 + $0x8] sm:$0xf]
      %v350 = vld [vmem:[%s325 + $0xc] sm:$0xf]
      %v351 = vld [vmem:[%s328] sm:$0x1]
      %v353 = vlaneseq
      %v354 = vshrl.u32 %v353, 7
      %v355 = vsub.s32 0, %v354
      %v356 = vrot.slane %v351, %v355
      %v362 = vunpack.c.l.b16 %v347
      %v363 = vunpack.c.l.b16 %v348
      %v364 = vunpack.c.l.b16 %v349
      %v365 = vunpack.c.l.b16 %v350
      %v366 = vpack.c.b16 %v363, %v362
      %v367 = vpack.c.b16 %v365, %v364
      %vm370 = vcmask 261120
      %v372 = vsel %vm370, %v346, 0
      %374 = vmatprep.subr.bf16.mxu0 0
      %375 = vmatpush1.bf16.msra.mxu0 %v366
      %376 = vmatprep.subr.bf16.mxu0 0
      %377 = vmatpush1.bf16.msra.mxu0 %v367
      %378 = vmatprep.subr.bf16.mxu0 0
      %379 = vmatpush1.bf16.msra.mxu0 0
      %380 = vmatprep.subr.bf16.mxu0 0
      %381 = vmatpush1.bf16.msra.mxu0 0
      %382 = vmatprep.subr.bf16.mxu0 0
      %383 = vmatpush1.bf16.msra.mxu0 0
      %384 = vmatprep.subr.bf16.mxu0 0
      %385 = vmatpush1.bf16.msra.mxu0 0
      %386 = vmatprep.subr.bf16.mxu0 0
      %387 = vmatpush1.bf16.msra.mxu0 0
      %388 = vmatprep.subr.bf16.mxu0 0
      %389 = vmatpush1.bf16.msra.mxu0 0
      %390 = vmatprep.subr.bf16.mxu0 0
      %391 = vmatpush1.bf16.msra.mxu0 0
      %392 = vmatprep.subr.bf16.mxu0 0
      %393 = vmatpush1.bf16.msra.mxu0 0
      %394 = vmatprep.subr.bf16.mxu0 0
      %395 = vmatpush1.bf16.msra.mxu0 0
      %396 = vmatprep.subr.bf16.mxu0 0
      %397 = vmatpush1.bf16.msra.mxu0 0
      %398 = vmatprep.subr.bf16.mxu0 0
      %399 = vmatpush1.bf16.msra.mxu0 0
      %400 = vmatprep.subr.bf16.mxu0 0
      %401 = vmatpush1.bf16.msra.mxu0 0
      %402 = vmatprep.subr.bf16.mxu0 0
      %403 = vmatpush1.bf16.msra.mxu0 0
      %404 = vmatprep.subr.bf16.mxu0 0
      %405 = vmatpush1.bf16.msra.mxu0 0
      %406 = vmatprep.mubr.bf16.mxu0 0
      %407 = vmatmul.mubr.bf16.gmra.mrb[0].mxu0 %v372
      %v408 = vpop.f32.mrb[0].mxu0
      %v409 = vadd.f32 %v356, %v408
      %v410 = vpop.f32.mrb[0].mxu0
      %v411 = vpop.f32.mrb[0].mxu0
      %v412 = vpop.f32.mrb[0].mxu0
      %413 = vdwg.mxu0
      %v414 = vmax.f32 %v409, 0.0
      %v415 = vld [vmem:[#allocation2] sm:$0xff]
      %v416 = vpack.c.bf16 %v414, %v414
      %v417 = vld [vmem:[%s333] sm:$0xf]
      %v418 = vld [vmem:[%s333 + $0x4] sm:$0xf]
      %v419 = vld [vmem:[%s333 + $0x8] sm:$0xf]
      %v420 = vld [vmem:[%s333 + $0xc] sm:$0xf]
      %v421 = vld [vmem:[%s333 + $0x10] sm:$0xf]
      %v422 = vld [vmem:[%s333 + $0x14] sm:$0xf]
      %v423 = vld [vmem:[%s333 + $0x18] sm:$0xf]
      %v424 = vld [vmem:[%s333 + $0x1c] sm:$0xf]
      %v433 = vunpack.c.l.b16 %v417
      %v434 = vunpack.c.l.b16 %v418
      %v435 = vunpack.c.l.b16 %v419
      %v436 = vunpack.c.l.b16 %v420
      %v437 = vunpack.c.l.b16 %v421
      %v438 = vunpack.c.l.b16 %v422
      %v439 = vunpack.c.l.b16 %v423
      %v440 = vunpack.c.l.b16 %v424
      %v441 = vpack.c.b16 %v434, %v433
      %v442 = vpack.c.b16 %v436, %v435
      %v443 = vpack.c.b16 %v438, %v437
      %v444 = vpack.c.b16 %v440, %v439
      %vm449 = vcmask 523264
      %v451 = vsel %vm449, %v416, 0
      %453 = vmatprep.subr.bf16.mxu0 0
      %454 = vmatpush1.bf16.msra.mxu0 %v441
      %455 = vmatprep.subr.bf16.mxu0 0
      %456 = vmatpush1.bf16.msra.mxu0 %v442
      %457 = vmatprep.subr.bf16.mxu0 0
      %458 = vmatpush1.bf16.msra.mxu0 %v443
      %459 = vmatprep.subr.bf16.mxu0 0
      %460 = vmatpush1.bf16.msra.mxu0 %v444
      %461 = vmatprep.subr.bf16.mxu0 0
      %462 = vmatpush1.bf16.msra.mxu0 0
      %463 = vmatprep.subr.bf16.mxu0 0
      %464 = vmatpush1.bf16.msra.mxu0 0
      %465 = vmatprep.subr.bf16.mxu0 0
      %466 = vmatpush1.bf16.msra.mxu0 0
      %467 = vmatprep.subr.bf16.mxu0 0
      %468 = vmatpush1.bf16.msra.mxu0 0
      %469 = vmatprep.subr.bf16.mxu0 0
      %470 = vmatpush1.bf16.msra.mxu0 0
      %471 = vmatprep.subr.bf16.mxu0 0
      %472 = vmatpush1.bf16.msra.mxu0 0
      %473 = vmatprep.subr.bf16.mxu0 0
      %474 = vmatpush1.bf16.msra.mxu0 0
      %475 = vmatprep.subr.bf16.mxu0 0
      %476 = vmatpush1.bf16.msra.mxu0 0
      %477 = vmatprep.subr.bf16.mxu0 0
      %478 = vmatpush1.bf16.msra.mxu0 0
      %479 = vmatprep.subr.bf16.mxu0 0
      %480 = vmatpush1.bf16.msra.mxu0 0
      %481 = vmatprep.subr.bf16.mxu0 0
      %482 = vmatpush1.bf16.msra.mxu0 0
      %483 = vmatprep.subr.bf16.mxu0 0
      %484 = vmatpush1.bf16.msra.mxu0 0
      %485 = vmatprep.mubr.bf16.mxu0 0
      %486 = vmatmul.mubr.bf16.gmra.mrb[0].mxu0 %v451
      %v487 = vpop.f32.mrb[0].mxu0
      %v488 = vadd.f32 0.0, %v487
      %v489 = vpop.f32.mrb[0].mxu0
      %v490 = vpop.f32.mrb[0].mxu0
      %v491 = vpop.f32.mrb[0].mxu0
      %492 = vdwg.mxu0
      %v493 = vadd.f32 %v415, %v488
      %494 = vst.msk [vmem:[#allocation2] sm:$0xff] %vm370, %v493
      // Predicated region
      $region53: #{transformer_forward.15} parent=47 // pred_check
        %p495 = pneg %p340
      $region54: #{transformer_forward.15} parent=47 // pred_check_branch
        %497 = sbr.rel (%p495) target = $region56
      $region55: #{transformer_forward.15} parent=47 // pred_region
        %v498 = vld [vmem:[#allocation2] sm:$0xff]
        %v499 = vld [vmem:[%s4] sm:$0x1]
        %v501 = vlaneseq
        %v502 = vshrl.u32 %v501, 7
        %v503 = vsub.s32 0, %v502
        %v504 = vrot.slane %v499, %v503
        %v506 = vadd.f32 %v498, %v504
        %v507 = vld [vmem:[%s321] sm:$0xf]
        %v508 = vunpack.c.l.bf16 %v507
        %v509 = vadd.f32 %v506, %v508
        %v510 = vsel %vm370, %v509, 0.0
        %511 = vadd.xlane.f32.xlu0 %v510
        %v512 = vpop.xlane.xlu0 %511
        %v513 = vrcp.pop 32.0
        %v514 = vmul.f32 %v512, %v513
        %v515 = vsub.f32 %v509, %v514
        %v516 = vmul.f32 %v515, %v515
        %v517 = vsel %vm370, %v516, 0.0
        %518 = vadd.xlane.f32.xlu0 %v517
        %v519 = vpop.xlane.xlu0 %518
        %v520 = vmul.f32 %v519, %v513
        %v521 = vadd.f32 %v520, 1e-05
        %v522 = vrsqrt.pop %v521
        %v523 = vmul.f32 %v515, %v522
        %v524 = vld [vmem:[%s5] sm:$0x1]
        %v526 = vlaneseq
        %v527 = vshrl.u32 %v526, 7
        %v528 = vsub.s32 0, %v527
        %v529 = vrot.slane %v524, %v528
        %v531 = vmul.f32 %v523, %v529
        %v532 = vld [vmem:[%s6] sm:$0x1]
        %v534 = vlaneseq
        %v535 = vshrl.u32 %v534, 7
        %v536 = vsub.s32 0, %v535
        %v537 = vrot.slane %v532, %v536
        %v539 = vadd.f32 %v531, %v537
        %v540 = vpack.c.bf16 %v539, %v539
        %vm541 = vcmask 257024
        %542 = vst.msk [vmem:[%s338] sm:$0xf] %vm541, %v540
      $region56: #{transformer_forward.15} parent=47 // pred_fallthru
        _
      %p543 = scmp.lt.s32.totalorder %s22, 1
      %s544 = scalar_select %p543, %s22, 1
      %s545 = smul.addr %s544, 4
      %s546 = scalar_lea.vmem %s7, %s545
      // Predicated region
      $region57: #{transformer_forward.15} parent=47 // pred_check
        %p547 = pneg %p215
      $region58: #{transformer_forward.15} parent=47 // pred_check_branch
        %549 = sbr.rel (%p547) target = $region60
      $region59: #{transformer_forward.15} parent=47 // pred_region
        _
      $region60: #{transformer_forward.15} parent=47 // pred_fallthru
        _
    $region48: #{transformer_forward.15} parent=5 // pred_fallthru
      _
    %p550 = scmp.le.s32.totalorder 2, %s13
    // Predicated region
    $region61: #{transformer_forward.15} parent=5 // pred_check
      %p551 = pneg %p550
    $region62: #{transformer_forward.15} parent=5 // pred_check_branch
      %553 = sbr.rel (%p551) target = $region64
    $region63: #{transformer_forward.15} parent=5 // pred_region
      %s554 = ssub.s32 %s13, 2
      // Predicated region
      $region65: #{transformer_forward.15} parent=63 // pred_check
        %p555 = pneg %p221
      $region66: #{transformer_forward.15} parent=63 // pred_check_branch
        %557 = sbr.rel (%p555) target = $region68
      $region67: #{transformer_forward.15} parent=63 // pred_region
        %p558 = scmp.lt.s32.totalorder %s24, 1
        %s559 = scalar_select %p558, %s24, 1
        %s560 = smul.addr %s559, 4
        %s561 = scalar_lea.vmem %s7, %s560
      $region68: #{transformer_forward.15} parent=63 // pred_fallthru
        _
    $region64: #{transformer_forward.15} parent=5 // pred_fallthru
      _
  $region6: #{transformer_forward.15} parent=0 // loop_footer
    %s17 = sadd.s32 1, %s13
  $region7: #{transformer_forward.15} parent=0 // loop_footer_branch
    %12 = sbr.rel target = $region3
  $region8: #{transformer_forward.15} parent=0 // loop_exit
    _

</llo_original>
